<compile_context>
chip_gen: v5e
topology: v5e:2x2
jax: 0.10.0
libtpu: 0.0.40
codegen_flags: <defaults>
</compile_context>

<pallas_src>
import jax
import jax.numpy as jnp
from jax.experimental import pallas as pl
from jax.experimental.pallas import tpu as pltpu


def _split_bf16x3(x_f32):
    """Split an f32 tensor into (hi, lo) bf16 parts with x ~= hi + lo."""
    hi = x_f32.astype(jnp.bfloat16)
    lo = (x_f32 - hi.astype(jnp.float32)).astype(jnp.bfloat16)
    return hi, lo


def dual_matmul_add_kernel_bf16x3(a_ref, b_ref, c_ref, d_ref, o_ref):
    # bf16_3x emulation of both f32 matmuls: hi@hi + hi@lo + lo@hi per dot
    # (the dropped lo@lo term is ~2^-18 relative).  Every partial product is
    # accumulated straight into the output VMEM tile, never holding more than
    # one full (M, tn) f32 result tile live in vregs at once.
    a_hi, a_lo = _split_bf16x3(a_ref[...])
    c_hi, c_lo = _split_bf16x3(c_ref[...])
    b_hi, b_lo = _split_bf16x3(b_ref[...])
    d_hi, d_lo = _split_bf16x3(d_ref[...])

    o_ref[...] = jnp.dot(a_hi, b_hi, preferred_element_type=jnp.float32)
    o_ref[...] += jnp.dot(c_hi, d_hi, preferred_element_type=jnp.float32)
    o_ref[...] += jnp.dot(a_hi, b_lo, preferred_element_type=jnp.float32)
    o_ref[...] += jnp.dot(a_lo, b_hi, preferred_element_type=jnp.float32)
    o_ref[...] += jnp.dot(c_hi, d_lo, preferred_element_type=jnp.float32)
    o_ref[...] += jnp.dot(c_lo, d_hi, preferred_element_type=jnp.float32)


def dual_matmul_add_kernel_f32(a_ref, b_ref, c_ref, d_ref, o_ref):
    # Exact full-f32 fallback (same accumulate-into-output structure).
    o_ref[...] = jnp.dot(a_ref[...], b_ref[...],
                         preferred_element_type=jnp.float32)
    o_ref[...] += jnp.dot(c_ref[...], d_ref[...],
                          preferred_element_type=jnp.float32)


def _pick_tn(N):
    """Output-column tile: 512 on v6e (memory-bound, fewer steps), 256
    elsewhere (v5e: 4-deep pipeline hides slab DMA; v7x: 2 steps per core)."""
    try:
        kind = jax.devices()[0].device_kind.lower()
    except Exception:  # pragma: no cover - defensive, keeps script runnable
        kind = ""
    tn = 512 if "v6" in kind else 256
    tn = min(tn, N)
    while tn > 128 and N % tn:
        tn //= 2
    return tn if N % tn == 0 else N


def dual_matmul_add(a, b, c, d, *, tn=None, use_bf16x3=True):
    M, K = a.shape
    K2, N = b.shape
    assert K == K2 and c.shape == a.shape and d.shape == b.shape
    if tn is None:
        tn = _pick_tn(N)
    assert N % tn == 0, "N must be divisible by the output-column tile"

    grid = (N // tn,)

    # Logical cost: 2 matmuls * 2*M*K*N flops; bytes = A + B + C + D + out.
    flops = 2 * 2 * M * K * N
    bytes_accessed = 4 * (2 * M * K + 2 * K * N + M * N)
    cost = pl.CostEstimate(
        flops=flops, bytes_accessed=bytes_accessed, transcendentals=0
    )

    kernel = dual_matmul_add_kernel_bf16x3 if use_bf16x3 else dual_matmul_add_kernel_f32

    return pl.pallas_call(
        kernel,
        out_shape=jax.ShapeDtypeStruct((M, N), a.dtype),
        grid_spec=pltpu.PrefetchScalarGridSpec(
            num_scalar_prefetch=0,
            grid=grid,
            in_specs=[
                # A and C: full (M, K) block, constant block index — DMA'd
                # once and reused across all grid steps (load-bearing).
                pl.BlockSpec((M, K), lambda j: (0, 0)),
                # B: (K, tn) column slab indexed by the grid.
                pl.BlockSpec((K, tn), lambda j: (0, j)),
                pl.BlockSpec((M, K), lambda j: (0, 0)),
                pl.BlockSpec((K, tn), lambda j: (0, j)),
            ],
            # tn is a multiple of 128 → unmasked lane-dense stores.
            out_specs=pl.BlockSpec((M, tn), lambda j: (0, j)),
        ),
        compiler_params=pltpu.CompilerParams(
            # Single column-slab axis is fully independent → shard across the
            # two v7x TensorCores (no-op on single-core v5e/v6e).
            dimension_semantics=(pltpu.PARALLEL,),
        ),
        cost_estimate=cost,
    )(a, b, c, d)


if __name__ == "__main__":
    key = jax.random.PRNGKey(0)
    k1, k2, k3, k4 = jax.random.split(key, 4)

    # Shapes taken directly from the PyTorch module's example inputs.
    inputs1 = jax.random.normal(k1, (166, 320), dtype=jnp.float32)
    inputs2 = jax.random.normal(k2, (320, 1024), dtype=jnp.float32)
    inputs3 = jax.random.normal(k3, (166, 320), dtype=jnp.float32)
    inputs4 = jax.random.normal(k4, (320, 1024), dtype=jnp.float32)

    out = dual_matmul_add(inputs1, inputs2, inputs3, inputs4)
    out = jax.block_until_ready(out)

    # Reference at explicit full-f32 precision so the tolerance check is
    # against the true matmul result regardless of backend default precision.
    ref = (
        jnp.dot(inputs1, inputs2, precision=jax.lax.Precision.HIGHEST)
        + jnp.dot(inputs3, inputs4, precision=jax.lax.Precision.HIGHEST)
    )
    assert out.shape == (166, 1024)
    assert jnp.allclose(out, ref, atol=1e-3, rtol=1e-3)

    print("KERNEL_OK")
</pallas_src>

<mosaic_0001>
module attributes {stable_mosaic.version = 11 : i64} {
  func.func @dual_matmul_add_kernel_bf16x3(%arg0: i32, %arg1: memref<166x320xf32, #tpu.memory_space<vmem>>, %arg2: memref<320x256xf32, #tpu.memory_space<vmem>>, %arg3: memref<166x320xf32, #tpu.memory_space<vmem>>, %arg4: memref<320x256xf32, #tpu.memory_space<vmem>>, %arg5: memref<166x256xf32, #tpu.memory_space<vmem>>) attributes {dimension_semantics = [#tpu.dimension_semantics<parallel>], iteration_bounds = array<i64: 4>, scalar_prefetch = 0 : i64, scratch_operands = 0 : i64, tpu.core_type = #tpu.core_type<tc>, window_params = [{pipeline_mode = #tpu.pipeline_mode<synchronous>, transform_indices = @transform_0, window_bounds = array<i64: 166, 320>}, {transform_indices = @transform_1, window_bounds = array<i64: 320, 256>}, {pipeline_mode = #tpu.pipeline_mode<synchronous>, transform_indices = @transform_2, window_bounds = array<i64: 166, 320>}, {transform_indices = @transform_3, window_bounds = array<i64: 320, 256>}, {transform_indices = @transform_4, window_bounds = array<i64: 166, 256>}]} {
    %c0 = arith.constant 0 : index
    %c0_0 = arith.constant 0 : index
    %0 = vector.load %arg1[%c0, %c0_0] : memref<166x320xf32, #tpu.memory_space<vmem>>, vector<166x320xf32>
    %1 = arith.truncf %0 : vector<166x320xf32> to vector<166x320xbf16>
    %2 = arith.extf %1 : vector<166x320xbf16> to vector<166x320xf32>
    %3 = arith.subf %0, %2 : vector<166x320xf32>
    %4 = arith.truncf %3 : vector<166x320xf32> to vector<166x320xbf16>
    %c0_1 = arith.constant 0 : index
    %c0_2 = arith.constant 0 : index
    %5 = vector.load %arg3[%c0_1, %c0_2] : memref<166x320xf32, #tpu.memory_space<vmem>>, vector<166x320xf32>
    %6 = arith.truncf %5 : vector<166x320xf32> to vector<166x320xbf16>
    %7 = arith.extf %6 : vector<166x320xbf16> to vector<166x320xf32>
    %8 = arith.subf %5, %7 : vector<166x320xf32>
    %9 = arith.truncf %8 : vector<166x320xf32> to vector<166x320xbf16>
    %c0_3 = arith.constant 0 : index
    %c0_4 = arith.constant 0 : index
    %10 = vector.load %arg2[%c0_3, %c0_4] : memref<320x256xf32, #tpu.memory_space<vmem>>, vector<320x256xf32>
    %11 = arith.truncf %10 : vector<320x256xf32> to vector<320x256xbf16>
    %12 = arith.extf %11 : vector<320x256xbf16> to vector<320x256xf32>
    %13 = arith.subf %10, %12 : vector<320x256xf32>
    %14 = arith.truncf %13 : vector<320x256xf32> to vector<320x256xbf16>
    %c0_5 = arith.constant 0 : index
    %c0_6 = arith.constant 0 : index
    %15 = vector.load %arg4[%c0_5, %c0_6] : memref<320x256xf32, #tpu.memory_space<vmem>>, vector<320x256xf32>
    %16 = arith.truncf %15 : vector<320x256xf32> to vector<320x256xbf16>
    %17 = arith.extf %16 : vector<320x256xbf16> to vector<320x256xf32>
    %18 = arith.subf %15, %17 : vector<320x256xf32>
    %19 = arith.truncf %18 : vector<320x256xf32> to vector<320x256xbf16>
    %cst = arith.constant dense<0.000000e+00> : vector<166x256xf32>
    %20 = tpu.matmul %1, %11, %cst {dimension_numbers = #tpu.dot_dimension_numbers<[1], [0], [0], [1], [0, 0, 1, 1], [], []>} : vector<166x320xbf16>, vector<320x256xbf16>, vector<166x256xf32> -> vector<166x256xf32>
    %c0_7 = arith.constant 0 : index
    %c0_8 = arith.constant 0 : index
    %21 = vector.load %arg5[%c0_7, %c0_8] : memref<166x256xf32, #tpu.memory_space<vmem>>, vector<166x256xf32>
    tpu.vector_store %arg5[%c0_7, %c0_8], %20 {strides = array<i32>} : memref<166x256xf32, #tpu.memory_space<vmem>>, vector<166x256xf32>,
    %c0_9 = arith.constant 0 : index
    %c0_10 = arith.constant 0 : index
    %22 = vector.load %arg5[%c0_9, %c0_10] : memref<166x256xf32, #tpu.memory_space<vmem>>, vector<166x256xf32>
    %cst_11 = arith.constant dense<0.000000e+00> : vector<166x256xf32>
    %23 = tpu.matmul %6, %16, %cst_11 {dimension_numbers = #tpu.dot_dimension_numbers<[1], [0], [0], [1], [0, 0, 1, 1], [], []>} : vector<166x320xbf16>, vector<320x256xbf16>, vector<166x256xf32> -> vector<166x256xf32>
    %24 = arith.addf %22, %23 : vector<166x256xf32>
    %c0_12 = arith.constant 0 : index
    %c0_13 = arith.constant 0 : index
    %25 = vector.load %arg5[%c0_12, %c0_13] : memref<166x256xf32, #tpu.memory_space<vmem>>, vector<166x256xf32>
    tpu.vector_store %arg5[%c0_12, %c0_13], %24 {strides = array<i32>} : memref<166x256xf32, #tpu.memory_space<vmem>>, vector<166x256xf32>,
    %c0_14 = arith.constant 0 : index
    %c0_15 = arith.constant 0 : index
    %26 = vector.load %arg5[%c0_14, %c0_15] : memref<166x256xf32, #tpu.memory_space<vmem>>, vector<166x256xf32>
    %cst_16 = arith.constant dense<0.000000e+00> : vector<166x256xf32>
    %27 = tpu.matmul %1, %14, %cst_16 {dimension_numbers = #tpu.dot_dimension_numbers<[1], [0], [0], [1], [0, 0, 1, 1], [], []>} : vector<166x320xbf16>, vector<320x256xbf16>, vector<166x256xf32> -> vector<166x256xf32>
    %28 = arith.addf %26, %27 : vector<166x256xf32>
    %c0_17 = arith.constant 0 : index
    %c0_18 = arith.constant 0 : index
    %29 = vector.load %arg5[%c0_17, %c0_18] : memref<166x256xf32, #tpu.memory_space<vmem>>, vector<166x256xf32>
    tpu.vector_store %arg5[%c0_17, %c0_18], %28 {strides = array<i32>} : memref<166x256xf32, #tpu.memory_space<vmem>>, vector<166x256xf32>,
    %c0_19 = arith.constant 0 : index
    %c0_20 = arith.constant 0 : index
    %30 = vector.load %arg5[%c0_19, %c0_20] : memref<166x256xf32, #tpu.memory_space<vmem>>, vector<166x256xf32>
    %cst_21 = arith.constant dense<0.000000e+00> : vector<166x256xf32>
    %31 = tpu.matmul %4, %11, %cst_21 {dimension_numbers = #tpu.dot_dimension_numbers<[1], [0], [0], [1], [0, 0, 1, 1], [], []>} : vector<166x320xbf16>, vector<320x256xbf16>, vector<166x256xf32> -> vector<166x256xf32>
    %32 = arith.addf %30, %31 : vector<166x256xf32>
    %c0_22 = arith.constant 0 : index
    %c0_23 = arith.constant 0 : index
    %33 = vector.load %arg5[%c0_22, %c0_23] : memref<166x256xf32, #tpu.memory_space<vmem>>, vector<166x256xf32>
    tpu.vector_store %arg5[%c0_22, %c0_23], %32 {strides = array<i32>} : memref<166x256xf32, #tpu.memory_space<vmem>>, vector<166x256xf32>,
    %c0_24 = arith.constant 0 : index
    %c0_25 = arith.constant 0 : index
    %34 = vector.load %arg5[%c0_24, %c0_25] : memref<166x256xf32, #tpu.memory_space<vmem>>, vector<166x256xf32>
    %cst_26 = arith.constant dense<0.000000e+00> : vector<166x256xf32>
    %35 = tpu.matmul %6, %19, %cst_26 {dimension_numbers = #tpu.dot_dimension_numbers<[1], [0], [0], [1], [0, 0, 1, 1], [], []>} : vector<166x320xbf16>, vector<320x256xbf16>, vector<166x256xf32> -> vector<166x256xf32>
    %36 = arith.addf %34, %35 : vector<166x256xf32>
    %c0_27 = arith.constant 0 : index
    %c0_28 = arith.constant 0 : index
    %37 = vector.load %arg5[%c0_27, %c0_28] : memref<166x256xf32, #tpu.memory_space<vmem>>, vector<166x256xf32>
    tpu.vector_store %arg5[%c0_27, %c0_28], %36 {strides = array<i32>} : memref<166x256xf32, #tpu.memory_space<vmem>>, vector<166x256xf32>,
    %c0_29 = arith.constant 0 : index
    %c0_30 = arith.constant 0 : index
    %38 = vector.load %arg5[%c0_29, %c0_30] : memref<166x256xf32, #tpu.memory_space<vmem>>, vector<166x256xf32>
    %cst_31 = arith.constant dense<0.000000e+00> : vector<166x256xf32>
    %39 = tpu.matmul %9, %16, %cst_31 {dimension_numbers = #tpu.dot_dimension_numbers<[1], [0], [0], [1], [0, 0, 1, 1], [], []>} : vector<166x320xbf16>, vector<320x256xbf16>, vector<166x256xf32> -> vector<166x256xf32>
    %40 = arith.addf %38, %39 : vector<166x256xf32>
    %c0_32 = arith.constant 0 : index
    %c0_33 = arith.constant 0 : index
    %41 = vector.load %arg5[%c0_32, %c0_33] : memref<166x256xf32, #tpu.memory_space<vmem>>, vector<166x256xf32>
    tpu.vector_store %arg5[%c0_32, %c0_33], %40 {strides = array<i32>} : memref<166x256xf32, #tpu.memory_space<vmem>>, vector<166x256xf32>,
    return
  }
  func.func @transform_0(%arg0: i32) -> (i32, i32) {
    %c0_i32 = arith.constant 0 : i32
    %c0_i32_0 = arith.constant 0 : i32
    %c0_i32_1 = arith.constant 0 : i32
    return %c0_i32, %c0_i32_0 : i32, i32
  }
  func.func @transform_1(%arg0: i32) -> (i32, i32) {
    %c0_i32 = arith.constant 0 : i32
    %c0_i32_0 = arith.constant 0 : i32
    return %c0_i32, %arg0 : i32, i32
  }
  func.func @transform_2(%arg0: i32) -> (i32, i32) {
    %c0_i32 = arith.constant 0 : i32
    %c0_i32_0 = arith.constant 0 : i32
    %c0_i32_1 = arith.constant 0 : i32
    return %c0_i32, %c0_i32_0 : i32, i32
  }
  func.func @transform_3(%arg0: i32) -> (i32, i32) {
    %c0_i32 = arith.constant 0 : i32
    %c0_i32_0 = arith.constant 0 : i32
    return %c0_i32, %arg0 : i32, i32
  }
  func.func @transform_4(%arg0: i32) -> (i32, i32) {
    %c0_i32 = arith.constant 0 : i32
    %c0_i32_0 = arith.constant 0 : i32
    return %c0_i32, %arg0 : i32, i32
  }
}

</mosaic_0001>

<llo_original>
// kernel: tpu_custom_call.1
$region0: #{tpu_custom_call.1}
  #allocation0 [shape = 'u32[]', space=smem, size = 0x4, offset = 0x4, fixed_abs, tag = 'smem constant byte address 0x4 - core index']
  #allocation1 [shape = 'u32[72,128]{1,0:T(1,128)}', space=vmem, size = 0x9000, scoped, tag = 'internal scratch']
  %s0 = inlined_call_operand.hbm [shape: f32[166,320], index: 0, kind: input, shape index: {}]
  %s1 = inlined_call_operand.hbm [shape: f32[320,1024], index: 1, kind: input, shape index: {}]
  %s2 = inlined_call_operand.hbm [shape: f32[166,320], index: 2, kind: input, shape index: {}]
  %s3 = inlined_call_operand.hbm [shape: f32[320,1024], index: 3, kind: input, shape index: {}]
  %s4 = inlined_call_operand.hbm [shape: f32[166,1024], index: 4, kind: output, shape index: {}]
  %s5 = sld [smem:[#allocation0]]
  $region65: #{tpu_custom_call.1} parent=0
    _
  %s7 = ssub.s32 1, %s5
  %s8 = scalar_select 0, %s7, %s5
  $region1: #{tpu_custom_call.1} parent=0
    #allocation2 [shape = 'u8[258048]{0}', space=vmem, size = 0x3f000, scoped, tag = 'input window, operand 0, single buffered']
    #allocation3 [shape = 's32[2]{0}', space=sflag, size = 0x8, scoped, tag = 'scoped memory for tpu_custom_call.1']
    #allocation4 [shape = 's32[2]{0}', space=sflag, size = 0x8, scoped, tag = 'scoped memory for tpu_custom_call.1']
    #allocation5 [shape = 'u8[655360]{0}', space=vmem, size = 0xa0000, scoped, tag = 'input window, operand 1']
    #allocation6 [shape = 's32[2]{0}', space=sflag, size = 0x8, scoped, tag = 'scoped memory for tpu_custom_call.1']
    #allocation7 [shape = 'u8[258048]{0}', space=vmem, size = 0x3f000, scoped, tag = 'input window, operand 2, single buffered']
    #allocation8 [shape = 'u8[655360]{0}', space=vmem, size = 0xa0000, scoped, tag = 'input window, operand 3']
    #allocation9 [shape = 's32[2]{0}', space=sflag, size = 0x8, scoped, tag = 'scoped memory for tpu_custom_call.1']
    #allocation10 [shape = 'u8[344064]{0}', space=vmem, size = 0x54000, scoped, tag = 'output window, operand 0']
    %9 = vsyncpa [#allocation3], 0
    %10 = vsyncpa [#allocation6], 0
    %s11 = scalar_lea.sflag [#allocation6], 1
    %12 = vsyncpa %s11, 0
    %13 = vsyncpa [#allocation9], 0
    %s14 = scalar_lea.sflag [#allocation9], 1
    %15 = vsyncpa %s14, 0
    %16 = vsyncpa [#allocation4], 0
    %s17 = scalar_lea.sflag [#allocation4], 1
    %18 = vsyncpa %s17, 0
    loop: start=0, step=1, limit=6
    $region2: #{tpu_custom_call.1} parent=1 // loop_pre_header
      _
    $region3: #{tpu_custom_call.1} parent=1 // loop_header
      %s20 = sphi 0, %s24
      %p21 = scmp.ge.s32.totalorder %s20, 6
      %s28 = sphi 0, %s28
      %s30 = sphi 0, %s28
      %s31 = sphi 0, %s30
      %s45 = sphi 0, %s31
      %s51 = sphi 0, %s53
      %s54 = sphi 0, %s51
      %s55 = sphi 0, %s54
      %s71 = sphi 0, %s55
      %s75 = sphi 0, %s75
      %s77 = sphi 0, %s75
      %s78 = sphi 0, %s77
      %s92 = sphi 0, %s78
      %s98 = sphi 0, %s100
      %s101 = sphi 0, %s98
      %s102 = sphi 0, %s101
      %s118 = sphi 0, %s102
      %s124 = sphi 0, %s126
      %s127 = sphi 0, %s124
      %s128 = sphi 0, %s127
      %s144 = sphi 0, %s128
    $region4: #{tpu_custom_call.1} parent=1 // loop_header_branch
      %23 = sbr.rel (%p21) target = $region8
    $region5: #{tpu_custom_call.1} parent=1 // loop_body
      %s25 = ssub.s32 %s20, 1
      %s26 = ssub.s32 %s20, 2
      %s27 = sadd.s32 %s20, 1
      %s29 = sadd.s32 %s28, 1
      %p32 = scmp.eq.s32.totalorder %s20, 3
      %p33 = scmp.ne.s32.totalorder %s28, %s30
      %p34 = scmp.eq.s32.totalorder %s20, 0
      %p35 = por %p33, %p34
      %p36 = scmp.ne.s32.totalorder %s28, %s30
      %p37 = scmp.eq.s32.totalorder %s25, 3
      %p38 = por %p36, %p37
      %p39 = scmp.ne.s32.totalorder %s30, %s31
      %p40 = scmp.eq.s32.totalorder %s25, 0
      %p41 = por %p39, %p40
      %p42 = scmp.ne.s32.totalorder %s30, %s31
      %p43 = scmp.eq.s32.totalorder %s26, 3
      %p44 = por %p42, %p43
      %p46 = scmp.ne.s32.totalorder %s31, %s45
      %p47 = scmp.eq.s32.totalorder %s26, 0
      %p48 = por %p46, %p47
      %s49 = ssub.s32 %s20, %s27
      %p50 = scmp.eq.s32.totalorder %s49, 0
      %s52 = sadd.s32 %s51, 1
      %s53 = scalar_select %p50, %s51, %s52
      %p56 = pneg %p50
      %p57 = scmp.eq.s32.totalorder %s20, 3
      %p58 = por %p56, %p57
      %p59 = scmp.ne.s32.totalorder %s51, %s54
      %p60 = scmp.eq.s32.totalorder %s20, 0
      %p61 = por %p59, %p60
      %p62 = scmp.ne.s32.totalorder %s51, %s54
      %p63 = scmp.eq.s32.totalorder %s25, 3
      %p64 = por %p62, %p63
      %p65 = scmp.ne.s32.totalorder %s54, %s55
      %p66 = scmp.eq.s32.totalorder %s25, 0
      %p67 = por %p65, %p66
      %p68 = scmp.ne.s32.totalorder %s54, %s55
      %p69 = scmp.eq.s32.totalorder %s26, 3
      %p70 = por %p68, %p69
      %p72 = scmp.ne.s32.totalorder %s55, %s71
      %p73 = scmp.eq.s32.totalorder %s26, 0
      %p74 = por %p72, %p73
      %s76 = sadd.s32 %s75, 1
      %p79 = scmp.eq.s32.totalorder %s20, 3
      %p80 = scmp.ne.s32.totalorder %s75, %s77
      %p81 = scmp.eq.s32.totalorder %s20, 0
      %p82 = por %p80, %p81
      %p83 = scmp.ne.s32.totalorder %s75, %s77
      %p84 = scmp.eq.s32.totalorder %s25, 3
      %p85 = por %p83, %p84
      %p86 = scmp.ne.s32.totalorder %s77, %s78
      %p87 = scmp.eq.s32.totalorder %s25, 0
      %p88 = por %p86, %p87
      %p89 = scmp.ne.s32.totalorder %s77, %s78
      %p90 = scmp.eq.s32.totalorder %s26, 3
      %p91 = por %p89, %p90
      %p93 = scmp.ne.s32.totalorder %s78, %s92
      %p94 = scmp.eq.s32.totalorder %s26, 0
      %p95 = por %p93, %p94
      %s96 = ssub.s32 %s20, %s27
      %p97 = scmp.eq.s32.totalorder %s96, 0
      %s99 = sadd.s32 %s98, 1
      %s100 = scalar_select %p97, %s98, %s99
      %p103 = pneg %p97
      %p104 = scmp.eq.s32.totalorder %s20, 3
      %p105 = por %p103, %p104
      %p106 = scmp.ne.s32.totalorder %s98, %s101
      %p107 = scmp.eq.s32.totalorder %s20, 0
      %p108 = por %p106, %p107
      %p109 = scmp.ne.s32.totalorder %s98, %s101
      %p110 = scmp.eq.s32.totalorder %s25, 3
      %p111 = por %p109, %p110
      %p112 = scmp.ne.s32.totalorder %s101, %s102
      %p113 = scmp.eq.s32.totalorder %s25, 0
      %p114 = por %p112, %p113
      %p115 = scmp.ne.s32.totalorder %s101, %s102
      %p116 = scmp.eq.s32.totalorder %s26, 3
      %p117 = por %p115, %p116
      %p119 = scmp.ne.s32.totalorder %s102, %s118
      %p120 = scmp.eq.s32.totalorder %s26, 0
      %p121 = por %p119, %p120
      %s122 = ssub.s32 %s20, %s27
      %p123 = scmp.eq.s32.totalorder %s122, 0
      %s125 = sadd.s32 %s124, 1
      %s126 = scalar_select %p123, %s124, %s125
      %p129 = pneg %p123
      %p130 = scmp.eq.s32.totalorder %s20, 3
      %p131 = por %p129, %p130
      %p132 = scmp.ne.s32.totalorder %s124, %s127
      %p133 = scmp.eq.s32.totalorder %s20, 0
      %p134 = por %p132, %p133
      %p135 = scmp.ne.s32.totalorder %s124, %s127
      %p136 = scmp.eq.s32.totalorder %s25, 3
      %p137 = por %p135, %p136
      %p138 = scmp.ne.s32.totalorder %s127, %s128
      %p139 = scmp.eq.s32.totalorder %s25, 0
      %p140 = por %p138, %p139
      %p141 = scmp.ne.s32.totalorder %s127, %s128
      %p142 = scmp.eq.s32.totalorder %s26, 3
      %p143 = por %p141, %p142
      %p145 = scmp.ne.s32.totalorder %s128, %s144
      %p146 = scmp.eq.s32.totalorder %s26, 0
      %p147 = por %p145, %p146
      %p148 = scmp.le.s32.totalorder 1, %s20
      %p149 = scmp.lt.s32.totalorder %s20, 5
      %p150 = pnand %p148, %p149
      %p151 = pneg %p150
      // Predicated region
      $region9: #{tpu_custom_call.1} parent=5 // pred_check
        _
      $region10: #{tpu_custom_call.1} parent=5 // pred_check_branch
        %153 = sbr.rel (%p150) target = $region12
      $region11: #{tpu_custom_call.1} parent=5 // pred_region
        %s154 = ssub.s32 %s20, 1
        // Predicated region
        $region13: #{tpu_custom_call.1} parent=11 // pred_check
          %p155 = pneg %p41
        $region14: #{tpu_custom_call.1} parent=11 // pred_check_branch
          %157 = sbr.rel (%p155) target = $region16
        $region15: #{tpu_custom_call.1} parent=11 // pred_region
          %159 = vsyncadd [#allocation3], 0
          %s160 = sshll.u32 %s0, 4
          %s161 = int_to_ptr.hbm [resolvable:$true] %s160
          %s162 = sshll.u32 [#allocation2], 4
          %s163 = int_to_ptr.vmem [resolvable:$true] %s162
          %168 = dma.hbm_to_vmem [thread:$0]  %s161, 8064, %s163, [#allocation3], 384, 384, 24
        $region16: #{tpu_custom_call.1} parent=11 // pred_fallthru
          _
        // Predicated region
        $region17: #{tpu_custom_call.1} parent=11 // pred_check
          %p169 = pneg %p88
        $region18: #{tpu_custom_call.1} parent=11 // pred_check_branch
          %171 = sbr.rel (%p169) target = $region20
        $region19: #{tpu_custom_call.1} parent=11 // pred_region
          %173 = vsyncadd [#allocation6], 0
          %s174 = sshll.u32 %s2, 4
          %s175 = int_to_ptr.hbm [resolvable:$true] %s174
          %s176 = sshll.u32 [#allocation7], 4
          %s177 = int_to_ptr.vmem [resolvable:$true] %s176
          %182 = dma.hbm_to_vmem [thread:$0]  %s175, 8064, %s177, [#allocation6], 384, 384, 24
        $region20: #{tpu_custom_call.1} parent=11 // pred_fallthru
          _
      $region12: #{tpu_custom_call.1} parent=5 // pred_fallthru
        _
      %p183 = scmp.lt.s32.totalorder %s20, 4
      // Predicated region
      $region21: #{tpu_custom_call.1} parent=5 // pred_check
        %p184 = pneg %p183
      $region22: #{tpu_custom_call.1} parent=5 // pred_check_branch
        %186 = sbr.rel (%p184) target = $region24
      $region23: #{tpu_custom_call.1} parent=5 // pred_region
        // Predicated region
        $region25: #{tpu_custom_call.1} parent=23 // pred_check
          %p187 = pneg %p61
        $region26: #{tpu_custom_call.1} parent=23 // pred_check_branch
          %189 = sbr.rel (%p187) target = $region28
        $region27: #{tpu_custom_call.1} parent=23 // pred_region
          %s190 = sand.u32 %s20, 1
          %s191 = scalar_lea.sflag [#allocation6], %s190
          %s192 = sand.u32 %s51, 1
          %s193 = smul.addr %s192, 640
          %s194 = scalar_lea.vmem [#allocation5], %s193
          %s195 = smul.u32 2, %s20
          %197 = vsyncadd %s191, 0
          %s198 = smul.addr %s195, 8
          %s199 = scalar_lea.hbm %s1, %s198
          %s200 = sshll.u32 %s199, 4
          %s201 = int_to_ptr.hbm [resolvable:$true] %s200
          %s202 = sshll.u32 %s194, 4
          %s203 = int_to_ptr.vmem [resolvable:$true] %s202
          %208 = dma.hbm_to_vmem [thread:$0]  %s201, 10240, %s203, %s191, 1024, 256, 16
        $region28: #{tpu_custom_call.1} parent=23 // pred_fallthru
          _
        // Predicated region
        $region29: #{tpu_custom_call.1} parent=23 // pred_check
          %p209 = pneg %p108
        $region30: #{tpu_custom_call.1} parent=23 // pred_check_branch
          %211 = sbr.rel (%p209) target = $region32
        $region31: #{tpu_custom_call.1} parent=23 // pred_region
          %s212 = sand.u32 %s98, 1
          %s213 = scalar_lea.sflag [#allocation9], %s212
          %s214 = sand.u32 %s98, 1
          %s215 = smul.addr %s214, 640
          %s216 = scalar_lea.vmem [#allocation8], %s215
          %s217 = smul.u32 2, %s20
          %219 = vsyncadd %s213, 0
          %s220 = smul.addr %s217, 8
          %s221 = scalar_lea.hbm %s3, %s220
          %s222 = sshll.u32 %s221, 4
          %s223 = int_to_ptr.hbm [resolvable:$true] %s222
          %s224 = sshll.u32 %s216, 4
          %s225 = int_to_ptr.vmem [resolvable:$true] %s224
          %230 = dma.hbm_to_vmem [thread:$0]  %s223, 10240, %s225, %s213, 1024, 256, 16
        $region32: #{tpu_custom_call.1} parent=23 // pred_fallthru
          _
      $region24: #{tpu_custom_call.1} parent=5 // pred_fallthru
        _
      %p231 = scmp.le.s32.totalorder 1, %s20
      %p232 = scmp.lt.s32.totalorder %s20, 5
      %p233 = pnand %p231, %p232
      %p234 = pneg %p233
      // Predicated region
      $region33: #{tpu_custom_call.1} parent=5 // pred_check
        _
      $region34: #{tpu_custom_call.1} parent=5 // pred_check_branch
        %236 = sbr.rel (%p233) target = $region36
      $region35: #{tpu_custom_call.1} parent=5 // pred_region
        %s237 = ssub.s32 %s20, 1
        // Predicated region
        $region37: #{tpu_custom_call.1} parent=35 // pred_check
          %p238 = pneg %p41
        $region38: #{tpu_custom_call.1} parent=35 // pred_check_branch
          %240 = sbr.rel (%p238) target = $region40
        $region39: #{tpu_custom_call.1} parent=35 // pred_region
          %242 = dma.done [#allocation3], 8064
        $region40: #{tpu_custom_call.1} parent=35 // pred_fallthru
          _
        %s243 = sand.u32 %s25, 1
        %s244 = scalar_lea.sflag [#allocation6], %s243
        %s245 = sand.u32 %s54, 1
        %s246 = smul.addr %s245, 640
        %s247 = scalar_lea.vmem [#allocation5], %s246
        // Predicated region
        $region41: #{tpu_custom_call.1} parent=35 // pred_check
          %p248 = pneg %p67
        $region42: #{tpu_custom_call.1} parent=35 // pred_check_branch
          %250 = sbr.rel (%p248) target = $region44
        $region43: #{tpu_custom_call.1} parent=35 // pred_region
          %252 = dma.done %s244, 10240
        $region44: #{tpu_custom_call.1} parent=35 // pred_fallthru
          _
        // Predicated region
        $region45: #{tpu_custom_call.1} parent=35 // pred_check
          %p253 = pneg %p88
        $region46: #{tpu_custom_call.1} parent=35 // pred_check_branch
          %255 = sbr.rel (%p253) target = $region48
        $region47: #{tpu_custom_call.1} parent=35 // pred_region
          %257 = dma.done [#allocation6], 8064
        $region48: #{tpu_custom_call.1} parent=35 // pred_fallthru
          _
        %s258 = sand.u32 %s101, 1
        %s259 = scalar_lea.sflag [#allocation9], %s258
        %s260 = sand.u32 %s101, 1
        %s261 = smul.addr %s260, 640
        %s262 = scalar_lea.vmem [#allocation8], %s261
        // Predicated region
        $region49: #{tpu_custom_call.1} parent=35 // pred_check
          %p263 = pneg %p114
        $region50: #{tpu_custom_call.1} parent=35 // pred_check_branch
          %265 = sbr.rel (%p263) target = $region52
        $region51: #{tpu_custom_call.1} parent=35 // pred_region
          %267 = dma.done %s259, 10240
        $region52: #{tpu_custom_call.1} parent=35 // pred_fallthru
          _
        %p268 = pneg %p41
        %p269 = pneg %p38
        %s270 = sand.u32 %s25, 1
        %s271 = scalar_lea.sflag [#allocation6], %s270
        %s272 = sand.u32 %s54, 1
        %s273 = smul.addr %s272, 640
        %s274 = scalar_lea.vmem [#allocation5], %s273
        %p275 = pneg %p67
        %p276 = pneg %p64
        %p277 = pneg %p88
        %p278 = pneg %p85
        %s279 = sand.u32 %s101, 1
        %s280 = scalar_lea.sflag [#allocation9], %s279
        %s281 = sand.u32 %s101, 1
        %s282 = smul.addr %s281, 640
        %s283 = scalar_lea.vmem [#allocation8], %s282
        %p284 = pneg %p114
        %p285 = pneg %p111
        %p286 = pneg %p140
        %p287 = pneg %p137
        %s288 = sand.u32 %s127, 1
        %s289 = scalar_lea.sflag [#allocation4], %s288
        %s290 = sand.u32 %s127, 1
        %s291 = smul.addr %s290, 336
        %s292 = scalar_lea.vmem [#allocation10], %s291
        %s293 = smul.u32 2, %s25
        %s294 = smul.u32 2, %s25
        %s295 = smul.u32 2, %s25
        %v297 = vld [vmem:[#allocation2] sm:$0xff]
        %v298 = vld [vmem:[#allocation2 + $0x8] sm:$0xff]
        %v299 = vld [vmem:[#allocation2 + $0x10] sm:$0xff]
        %v300 = vld [vmem:[#allocation2 + $0x18] sm:$0xff]
        %v301 = vld [vmem:[#allocation2 + $0x20] sm:$0xff]
        %v302 = vld [vmem:[#allocation2 + $0x28] sm:$0xff]
        %v303 = vld [vmem:[#allocation2 + $0x30] sm:$0xff]
        %v304 = vld [vmem:[#allocation2 + $0x38] sm:$0xff]
        %v305 = vld [vmem:[#allocation2 + $0x40] sm:$0xff]
        %v306 = vld [vmem:[#allocation2 + $0x48] sm:$0xff]
        %v307 = vld [vmem:[#allocation2 + $0x50] sm:$0xff]
        %v308 = vld [vmem:[#allocation2 + $0x58] sm:$0xff]
        %v309 = vld [vmem:[#allocation2 + $0x60] sm:$0xff]
        %v310 = vld [vmem:[#allocation2 + $0x68] sm:$0xff]
        %v311 = vld [vmem:[#allocation2 + $0x70] sm:$0xff]
        %v312 = vld [vmem:[#allocation2 + $0x78] sm:$0xff]
        %v313 = vld [vmem:[#allocation2 + $0x80] sm:$0xff]
        %v314 = vld [vmem:[#allocation2 + $0x88] sm:$0xff]
        %v315 = vld [vmem:[#allocation2 + $0x90] sm:$0xff]
        %v316 = vld [vmem:[#allocation2 + $0x98] sm:$0xff]
        %v317 = vld [vmem:[#allocation2 + $0xa0] sm:$0xff]
        %v318 = vld [vmem:[#allocation2 + $0xa8] sm:$0xff]
        %v319 = vld [vmem:[#allocation2 + $0xb0] sm:$0xff]
        %v320 = vld [vmem:[#allocation2 + $0xb8] sm:$0xff]
        %v321 = vld [vmem:[#allocation2 + $0xc0] sm:$0xff]
        %v322 = vld [vmem:[#allocation2 + $0xc8] sm:$0xff]
        %v323 = vld [vmem:[#allocation2 + $0xd0] sm:$0xff]
        %v324 = vld [vmem:[#allocation2 + $0xd8] sm:$0xff]
        %v325 = vld [vmem:[#allocation2 + $0xe0] sm:$0xff]
        %v326 = vld [vmem:[#allocation2 + $0xe8] sm:$0xff]
        %v327 = vld [vmem:[#allocation2 + $0xf0] sm:$0xff]
        %v328 = vld [vmem:[#allocation2 + $0xf8] sm:$0xff]
        %v329 = vld [vmem:[#allocation2 + $0x100] sm:$0xff]
        %v330 = vld [vmem:[#allocation2 + $0x108] sm:$0xff]
        %v331 = vld [vmem:[#allocation2 + $0x110] sm:$0xff]
        %v332 = vld [vmem:[#allocation2 + $0x118] sm:$0xff]
        %v333 = vld [vmem:[#allocation2 + $0x120] sm:$0xff]
        %v334 = vld [vmem:[#allocation2 + $0x128] sm:$0xff]
        %v335 = vld [vmem:[#allocation2 + $0x130] sm:$0xff]
        %v336 = vld [vmem:[#allocation2 + $0x138] sm:$0xff]
        %v337 = vld [vmem:[#allocation2 + $0x140] sm:$0xff]
        %v338 = vld [vmem:[#allocation2 + $0x148] sm:$0xff]
        %v339 = vld [vmem:[#allocation2 + $0x150] sm:$0xff]
        %v340 = vld [vmem:[#allocation2 + $0x158] sm:$0xff]
        %v341 = vld [vmem:[#allocation2 + $0x160] sm:$0xff]
        %v342 = vld [vmem:[#allocation2 + $0x168] sm:$0xff]
        %v343 = vld [vmem:[#allocation2 + $0x170] sm:$0xff]
        %v344 = vld [vmem:[#allocation2 + $0x178] sm:$0xff]
        %v345 = vld [vmem:[#allocation2 + $0x180] sm:$0xff]
        %v346 = vld [vmem:[#allocation2 + $0x188] sm:$0xff]
        %v347 = vld [vmem:[#allocation2 + $0x190] sm:$0xff]
        %v348 = vld [vmem:[#allocation2 + $0x198] sm:$0xff]
        %v349 = vld [vmem:[#allocation2 + $0x1a0] sm:$0xff]
        %v350 = vld [vmem:[#allocation2 + $0x1a8] sm:$0xff]
        %v351 = vld [vmem:[#allocation2 + $0x1b0] sm:$0xff]
        %v352 = vld [vmem:[#allocation2 + $0x1b8] sm:$0xff]
        %v353 = vld [vmem:[#allocation2 + $0x1c0] sm:$0xff]
        %v354 = vld [vmem:[#allocation2 + $0x1c8] sm:$0xff]
        %v355 = vld [vmem:[#allocation2 + $0x1d0] sm:$0xff]
        %v356 = vld [vmem:[#allocation2 + $0x1d8] sm:$0xff]
        %v357 = vld [vmem:[#allocation2 + $0x1e0] sm:$0x3f]
        %v358 = vld [vmem:[#allocation2 + $0x1e8] sm:$0x3f]
        %v359 = vld [vmem:[#allocation2 + $0x1f0] sm:$0x3f]
        %v360 = vpack.c.bf16 %v298, %v297
        %v361 = vpack.c.bf16 %v299, %v299
        %v362 = vpack.c.bf16 %v301, %v300
        %v363 = vpack.c.bf16 %v302, %v302
        %v364 = vpack.c.bf16 %v304, %v303
        %v365 = vpack.c.bf16 %v305, %v305
        %v366 = vpack.c.bf16 %v307, %v306
        %v367 = vpack.c.bf16 %v308, %v308
        %v368 = vpack.c.bf16 %v310, %v309
        %v369 = vpack.c.bf16 %v311, %v311
        %v370 = vpack.c.bf16 %v313, %v312
        %v371 = vpack.c.bf16 %v314, %v314
        %v372 = vpack.c.bf16 %v316, %v315
        %v373 = vpack.c.bf16 %v317, %v317
        %v374 = vpack.c.bf16 %v319, %v318
        %v375 = vpack.c.bf16 %v320, %v320
        %v376 = vpack.c.bf16 %v322, %v321
        %v377 = vpack.c.bf16 %v323, %v323
        %v378 = vpack.c.bf16 %v325, %v324
        %v379 = vpack.c.bf16 %v326, %v326
        %v380 = vpack.c.bf16 %v328, %v327
        %v381 = vpack.c.bf16 %v329, %v329
        %v382 = vpack.c.bf16 %v331, %v330
        %v383 = vpack.c.bf16 %v332, %v332
        %v384 = vpack.c.bf16 %v334, %v333
        %v385 = vpack.c.bf16 %v335, %v335
        %v386 = vpack.c.bf16 %v337, %v336
        %v387 = vpack.c.bf16 %v338, %v338
        %v388 = vpack.c.bf16 %v340, %v339
        %v389 = vpack.c.bf16 %v341, %v341
        %v390 = vpack.c.bf16 %v343, %v342
        %v391 = vpack.c.bf16 %v344, %v344
        %v392 = vpack.c.bf16 %v346, %v345
        %v393 = vpack.c.bf16 %v347, %v347
        %v394 = vpack.c.bf16 %v349, %v348
        %v395 = vpack.c.bf16 %v350, %v350
        %v396 = vpack.c.bf16 %v352, %v351
        %v397 = vpack.c.bf16 %v353, %v353
        %v398 = vpack.c.bf16 %v355, %v354
        %v399 = vpack.c.bf16 %v356, %v356
        %v400 = vpack.c.bf16 %v358, %v357
        %v401 = vpack.c.bf16 %v359, %v359
        %v402 = vunpack.c.l.bf16 %v360
        %v403 = vunpack.c.h.bf16 %v360
        %v404 = vunpack.c.l.bf16 %v361
        %v405 = vunpack.c.l.bf16 %v362
        %v406 = vunpack.c.h.bf16 %v362
        %v407 = vunpack.c.l.bf16 %v363
        %v408 = vunpack.c.l.bf16 %v364
        %v409 = vunpack.c.h.bf16 %v364
        %v410 = vunpack.c.l.bf16 %v365
        %v411 = vunpack.c.l.bf16 %v366
        %v412 = vunpack.c.h.bf16 %v366
        %v413 = vunpack.c.l.bf16 %v367
        %v414 = vunpack.c.l.bf16 %v368
        %v415 = vunpack.c.h.bf16 %v368
        %v416 = vunpack.c.l.bf16 %v369
        %v417 = vunpack.c.l.bf16 %v370
        %v418 = vunpack.c.h.bf16 %v370
        %v419 = vunpack.c.l.bf16 %v371
        %v420 = vunpack.c.l.bf16 %v372
        %v421 = vunpack.c.h.bf16 %v372
        %v422 = vunpack.c.l.bf16 %v373
        %v423 = vunpack.c.l.bf16 %v374
        %v424 = vunpack.c.h.bf16 %v374
        %v425 = vunpack.c.l.bf16 %v375
        %v426 = vunpack.c.l.bf16 %v376
        %v427 = vunpack.c.h.bf16 %v376
        %v428 = vunpack.c.l.bf16 %v377
        %v429 = vunpack.c.l.bf16 %v378
        %v430 = vunpack.c.h.bf16 %v378
        %v431 = vunpack.c.l.bf16 %v379
        %v432 = vunpack.c.l.bf16 %v380
        %v433 = vunpack.c.h.bf16 %v380
        %v434 = vunpack.c.l.bf16 %v381
        %v435 = vunpack.c.l.bf16 %v382
        %v436 = vunpack.c.h.bf16 %v382
        %v437 = vunpack.c.l.bf16 %v383
        %v438 = vunpack.c.l.bf16 %v384
        %v439 = vunpack.c.h.bf16 %v384
        %v440 = vunpack.c.l.bf16 %v385
        %v441 = vunpack.c.l.bf16 %v386
        %v442 = vunpack.c.h.bf16 %v386
        %v443 = vunpack.c.l.bf16 %v387
        %v444 = vunpack.c.l.bf16 %v388
        %v445 = vunpack.c.h.bf16 %v388
        %v446 = vunpack.c.l.bf16 %v389
        %v447 = vunpack.c.l.bf16 %v390
        %v448 = vunpack.c.h.bf16 %v390
        %v449 = vunpack.c.l.bf16 %v391
        %v450 = vunpack.c.l.bf16 %v392
        %v451 = vunpack.c.h.bf16 %v392
        %v452 = vunpack.c.l.bf16 %v393
        %v453 = vunpack.c.l.bf16 %v394
        %v454 = vunpack.c.h.bf16 %v394
        %v455 = vunpack.c.l.bf16 %v395
        %v456 = vunpack.c.l.bf16 %v396
        %v457 = vunpack.c.h.bf16 %v396
        %v458 = vunpack.c.l.bf16 %v397
        %v459 = vunpack.c.l.bf16 %v398
        %v460 = vunpack.c.h.bf16 %v398
        %v461 = vunpack.c.l.bf16 %v399
        %v462 = vunpack.c.l.bf16 %v400
        %v463 = vunpack.c.h.bf16 %v400
        %v464 = vunpack.c.l.bf16 %v401
        %v465 = vsub.f32 %v297, %v402
        %v466 = vsub.f32 %v298, %v403
        %v467 = vsub.f32 %v299, %v404
        %v468 = vsub.f32 %v300, %v405
        %v469 = vsub.f32 %v301, %v406
        %v470 = vsub.f32 %v302, %v407
        %v471 = vsub.f32 %v303, %v408
        %v472 = vsub.f32 %v304, %v409
        %v473 = vsub.f32 %v305, %v410
        %v474 = vsub.f32 %v306, %v411
        %v475 = vsub.f32 %v307, %v412
        %v476 = vsub.f32 %v308, %v413
        %v477 = vsub.f32 %v309, %v414
        %v478 = vsub.f32 %v310, %v415
        %v479 = vsub.f32 %v311, %v416
        %v480 = vsub.f32 %v312, %v417
        %v481 = vsub.f32 %v313, %v418
        %v482 = vsub.f32 %v314, %v419
        %v483 = vsub.f32 %v315, %v420
        %v484 = vsub.f32 %v316, %v421
        %v485 = vsub.f32 %v317, %v422
        %v486 = vsub.f32 %v318, %v423
        %v487 = vsub.f32 %v319, %v424
        %v488 = vsub.f32 %v320, %v425
        %v489 = vsub.f32 %v321, %v426
        %v490 = vsub.f32 %v322, %v427
        %v491 = vsub.f32 %v323, %v428
        %v492 = vsub.f32 %v324, %v429
        %v493 = vsub.f32 %v325, %v430
        %v494 = vsub.f32 %v326, %v431
        %v495 = vsub.f32 %v327, %v432
        %v496 = vsub.f32 %v328, %v433
        %v497 = vsub.f32 %v329, %v434
        %v498 = vsub.f32 %v330, %v435
        %v499 = vsub.f32 %v331, %v436
        %v500 = vsub.f32 %v332, %v437
        %v501 = vsub.f32 %v333, %v438
        %v502 = vsub.f32 %v334, %v439
        %v503 = vsub.f32 %v335, %v440
        %v504 = vsub.f32 %v336, %v441
        %v505 = vsub.f32 %v337, %v442
        %v506 = vsub.f32 %v338, %v443
        %v507 = vsub.f32 %v339, %v444
        %v508 = vsub.f32 %v340, %v445
        %v509 = vsub.f32 %v341, %v446
        %v510 = vsub.f32 %v342, %v447
        %v511 = vsub.f32 %v343, %v448
        %v512 = vsub.f32 %v344, %v449
        %v513 = vsub.f32 %v345, %v450
        %v514 = vsub.f32 %v346, %v451
        %v515 = vsub.f32 %v347, %v452
        %v516 = vsub.f32 %v348, %v453
        %v517 = vsub.f32 %v349, %v454
        %v518 = vsub.f32 %v350, %v455
        %v519 = vsub.f32 %v351, %v456
        %v520 = vsub.f32 %v352, %v457
        %v521 = vsub.f32 %v353, %v458
        %v522 = vsub.f32 %v354, %v459
        %v523 = vsub.f32 %v355, %v460
        %v524 = vsub.f32 %v356, %v461
        %v525 = vsub.f32 %v357, %v462
        %v526 = vsub.f32 %v358, %v463
        %v527 = vsub.f32 %v359, %v464
        %v528 = vpack.c.bf16 %v468, %v465
        %v529 = vpack.c.bf16 %v469, %v466
        %v530 = vpack.c.bf16 %v470, %v467
        %v531 = vpack.c.bf16 %v474, %v471
        %v532 = vpack.c.bf16 %v475, %v472
        %v533 = vpack.c.bf16 %v476, %v473
        %v534 = vpack.c.bf16 %v480, %v477
        %v535 = vpack.c.bf16 %v481, %v478
        %v536 = vpack.c.bf16 %v482, %v479
        %v537 = vpack.c.bf16 %v486, %v483
        %v538 = vpack.c.bf16 %v487, %v484
        %v539 = vpack.c.bf16 %v488, %v485
        %v540 = vpack.c.bf16 %v492, %v489
        %v541 = vpack.c.bf16 %v493, %v490
        %v542 = vpack.c.bf16 %v494, %v491
        %v543 = vpack.c.bf16 %v498, %v495
        %v544 = vpack.c.bf16 %v499, %v496
        %v545 = vpack.c.bf16 %v500, %v497
        %v546 = vpack.c.bf16 %v504, %v501
        %v547 = vpack.c.bf16 %v505, %v502
        %v548 = vpack.c.bf16 %v506, %v503
        %v549 = vpack.c.bf16 %v510, %v507
        %v550 = vpack.c.bf16 %v511, %v508
        %v551 = vpack.c.bf16 %v512, %v509
        %v552 = vpack.c.bf16 %v516, %v513
        %v553 = vpack.c.bf16 %v517, %v514
        %v554 = vpack.c.bf16 %v518, %v515
        %v555 = vpack.c.bf16 %v522, %v519
        %v556 = vpack.c.bf16 %v523, %v520
        %v557 = vpack.c.bf16 %v524, %v521
        %v558 = vpack.c.bf16 %v525, %v525
        %v559 = vpack.c.bf16 %v526, %v526
        %v560 = vpack.c.bf16 %v527, %v527
        %v561 = vld [vmem:[#allocation7] sm:$0xff]
        %v562 = vld [vmem:[#allocation7 + $0x8] sm:$0xff]
        %v563 = vld [vmem:[#allocation7 + $0x10] sm:$0xff]
        %v564 = vld [vmem:[#allocation7 + $0x18] sm:$0xff]
        %v565 = vld [vmem:[#allocation7 + $0x20] sm:$0xff]
        %v566 = vld [vmem:[#allocation7 + $0x28] sm:$0xff]
        %v567 = vld [vmem:[#allocation7 + $0x30] sm:$0xff]
        %v568 = vld [vmem:[#allocation7 + $0x38] sm:$0xff]
        %v569 = vld [vmem:[#allocation7 + $0x40] sm:$0xff]
        %v570 = vld [vmem:[#allocation7 + $0x48] sm:$0xff]
        %v571 = vld [vmem:[#allocation7 + $0x50] sm:$0xff]
        %v572 = vld [vmem:[#allocation7 + $0x58] sm:$0xff]
        %v573 = vld [vmem:[#allocation7 + $0x60] sm:$0xff]
        %v574 = vld [vmem:[#allocation7 + $0x68] sm:$0xff]
        %v575 = vld [vmem:[#allocation7 + $0x70] sm:$0xff]
        %v576 = vld [vmem:[#allocation7 + $0x78] sm:$0xff]
        %v577 = vld [vmem:[#allocation7 + $0x80] sm:$0xff]
        %v578 = vld [vmem:[#allocation7 + $0x88] sm:$0xff]
        %v579 = vld [vmem:[#allocation7 + $0x90] sm:$0xff]
        %v580 = vld [vmem:[#allocation7 + $0x98] sm:$0xff]
        %v581 = vld [vmem:[#allocation7 + $0xa0] sm:$0xff]
        %v582 = vld [vmem:[#allocation7 + $0xa8] sm:$0xff]
        %v583 = vld [vmem:[#allocation7 + $0xb0] sm:$0xff]
        %v584 = vld [vmem:[#allocation7 + $0xb8] sm:$0xff]
        %v585 = vld [vmem:[#allocation7 + $0xc0] sm:$0xff]
        %v586 = vld [vmem:[#allocation7 + $0xc8] sm:$0xff]
        %v587 = vld [vmem:[#allocation7 + $0xd0] sm:$0xff]
        %v588 = vld [vmem:[#allocation7 + $0xd8] sm:$0xff]
        %v589 = vld [vmem:[#allocation7 + $0xe0] sm:$0xff]
        %v590 = vld [vmem:[#allocation7 + $0xe8] sm:$0xff]
        %v591 = vld [vmem:[#allocation7 + $0xf0] sm:$0xff]
        %v592 = vld [vmem:[#allocation7 + $0xf8] sm:$0xff]
        %v593 = vld [vmem:[#allocation7 + $0x100] sm:$0xff]
        %v594 = vld [vmem:[#allocation7 + $0x108] sm:$0xff]
        %v595 = vld [vmem:[#allocation7 + $0x110] sm:$0xff]
        %v596 = vld [vmem:[#allocation7 + $0x118] sm:$0xff]
        %v597 = vld [vmem:[#allocation7 + $0x120] sm:$0xff]
        %v598 = vld [vmem:[#allocation7 + $0x128] sm:$0xff]
        %v599 = vld [vmem:[#allocation7 + $0x130] sm:$0xff]
        %v600 = vld [vmem:[#allocation7 + $0x138] sm:$0xff]
        %v601 = vld [vmem:[#allocation7 + $0x140] sm:$0xff]
        %v602 = vld [vmem:[#allocation7 + $0x148] sm:$0xff]
        %v603 = vld [vmem:[#allocation7 + $0x150] sm:$0xff]
        %v604 = vld [vmem:[#allocation7 + $0x158] sm:$0xff]
        %v605 = vld [vmem:[#allocation7 + $0x160] sm:$0xff]
        %v606 = vld [vmem:[#allocation7 + $0x168] sm:$0xff]
        %v607 = vld [vmem:[#allocation7 + $0x170] sm:$0xff]
        %v608 = vld [vmem:[#allocation7 + $0x178] sm:$0xff]
        %v609 = vld [vmem:[#allocation7 + $0x180] sm:$0xff]
        %v610 = vld [vmem:[#allocation7 + $0x188] sm:$0xff]
        %v611 = vld [vmem:[#allocation7 + $0x190] sm:$0xff]
        %v612 = vld [vmem:[#allocation7 + $0x198] sm:$0xff]
        %v613 = vld [vmem:[#allocation7 + $0x1a0] sm:$0xff]
        %v614 = vld [vmem:[#allocation7 + $0x1a8] sm:$0xff]
        %v615 = vld [vmem:[#allocation7 + $0x1b0] sm:$0xff]
        %v616 = vld [vmem:[#allocation7 + $0x1b8] sm:$0xff]
        %v617 = vld [vmem:[#allocation7 + $0x1c0] sm:$0xff]
        %v618 = vld [vmem:[#allocation7 + $0x1c8] sm:$0xff]
        %v619 = vld [vmem:[#allocation7 + $0x1d0] sm:$0xff]
        %v620 = vld [vmem:[#allocation7 + $0x1d8] sm:$0xff]
        %v621 = vld [vmem:[#allocation7 + $0x1e0] sm:$0x3f]
        %v622 = vld [vmem:[#allocation7 + $0x1e8] sm:$0x3f]
        %v623 = vld [vmem:[#allocation7 + $0x1f0] sm:$0x3f]
        %v624 = vpack.c.bf16 %v562, %v561
        %v625 = vpack.c.bf16 %v563, %v563
        %v626 = vpack.c.bf16 %v565, %v564
        %v627 = vpack.c.bf16 %v566, %v566
        %v628 = vpack.c.bf16 %v568, %v567
        %v629 = vpack.c.bf16 %v569, %v569
        %v630 = vpack.c.bf16 %v571, %v570
        %v631 = vpack.c.bf16 %v572, %v572
        %v632 = vpack.c.bf16 %v574, %v573
        %v633 = vpack.c.bf16 %v575, %v575
        %v634 = vpack.c.bf16 %v577, %v576
        %v635 = vpack.c.bf16 %v578, %v578
        %v636 = vpack.c.bf16 %v580, %v579
        %v637 = vpack.c.bf16 %v581, %v581
        %v638 = vpack.c.bf16 %v583, %v582
        %v639 = vpack.c.bf16 %v584, %v584
        %v640 = vpack.c.bf16 %v586, %v585
        %v641 = vpack.c.bf16 %v587, %v587
        %v642 = vpack.c.bf16 %v589, %v588
        %v643 = vpack.c.bf16 %v590, %v590
        %v644 = vpack.c.bf16 %v592, %v591
        %v645 = vpack.c.bf16 %v593, %v593
        %v646 = vpack.c.bf16 %v595, %v594
        %v647 = vpack.c.bf16 %v596, %v596
        %v648 = vpack.c.bf16 %v598, %v597
        %v649 = vpack.c.bf16 %v599, %v599
        %v650 = vpack.c.bf16 %v601, %v600
        %v651 = vpack.c.bf16 %v602, %v602
        %v652 = vpack.c.bf16 %v604, %v603
        %v653 = vpack.c.bf16 %v605, %v605
        %v654 = vpack.c.bf16 %v607, %v606
        %v655 = vpack.c.bf16 %v608, %v608
        %v656 = vpack.c.bf16 %v610, %v609
        %v657 = vpack.c.bf16 %v611, %v611
        %v658 = vpack.c.bf16 %v613, %v612
        %v659 = vpack.c.bf16 %v614, %v614
        %v660 = vpack.c.bf16 %v616, %v615
        %v661 = vpack.c.bf16 %v617, %v617
        %v662 = vpack.c.bf16 %v619, %v618
        %v663 = vpack.c.bf16 %v620, %v620
        %v664 = vpack.c.bf16 %v622, %v621
        %v665 = vpack.c.bf16 %v623, %v623
        %v666 = vunpack.c.l.bf16 %v624
        %v667 = vunpack.c.h.bf16 %v624
        %v668 = vunpack.c.l.bf16 %v625
        %v669 = vunpack.c.l.bf16 %v626
        %v670 = vunpack.c.h.bf16 %v626
        %v671 = vunpack.c.l.bf16 %v627
        %v672 = vunpack.c.l.bf16 %v628
        %v673 = vunpack.c.h.bf16 %v628
        %v674 = vunpack.c.l.bf16 %v629
        %v675 = vunpack.c.l.bf16 %v630
        %v676 = vunpack.c.h.bf16 %v630
        %v677 = vunpack.c.l.bf16 %v631
        %v678 = vunpack.c.l.bf16 %v632
        %v679 = vunpack.c.h.bf16 %v632
        %v680 = vunpack.c.l.bf16 %v633
        %v681 = vunpack.c.l.bf16 %v634
        %v682 = vunpack.c.h.bf16 %v634
        %v683 = vunpack.c.l.bf16 %v635
        %v684 = vunpack.c.l.bf16 %v636
        %v685 = vunpack.c.h.bf16 %v636
        %v686 = vunpack.c.l.bf16 %v637
        %v687 = vunpack.c.l.bf16 %v638
        %v688 = vunpack.c.h.bf16 %v638
        %v689 = vunpack.c.l.bf16 %v639
        %v690 = vunpack.c.l.bf16 %v640
        %v691 = vunpack.c.h.bf16 %v640
        %v692 = vunpack.c.l.bf16 %v641
        %v693 = vunpack.c.l.bf16 %v642
        %v694 = vunpack.c.h.bf16 %v642
        %v695 = vunpack.c.l.bf16 %v643
        %v696 = vunpack.c.l.bf16 %v644
        %v697 = vunpack.c.h.bf16 %v644
        %v698 = vunpack.c.l.bf16 %v645
        %v699 = vunpack.c.l.bf16 %v646
        %v700 = vunpack.c.h.bf16 %v646
        %v701 = vunpack.c.l.bf16 %v647
        %v702 = vunpack.c.l.bf16 %v648
        %v703 = vunpack.c.h.bf16 %v648
        %v704 = vunpack.c.l.bf16 %v649
        %v705 = vunpack.c.l.bf16 %v650
        %v706 = vunpack.c.h.bf16 %v650
        %v707 = vunpack.c.l.bf16 %v651
        %v708 = vunpack.c.l.bf16 %v652
        %v709 = vunpack.c.h.bf16 %v652
        %v710 = vunpack.c.l.bf16 %v653
        %v711 = vunpack.c.l.bf16 %v654
        %v712 = vunpack.c.h.bf16 %v654
        %v713 = vunpack.c.l.bf16 %v655
        %v714 = vunpack.c.l.bf16 %v656
        %v715 = vunpack.c.h.bf16 %v656
        %v716 = vunpack.c.l.bf16 %v657
        %v717 = vunpack.c.l.bf16 %v658
        %v718 = vunpack.c.h.bf16 %v658
        %v719 = vunpack.c.l.bf16 %v659
        %v720 = vunpack.c.l.bf16 %v660
        %v721 = vunpack.c.h.bf16 %v660
        %v722 = vunpack.c.l.bf16 %v661
        %v723 = vunpack.c.l.bf16 %v662
        %v724 = vunpack.c.h.bf16 %v662
        %v725 = vunpack.c.l.bf16 %v663
        %v726 = vunpack.c.l.bf16 %v664
        %v727 = vunpack.c.h.bf16 %v664
        %v728 = vunpack.c.l.bf16 %v665
        %v729 = vsub.f32 %v561, %v666
        %v730 = vsub.f32 %v562, %v667
        %v731 = vsub.f32 %v563, %v668
        %v732 = vsub.f32 %v564, %v669
        %v733 = vsub.f32 %v565, %v670
        %v734 = vsub.f32 %v566, %v671
        %v735 = vsub.f32 %v567, %v672
        %v736 = vsub.f32 %v568, %v673
        %v737 = vsub.f32 %v569, %v674
        %v738 = vsub.f32 %v570, %v675
        %v739 = vsub.f32 %v571, %v676
        %v740 = vsub.f32 %v572, %v677
        %v741 = vsub.f32 %v573, %v678
        %v742 = vsub.f32 %v574, %v679
        %v743 = vsub.f32 %v575, %v680
        %v744 = vsub.f32 %v576, %v681
        %v745 = vsub.f32 %v577, %v682
        %v746 = vsub.f32 %v578, %v683
        %v747 = vsub.f32 %v579, %v684
        %v748 = vsub.f32 %v580, %v685
        %v749 = vsub.f32 %v581, %v686
        %v750 = vsub.f32 %v582, %v687
        %v751 = vsub.f32 %v583, %v688
        %v752 = vsub.f32 %v584, %v689
        %v753 = vsub.f32 %v585, %v690
        %v754 = vsub.f32 %v586, %v691
        %v755 = vsub.f32 %v587, %v692
        %v756 = vsub.f32 %v588, %v693
        %v757 = vsub.f32 %v589, %v694
        %v758 = vsub.f32 %v590, %v695
        %v759 = vsub.f32 %v591, %v696
        %v760 = vsub.f32 %v592, %v697
        %v761 = vsub.f32 %v593, %v698
        %v762 = vsub.f32 %v594, %v699
        %v763 = vsub.f32 %v595, %v700
        %v764 = vsub.f32 %v596, %v701
        %v765 = vsub.f32 %v597, %v702
        %v766 = vsub.f32 %v598, %v703
        %v767 = vsub.f32 %v599, %v704
        %v768 = vsub.f32 %v600, %v705
        %v769 = vsub.f32 %v601, %v706
        %v770 = vsub.f32 %v602, %v707
        %v771 = vsub.f32 %v603, %v708
        %v772 = vsub.f32 %v604, %v709
        %v773 = vsub.f32 %v605, %v710
        %v774 = vsub.f32 %v606, %v711
        %v775 = vsub.f32 %v607, %v712
        %v776 = vsub.f32 %v608, %v713
        %v777 = vsub.f32 %v609, %v714
        %v778 = vsub.f32 %v610, %v715
        %v779 = vsub.f32 %v611, %v716
        %v780 = vsub.f32 %v612, %v717
        %v781 = vsub.f32 %v613, %v718
        %v782 = vsub.f32 %v614, %v719
        %v783 = vsub.f32 %v615, %v720
        %v784 = vsub.f32 %v616, %v721
        %v785 = vsub.f32 %v617, %v722
        %v786 = vsub.f32 %v618, %v723
        %v787 = vsub.f32 %v619, %v724
        %v788 = vsub.f32 %v620, %v725
        %v789 = vsub.f32 %v621, %v726
        %v790 = vsub.f32 %v622, %v727
        %v791 = vsub.f32 %v623, %v728
        %v792 = vpack.c.bf16 %v732, %v729
        %v793 = vpack.c.bf16 %v733, %v730
        %v794 = vpack.c.bf16 %v734, %v731
        %v795 = vpack.c.bf16 %v738, %v735
        %v796 = vpack.c.bf16 %v739, %v736
        %v797 = vpack.c.bf16 %v740, %v737
        %v798 = vpack.c.bf16 %v744, %v741
        %v799 = vpack.c.bf16 %v745, %v742
        %v800 = vpack.c.bf16 %v746, %v743
        %v801 = vpack.c.bf16 %v750, %v747
        %v802 = vpack.c.bf16 %v751, %v748
        %v803 = vpack.c.bf16 %v752, %v749
        %v804 = vpack.c.bf16 %v756, %v753
        %v805 = vpack.c.bf16 %v757, %v754
        %v806 = vpack.c.bf16 %v758, %v755
        %v807 = vpack.c.bf16 %v762, %v759
        %v808 = vpack.c.bf16 %v763, %v760
        %v809 = vpack.c.bf16 %v764, %v761
        %v810 = vpack.c.bf16 %v768, %v765
        %v811 = vpack.c.bf16 %v769, %v766
        %v812 = vpack.c.bf16 %v770, %v767
        %v813 = vpack.c.bf16 %v774, %v771
        %v814 = vpack.c.bf16 %v775, %v772
        %v815 = vpack.c.bf16 %v776, %v773
        %v816 = vpack.c.bf16 %v780, %v777
        %v817 = vpack.c.bf16 %v781, %v778
        %v818 = vpack.c.bf16 %v782, %v779
        %v819 = vpack.c.bf16 %v786, %v783
        %v820 = vpack.c.bf16 %v787, %v784
        %v821 = vpack.c.bf16 %v788, %v785
        %v822 = vpack.c.bf16 %v789, %v789
        %v823 = vpack.c.bf16 %v790, %v790
        %v824 = vpack.c.bf16 %v791, %v791
        %v825 = vld [vmem:[%s247] sm:$0xff]
        %v826 = vld [vmem:[%s247 + $0x8] sm:$0xff]
        %v827 = vld [vmem:[%s247 + $0x10] sm:$0xff]
        %v828 = vld [vmem:[%s247 + $0x18] sm:$0xff]
        %v829 = vld [vmem:[%s247 + $0x20] sm:$0xff]
        %v830 = vld [vmem:[%s247 + $0x28] sm:$0xff]
        %v831 = vld [vmem:[%s247 + $0x30] sm:$0xff]
        %v832 = vld [vmem:[%s247 + $0x38] sm:$0xff]
        %v833 = vld [vmem:[%s247 + $0x40] sm:$0xff]
        %v834 = vld [vmem:[%s247 + $0x48] sm:$0xff]
        %v835 = vld [vmem:[%s247 + $0x50] sm:$0xff]
        %v836 = vld [vmem:[%s247 + $0x58] sm:$0xff]
        %v837 = vld [vmem:[%s247 + $0x60] sm:$0xff]
        %v838 = vld [vmem:[%s247 + $0x68] sm:$0xff]
        %v839 = vld [vmem:[%s247 + $0x70] sm:$0xff]
        %v840 = vld [vmem:[%s247 + $0x78] sm:$0xff]
        %v841 = vld [vmem:[%s247 + $0x80] sm:$0xff]
        %v842 = vld [vmem:[%s247 + $0x88] sm:$0xff]
        %v843 = vld [vmem:[%s247 + $0x90] sm:$0xff]
        %v844 = vld [vmem:[%s247 + $0x98] sm:$0xff]
        %v845 = vld [vmem:[%s247 + $0xa0] sm:$0xff]
        %v846 = vld [vmem:[%s247 + $0xa8] sm:$0xff]
        %v847 = vld [vmem:[%s247 + $0xb0] sm:$0xff]
        %v848 = vld [vmem:[%s247 + $0xb8] sm:$0xff]
        %v849 = vld [vmem:[%s247 + $0xc0] sm:$0xff]
        %v850 = vld [vmem:[%s247 + $0xc8] sm:$0xff]
        %v851 = vld [vmem:[%s247 + $0xd0] sm:$0xff]
        %v852 = vld [vmem:[%s247 + $0xd8] sm:$0xff]
        %v853 = vld [vmem:[%s247 + $0xe0] sm:$0xff]
        %v854 = vld [vmem:[%s247 + $0xe8] sm:$0xff]
        %v855 = vld [vmem:[%s247 + $0xf0] sm:$0xff]
        %v856 = vld [vmem:[%s247 + $0xf8] sm:$0xff]
        %v857 = vld [vmem:[%s247 + $0x100] sm:$0xff]
        %v858 = vld [vmem:[%s247 + $0x108] sm:$0xff]
        %v859 = vld [vmem:[%s247 + $0x110] sm:$0xff]
        %v860 = vld [vmem:[%s247 + $0x118] sm:$0xff]
        %v861 = vld [vmem:[%s247 + $0x120] sm:$0xff]
        %v862 = vld [vmem:[%s247 + $0x128] sm:$0xff]
        %v863 = vld [vmem:[%s247 + $0x130] sm:$0xff]
        %v864 = vld [vmem:[%s247 + $0x138] sm:$0xff]
        %v865 = vld [vmem:[%s247 + $0x140] sm:$0xff]
        %v866 = vld [vmem:[%s247 + $0x148] sm:$0xff]
        %v867 = vld [vmem:[%s247 + $0x150] sm:$0xff]
        %v868 = vld [vmem:[%s247 + $0x158] sm:$0xff]
        %v869 = vld [vmem:[%s247 + $0x160] sm:$0xff]
        %v870 = vld [vmem:[%s247 + $0x168] sm:$0xff]
        %v871 = vld [vmem:[%s247 + $0x170] sm:$0xff]
        %v872 = vld [vmem:[%s247 + $0x178] sm:$0xff]
        %v873 = vld [vmem:[%s247 + $0x180] sm:$0xff]
        %v874 = vld [vmem:[%s247 + $0x188] sm:$0xff]
        %v875 = vld [vmem:[%s247 + $0x190] sm:$0xff]
        %v876 = vld [vmem:[%s247 + $0x198] sm:$0xff]
        %v877 = vld [vmem:[%s247 + $0x1a0] sm:$0xff]
        %v878 = vld [vmem:[%s247 + $0x1a8] sm:$0xff]
        %v879 = vld [vmem:[%s247 + $0x1b0] sm:$0xff]
        %v880 = vld [vmem:[%s247 + $0x1b8] sm:$0xff]
        %v881 = vld [vmem:[%s247 + $0x1c0] sm:$0xff]
        %v882 = vld [vmem:[%s247 + $0x1c8] sm:$0xff]
        %v883 = vld [vmem:[%s247 + $0x1d0] sm:$0xff]
        %v884 = vld [vmem:[%s247 + $0x1d8] sm:$0xff]
        %v885 = vld [vmem:[%s247 + $0x1e0] sm:$0xff]
        %v886 = vld [vmem:[%s247 + $0x1e8] sm:$0xff]
        %v887 = vld [vmem:[%s247 + $0x1f0] sm:$0xff]
        %v888 = vld [vmem:[%s247 + $0x1f8] sm:$0xff]
        %v889 = vld [vmem:[%s247 + $0x200] sm:$0xff]
        %v890 = vld [vmem:[%s247 + $0x208] sm:$0xff]
        %v891 = vld [vmem:[%s247 + $0x210] sm:$0xff]
        %v892 = vld [vmem:[%s247 + $0x218] sm:$0xff]
        %v893 = vld [vmem:[%s247 + $0x220] sm:$0xff]
        %v894 = vld [vmem:[%s247 + $0x228] sm:$0xff]
        %v895 = vld [vmem:[%s247 + $0x230] sm:$0xff]
        %v896 = vld [vmem:[%s247 + $0x238] sm:$0xff]
        %v897 = vld [vmem:[%s247 + $0x240] sm:$0xff]
        %v898 = vld [vmem:[%s247 + $0x248] sm:$0xff]
        %v899 = vld [vmem:[%s247 + $0x250] sm:$0xff]
        %v900 = vld [vmem:[%s247 + $0x258] sm:$0xff]
        %v901 = vld [vmem:[%s247 + $0x260] sm:$0xff]
        %v902 = vld [vmem:[%s247 + $0x268] sm:$0xff]
        %v903 = vld [vmem:[%s247 + $0x270] sm:$0xff]
        %v904 = vld [vmem:[%s247 + $0x278] sm:$0xff]
        %v905 = vpack.c.bf16 %v826, %v825
        %v906 = vpack.c.bf16 %v828, %v827
        %v907 = vpack.c.bf16 %v830, %v829
        %v908 = vpack.c.bf16 %v832, %v831
        %v909 = vpack.c.bf16 %v834, %v833
        %v910 = vpack.c.bf16 %v836, %v835
        %v911 = vpack.c.bf16 %v838, %v837
        %v912 = vpack.c.bf16 %v840, %v839
        %v913 = vpack.c.bf16 %v842, %v841
        %v914 = vpack.c.bf16 %v844, %v843
        %v915 = vpack.c.bf16 %v846, %v845
        %v916 = vpack.c.bf16 %v848, %v847
        %v917 = vpack.c.bf16 %v850, %v849
        %v918 = vpack.c.bf16 %v852, %v851
        %v919 = vpack.c.bf16 %v854, %v853
        %v920 = vpack.c.bf16 %v856, %v855
        %v921 = vpack.c.bf16 %v858, %v857
        %v922 = vpack.c.bf16 %v860, %v859
        %v923 = vpack.c.bf16 %v862, %v861
        %v924 = vpack.c.bf16 %v864, %v863
        %v925 = vpack.c.bf16 %v866, %v865
        %v926 = vpack.c.bf16 %v868, %v867
        %v927 = vpack.c.bf16 %v870, %v869
        %v928 = vpack.c.bf16 %v872, %v871
        %v929 = vpack.c.bf16 %v874, %v873
        %v930 = vpack.c.bf16 %v876, %v875
        %v931 = vpack.c.bf16 %v878, %v877
        %v932 = vpack.c.bf16 %v880, %v879
        %v933 = vpack.c.bf16 %v882, %v881
        %v934 = vpack.c.bf16 %v884, %v883
        %v935 = vpack.c.bf16 %v886, %v885
        %v936 = vpack.c.bf16 %v888, %v887
        %v937 = vpack.c.bf16 %v890, %v889
        %v938 = vpack.c.bf16 %v892, %v891
        %v939 = vpack.c.bf16 %v894, %v893
        %v940 = vpack.c.bf16 %v896, %v895
        %v941 = vpack.c.bf16 %v898, %v897
        %v942 = vpack.c.bf16 %v900, %v899
        %v943 = vpack.c.bf16 %v902, %v901
        %v944 = vpack.c.bf16 %v904, %v903
        %v945 = vunpack.c.l.bf16 %v905
        %v946 = vunpack.c.h.bf16 %v905
        %v947 = vunpack.c.l.bf16 %v906
        %v948 = vunpack.c.h.bf16 %v906
        %v949 = vunpack.c.l.bf16 %v907
        %v950 = vunpack.c.h.bf16 %v907
        %v951 = vunpack.c.l.bf16 %v908
        %v952 = vunpack.c.h.bf16 %v908
        %v953 = vunpack.c.l.bf16 %v909
        %v954 = vunpack.c.h.bf16 %v909
        %v955 = vunpack.c.l.bf16 %v910
        %v956 = vunpack.c.h.bf16 %v910
        %v957 = vunpack.c.l.bf16 %v911
        %v958 = vunpack.c.h.bf16 %v911
        %v959 = vunpack.c.l.bf16 %v912
        %v960 = vunpack.c.h.bf16 %v912
        %v961 = vunpack.c.l.bf16 %v913
        %v962 = vunpack.c.h.bf16 %v913
        %v963 = vunpack.c.l.bf16 %v914
        %v964 = vunpack.c.h.bf16 %v914
        %v965 = vunpack.c.l.bf16 %v915
        %v966 = vunpack.c.h.bf16 %v915
        %v967 = vunpack.c.l.bf16 %v916
        %v968 = vunpack.c.h.bf16 %v916
        %v969 = vunpack.c.l.bf16 %v917
        %v970 = vunpack.c.h.bf16 %v917
        %v971 = vunpack.c.l.bf16 %v918
        %v972 = vunpack.c.h.bf16 %v918
        %v973 = vunpack.c.l.bf16 %v919
        %v974 = vunpack.c.h.bf16 %v919
        %v975 = vunpack.c.l.bf16 %v920
        %v976 = vunpack.c.h.bf16 %v920
        %v977 = vunpack.c.l.bf16 %v921
        %v978 = vunpack.c.h.bf16 %v921
        %v979 = vunpack.c.l.bf16 %v922
        %v980 = vunpack.c.h.bf16 %v922
        %v981 = vunpack.c.l.bf16 %v923
        %v982 = vunpack.c.h.bf16 %v923
        %v983 = vunpack.c.l.bf16 %v924
        %v984 = vunpack.c.h.bf16 %v924
        %v985 = vunpack.c.l.bf16 %v925
        %v986 = vunpack.c.h.bf16 %v925
        %v987 = vunpack.c.l.bf16 %v926
        %v988 = vunpack.c.h.bf16 %v926
        %v989 = vunpack.c.l.bf16 %v927
        %v990 = vunpack.c.h.bf16 %v927
        %v991 = vunpack.c.l.bf16 %v928
        %v992 = vunpack.c.h.bf16 %v928
        %v993 = vunpack.c.l.bf16 %v929
        %v994 = vunpack.c.h.bf16 %v929
        %v995 = vunpack.c.l.bf16 %v930
        %v996 = vunpack.c.h.bf16 %v930
        %v997 = vunpack.c.l.bf16 %v931
        %v998 = vunpack.c.h.bf16 %v931
        %v999 = vunpack.c.l.bf16 %v932
        %v1000 = vunpack.c.h.bf16 %v932
        %v1001 = vunpack.c.l.bf16 %v933
        %v1002 = vunpack.c.h.bf16 %v933
        %v1003 = vunpack.c.l.bf16 %v934
        %v1004 = vunpack.c.h.bf16 %v934
        %v1005 = vunpack.c.l.bf16 %v935
        %v1006 = vunpack.c.h.bf16 %v935
        %v1007 = vunpack.c.l.bf16 %v936
        %v1008 = vunpack.c.h.bf16 %v936
        %v1009 = vunpack.c.l.bf16 %v937
        %v1010 = vunpack.c.h.bf16 %v937
        %v1011 = vunpack.c.l.bf16 %v938
        %v1012 = vunpack.c.h.bf16 %v938
        %v1013 = vunpack.c.l.bf16 %v939
        %v1014 = vunpack.c.h.bf16 %v939
        %v1015 = vunpack.c.l.bf16 %v940
        %v1016 = vunpack.c.h.bf16 %v940
        %v1017 = vunpack.c.l.bf16 %v941
        %v1018 = vunpack.c.h.bf16 %v941
        %v1019 = vunpack.c.l.bf16 %v942
        %v1020 = vunpack.c.h.bf16 %v942
        %v1021 = vunpack.c.l.bf16 %v943
        %v1022 = vunpack.c.h.bf16 %v943
        %v1023 = vunpack.c.l.bf16 %v944
        %v1024 = vunpack.c.h.bf16 %v944
        %v1025 = vsub.f32 %v825, %v945
        %v1026 = vsub.f32 %v826, %v946
        %v1027 = vsub.f32 %v827, %v947
        %v1028 = vsub.f32 %v828, %v948
        %v1029 = vsub.f32 %v829, %v949
        %v1030 = vsub.f32 %v830, %v950
        %v1031 = vsub.f32 %v831, %v951
        %v1032 = vsub.f32 %v832, %v952
        %v1033 = vsub.f32 %v833, %v953
        %v1034 = vsub.f32 %v834, %v954
        %v1035 = vsub.f32 %v835, %v955
        %v1036 = vsub.f32 %v836, %v956
        %v1037 = vsub.f32 %v837, %v957
        %v1038 = vsub.f32 %v838, %v958
        %v1039 = vsub.f32 %v839, %v959
        %v1040 = vsub.f32 %v840, %v960
        %v1041 = vsub.f32 %v841, %v961
        %v1042 = vsub.f32 %v842, %v962
        %v1043 = vsub.f32 %v843, %v963
        %v1044 = vsub.f32 %v844, %v964
        %v1045 = vsub.f32 %v845, %v965
        %v1046 = vsub.f32 %v846, %v966
        %v1047 = vsub.f32 %v847, %v967
        %v1048 = vsub.f32 %v848, %v968
        %v1049 = vsub.f32 %v849, %v969
        %v1050 = vsub.f32 %v850, %v970
        %v1051 = vsub.f32 %v851, %v971
        %v1052 = vsub.f32 %v852, %v972
        %v1053 = vsub.f32 %v853, %v973
        %v1054 = vsub.f32 %v854, %v974
        %v1055 = vsub.f32 %v855, %v975
        %v1056 = vsub.f32 %v856, %v976
        %v1057 = vsub.f32 %v857, %v977
        %v1058 = vsub.f32 %v858, %v978
        %v1059 = vsub.f32 %v859, %v979
        %v1060 = vsub.f32 %v860, %v980
        %v1061 = vsub.f32 %v861, %v981
        %v1062 = vsub.f32 %v862, %v982
        %v1063 = vsub.f32 %v863, %v983
        %v1064 = vsub.f32 %v864, %v984
        %v1065 = vsub.f32 %v865, %v985
        %v1066 = vsub.f32 %v866, %v986
        %v1067 = vsub.f32 %v867, %v987
        %v1068 = vsub.f32 %v868, %v988
        %v1069 = vsub.f32 %v869, %v989
        %v1070 = vsub.f32 %v870, %v990
        %v1071 = vsub.f32 %v871, %v991
        %v1072 = vsub.f32 %v872, %v992
        %v1073 = vsub.f32 %v873, %v993
        %v1074 = vsub.f32 %v874, %v994
        %v1075 = vsub.f32 %v875, %v995
        %v1076 = vsub.f32 %v876, %v996
        %v1077 = vsub.f32 %v877, %v997
        %v1078 = vsub.f32 %v878, %v998
        %v1079 = vsub.f32 %v879, %v999
        %v1080 = vsub.f32 %v880, %v1000
        %v1081 = vsub.f32 %v881, %v1001
        %v1082 = vsub.f32 %v882, %v1002
        %v1083 = vsub.f32 %v883, %v1003
        %v1084 = vsub.f32 %v884, %v1004
        %v1085 = vsub.f32 %v885, %v1005
        %v1086 = vsub.f32 %v886, %v1006
        %v1087 = vsub.f32 %v887, %v1007
        %v1088 = vsub.f32 %v888, %v1008
        %v1089 = vsub.f32 %v889, %v1009
        %v1090 = vsub.f32 %v890, %v1010
        %v1091 = vsub.f32 %v891, %v1011
        %v1092 = vsub.f32 %v892, %v1012
        %v1093 = vsub.f32 %v893, %v1013
        %v1094 = vsub.f32 %v894, %v1014
        %v1095 = vsub.f32 %v895, %v1015
        %v1096 = vsub.f32 %v896, %v1016
        %v1097 = vsub.f32 %v897, %v1017
        %v1098 = vsub.f32 %v898, %v1018
        %v1099 = vsub.f32 %v899, %v1019
        %v1100 = vsub.f32 %v900, %v1020
        %v1101 = vsub.f32 %v901, %v1021
        %v1102 = vsub.f32 %v902, %v1022
        %v1103 = vsub.f32 %v903, %v1023
        %v1104 = vsub.f32 %v904, %v1024
        %v1105 = vpack.c.bf16 %v1027, %v1025
        %v1106 = vpack.c.bf16 %v1028, %v1026
        %v1107 = vpack.c.bf16 %v1031, %v1029
        %v1108 = vpack.c.bf16 %v1032, %v1030
        %v1109 = vpack.c.bf16 %v1035, %v1033
        %v1110 = vpack.c.bf16 %v1036, %v1034
        %v1111 = vpack.c.bf16 %v1039, %v1037
        %v1112 = vpack.c.bf16 %v1040, %v1038
        %v1113 = vpack.c.bf16 %v1043, %v1041
        %v1114 = vpack.c.bf16 %v1044, %v1042
        %v1115 = vpack.c.bf16 %v1047, %v1045
        %v1116 = vpack.c.bf16 %v1048, %v1046
        %v1117 = vpack.c.bf16 %v1051, %v1049
        %v1118 = vpack.c.bf16 %v1052, %v1050
        %v1119 = vpack.c.bf16 %v1055, %v1053
        %v1120 = vpack.c.bf16 %v1056, %v1054
        %v1121 = vpack.c.bf16 %v1059, %v1057
        %v1122 = vpack.c.bf16 %v1060, %v1058
        %v1123 = vpack.c.bf16 %v1063, %v1061
        %v1124 = vpack.c.bf16 %v1064, %v1062
        %v1125 = vpack.c.bf16 %v1067, %v1065
        %v1126 = vpack.c.bf16 %v1068, %v1066
        %v1127 = vpack.c.bf16 %v1071, %v1069
        %v1128 = vpack.c.bf16 %v1072, %v1070
        %v1129 = vpack.c.bf16 %v1075, %v1073
        %v1130 = vpack.c.bf16 %v1076, %v1074
        %v1131 = vpack.c.bf16 %v1079, %v1077
        %v1132 = vpack.c.bf16 %v1080, %v1078
        %v1133 = vpack.c.bf16 %v1083, %v1081
        %v1134 = vpack.c.bf16 %v1084, %v1082
        %v1135 = vpack.c.bf16 %v1087, %v1085
        %v1136 = vpack.c.bf16 %v1088, %v1086
        %v1137 = vpack.c.bf16 %v1091, %v1089
        %v1138 = vpack.c.bf16 %v1092, %v1090
        %v1139 = vpack.c.bf16 %v1095, %v1093
        %v1140 = vpack.c.bf16 %v1096, %v1094
        %v1141 = vpack.c.bf16 %v1099, %v1097
        %v1142 = vpack.c.bf16 %v1100, %v1098
        %v1143 = vpack.c.bf16 %v1103, %v1101
        %v1144 = vpack.c.bf16 %v1104, %v1102
        %v1145 = vld [vmem:[%s262] sm:$0xff]
        %v1146 = vld [vmem:[%s262 + $0x8] sm:$0xff]
        %v1147 = vld [vmem:[%s262 + $0x10] sm:$0xff]
        %v1148 = vld [vmem:[%s262 + $0x18] sm:$0xff]
        %v1149 = vld [vmem:[%s262 + $0x20] sm:$0xff]
        %v1150 = vld [vmem:[%s262 + $0x28] sm:$0xff]
        %v1151 = vld [vmem:[%s262 + $0x30] sm:$0xff]
        %v1152 = vld [vmem:[%s262 + $0x38] sm:$0xff]
        %v1153 = vld [vmem:[%s262 + $0x40] sm:$0xff]
        %v1154 = vld [vmem:[%s262 + $0x48] sm:$0xff]
        %v1155 = vld [vmem:[%s262 + $0x50] sm:$0xff]
        %v1156 = vld [vmem:[%s262 + $0x58] sm:$0xff]
        %v1157 = vld [vmem:[%s262 + $0x60] sm:$0xff]
        %v1158 = vld [vmem:[%s262 + $0x68] sm:$0xff]
        %v1159 = vld [vmem:[%s262 + $0x70] sm:$0xff]
        %v1160 = vld [vmem:[%s262 + $0x78] sm:$0xff]
        %v1161 = vld [vmem:[%s262 + $0x80] sm:$0xff]
        %v1162 = vld [vmem:[%s262 + $0x88] sm:$0xff]
        %v1163 = vld [vmem:[%s262 + $0x90] sm:$0xff]
        %v1164 = vld [vmem:[%s262 + $0x98] sm:$0xff]
        %v1165 = vld [vmem:[%s262 + $0xa0] sm:$0xff]
        %v1166 = vld [vmem:[%s262 + $0xa8] sm:$0xff]
        %v1167 = vld [vmem:[%s262 + $0xb0] sm:$0xff]
        %v1168 = vld [vmem:[%s262 + $0xb8] sm:$0xff]
        %v1169 = vld [vmem:[%s262 + $0xc0] sm:$0xff]
        %v1170 = vld [vmem:[%s262 + $0xc8] sm:$0xff]
        %v1171 = vld [vmem:[%s262 + $0xd0] sm:$0xff]
        %v1172 = vld [vmem:[%s262 + $0xd8] sm:$0xff]
        %v1173 = vld [vmem:[%s262 + $0xe0] sm:$0xff]
        %v1174 = vld [vmem:[%s262 + $0xe8] sm:$0xff]
        %v1175 = vld [vmem:[%s262 + $0xf0] sm:$0xff]
        %v1176 = vld [vmem:[%s262 + $0xf8] sm:$0xff]
        %v1177 = vld [vmem:[%s262 + $0x100] sm:$0xff]
        %v1178 = vld [vmem:[%s262 + $0x108] sm:$0xff]
        %v1179 = vld [vmem:[%s262 + $0x110] sm:$0xff]
        %v1180 = vld [vmem:[%s262 + $0x118] sm:$0xff]
        %v1181 = vld [vmem:[%s262 + $0x120] sm:$0xff]
        %v1182 = vld [vmem:[%s262 + $0x128] sm:$0xff]
        %v1183 = vld [vmem:[%s262 + $0x130] sm:$0xff]
        %v1184 = vld [vmem:[%s262 + $0x138] sm:$0xff]
        %v1185 = vld [vmem:[%s262 + $0x140] sm:$0xff]
        %v1186 = vld [vmem:[%s262 + $0x148] sm:$0xff]
        %v1187 = vld [vmem:[%s262 + $0x150] sm:$0xff]
        %v1188 = vld [vmem:[%s262 + $0x158] sm:$0xff]
        %v1189 = vld [vmem:[%s262 + $0x160] sm:$0xff]
        %v1190 = vld [vmem:[%s262 + $0x168] sm:$0xff]
        %v1191 = vld [vmem:[%s262 + $0x170] sm:$0xff]
        %v1192 = vld [vmem:[%s262 + $0x178] sm:$0xff]
        %v1193 = vld [vmem:[%s262 + $0x180] sm:$0xff]
        %v1194 = vld [vmem:[%s262 + $0x188] sm:$0xff]
        %v1195 = vld [vmem:[%s262 + $0x190] sm:$0xff]
        %v1196 = vld [vmem:[%s262 + $0x198] sm:$0xff]
        %v1197 = vld [vmem:[%s262 + $0x1a0] sm:$0xff]
        %v1198 = vld [vmem:[%s262 + $0x1a8] sm:$0xff]
        %v1199 = vld [vmem:[%s262 + $0x1b0] sm:$0xff]
        %v1200 = vld [vmem:[%s262 + $0x1b8] sm:$0xff]
        %v1201 = vld [vmem:[%s262 + $0x1c0] sm:$0xff]
        %v1202 = vld [vmem:[%s262 + $0x1c8] sm:$0xff]
        %v1203 = vld [vmem:[%s262 + $0x1d0] sm:$0xff]
        %v1204 = vld [vmem:[%s262 + $0x1d8] sm:$0xff]
        %v1205 = vld [vmem:[%s262 + $0x1e0] sm:$0xff]
        %v1206 = vld [vmem:[%s262 + $0x1e8] sm:$0xff]
        %v1207 = vld [vmem:[%s262 + $0x1f0] sm:$0xff]
        %v1208 = vld [vmem:[%s262 + $0x1f8] sm:$0xff]
        %v1209 = vld [vmem:[%s262 + $0x200] sm:$0xff]
        %v1210 = vld [vmem:[%s262 + $0x208] sm:$0xff]
        %v1211 = vld [vmem:[%s262 + $0x210] sm:$0xff]
        %v1212 = vld [vmem:[%s262 + $0x218] sm:$0xff]
        %v1213 = vld [vmem:[%s262 + $0x220] sm:$0xff]
        %v1214 = vld [vmem:[%s262 + $0x228] sm:$0xff]
        %v1215 = vld [vmem:[%s262 + $0x230] sm:$0xff]
        %v1216 = vld [vmem:[%s262 + $0x238] sm:$0xff]
        %v1217 = vld [vmem:[%s262 + $0x240] sm:$0xff]
        %v1218 = vld [vmem:[%s262 + $0x248] sm:$0xff]
        %v1219 = vld [vmem:[%s262 + $0x250] sm:$0xff]
        %v1220 = vld [vmem:[%s262 + $0x258] sm:$0xff]
        %v1221 = vld [vmem:[%s262 + $0x260] sm:$0xff]
        %v1222 = vld [vmem:[%s262 + $0x268] sm:$0xff]
        %v1223 = vld [vmem:[%s262 + $0x270] sm:$0xff]
        %v1224 = vld [vmem:[%s262 + $0x278] sm:$0xff]
        %v1225 = vpack.c.bf16 %v1146, %v1145
        %v1226 = vpack.c.bf16 %v1148, %v1147
        %v1227 = vpack.c.bf16 %v1150, %v1149
        %v1228 = vpack.c.bf16 %v1152, %v1151
        %v1229 = vpack.c.bf16 %v1154, %v1153
        %v1230 = vpack.c.bf16 %v1156, %v1155
        %v1231 = vpack.c.bf16 %v1158, %v1157
        %v1232 = vpack.c.bf16 %v1160, %v1159
        %v1233 = vpack.c.bf16 %v1162, %v1161
        %v1234 = vpack.c.bf16 %v1164, %v1163
        %v1235 = vpack.c.bf16 %v1166, %v1165
        %v1236 = vpack.c.bf16 %v1168, %v1167
        %v1237 = vpack.c.bf16 %v1170, %v1169
        %v1238 = vpack.c.bf16 %v1172, %v1171
        %v1239 = vpack.c.bf16 %v1174, %v1173
        %v1240 = vpack.c.bf16 %v1176, %v1175
        %v1241 = vpack.c.bf16 %v1178, %v1177
        %v1242 = vpack.c.bf16 %v1180, %v1179
        %v1243 = vpack.c.bf16 %v1182, %v1181
        %v1244 = vpack.c.bf16 %v1184, %v1183
        %v1245 = vpack.c.bf16 %v1186, %v1185
        %v1246 = vpack.c.bf16 %v1188, %v1187
        %v1247 = vpack.c.bf16 %v1190, %v1189
        %v1248 = vpack.c.bf16 %v1192, %v1191
        %v1249 = vpack.c.bf16 %v1194, %v1193
        %v1250 = vpack.c.bf16 %v1196, %v1195
        %v1251 = vpack.c.bf16 %v1198, %v1197
        %v1252 = vpack.c.bf16 %v1200, %v1199
        %v1253 = vpack.c.bf16 %v1202, %v1201
        %v1254 = vpack.c.bf16 %v1204, %v1203
        %v1255 = vpack.c.bf16 %v1206, %v1205
        %v1256 = vpack.c.bf16 %v1208, %v1207
        %v1257 = vpack.c.bf16 %v1210, %v1209
        %v1258 = vpack.c.bf16 %v1212, %v1211
        %v1259 = vpack.c.bf16 %v1214, %v1213
        %v1260 = vpack.c.bf16 %v1216, %v1215
        %v1261 = vpack.c.bf16 %v1218, %v1217
        %v1262 = vpack.c.bf16 %v1220, %v1219
        %v1263 = vpack.c.bf16 %v1222, %v1221
        %v1264 = vpack.c.bf16 %v1224, %v1223
        %v1265 = vunpack.c.l.bf16 %v1225
        %v1266 = vunpack.c.h.bf16 %v1225
        %v1267 = vunpack.c.l.bf16 %v1226
        %v1268 = vunpack.c.h.bf16 %v1226
        %v1269 = vunpack.c.l.bf16 %v1227
        %v1270 = vunpack.c.h.bf16 %v1227
        %v1271 = vunpack.c.l.bf16 %v1228
        %v1272 = vunpack.c.h.bf16 %v1228
        %v1273 = vunpack.c.l.bf16 %v1229
        %v1274 = vunpack.c.h.bf16 %v1229
        %v1275 = vunpack.c.l.bf16 %v1230
        %v1276 = vunpack.c.h.bf16 %v1230
        %v1277 = vunpack.c.l.bf16 %v1231
        %v1278 = vunpack.c.h.bf16 %v1231
        %v1279 = vunpack.c.l.bf16 %v1232
        %v1280 = vunpack.c.h.bf16 %v1232
        %v1281 = vunpack.c.l.bf16 %v1233
        %v1282 = vunpack.c.h.bf16 %v1233
        %v1283 = vunpack.c.l.bf16 %v1234
        %v1284 = vunpack.c.h.bf16 %v1234
        %v1285 = vunpack.c.l.bf16 %v1235
        %v1286 = vunpack.c.h.bf16 %v1235
        %v1287 = vunpack.c.l.bf16 %v1236
        %v1288 = vunpack.c.h.bf16 %v1236
        %v1289 = vunpack.c.l.bf16 %v1237
        %v1290 = vunpack.c.h.bf16 %v1237
        %v1291 = vunpack.c.l.bf16 %v1238
        %v1292 = vunpack.c.h.bf16 %v1238
        %v1293 = vunpack.c.l.bf16 %v1239
        %v1294 = vunpack.c.h.bf16 %v1239
        %v1295 = vunpack.c.l.bf16 %v1240
        %v1296 = vunpack.c.h.bf16 %v1240
        %v1297 = vunpack.c.l.bf16 %v1241
        %v1298 = vunpack.c.h.bf16 %v1241
        %v1299 = vunpack.c.l.bf16 %v1242
        %v1300 = vunpack.c.h.bf16 %v1242
        %v1301 = vunpack.c.l.bf16 %v1243
        %v1302 = vunpack.c.h.bf16 %v1243
        %v1303 = vunpack.c.l.bf16 %v1244
        %v1304 = vunpack.c.h.bf16 %v1244
        %v1305 = vunpack.c.l.bf16 %v1245
        %v1306 = vunpack.c.h.bf16 %v1245
        %v1307 = vunpack.c.l.bf16 %v1246
        %v1308 = vunpack.c.h.bf16 %v1246
        %v1309 = vunpack.c.l.bf16 %v1247
        %v1310 = vunpack.c.h.bf16 %v1247
        %v1311 = vunpack.c.l.bf16 %v1248
        %v1312 = vunpack.c.h.bf16 %v1248
        %v1313 = vunpack.c.l.bf16 %v1249
        %v1314 = vunpack.c.h.bf16 %v1249
        %v1315 = vunpack.c.l.bf16 %v1250
        %v1316 = vunpack.c.h.bf16 %v1250
        %v1317 = vunpack.c.l.bf16 %v1251
        %v1318 = vunpack.c.h.bf16 %v1251
        %v1319 = vunpack.c.l.bf16 %v1252
        %v1320 = vunpack.c.h.bf16 %v1252
        %v1321 = vunpack.c.l.bf16 %v1253
        %v1322 = vunpack.c.h.bf16 %v1253
        %v1323 = vunpack.c.l.bf16 %v1254
        %v1324 = vunpack.c.h.bf16 %v1254
        %v1325 = vunpack.c.l.bf16 %v1255
        %v1326 = vunpack.c.h.bf16 %v1255
        %v1327 = vunpack.c.l.bf16 %v1256
        %v1328 = vunpack.c.h.bf16 %v1256
        %v1329 = vunpack.c.l.bf16 %v1257
        %v1330 = vunpack.c.h.bf16 %v1257
        %v1331 = vunpack.c.l.bf16 %v1258
        %v1332 = vunpack.c.h.bf16 %v1258
        %v1333 = vunpack.c.l.bf16 %v1259
        %v1334 = vunpack.c.h.bf16 %v1259
        %v1335 = vunpack.c.l.bf16 %v1260
        %v1336 = vunpack.c.h.bf16 %v1260
        %v1337 = vunpack.c.l.bf16 %v1261
        %v1338 = vunpack.c.h.bf16 %v1261
        %v1339 = vunpack.c.l.bf16 %v1262
        %v1340 = vunpack.c.h.bf16 %v1262
        %v1341 = vunpack.c.l.bf16 %v1263
        %v1342 = vunpack.c.h.bf16 %v1263
        %v1343 = vunpack.c.l.bf16 %v1264
        %v1344 = vunpack.c.h.bf16 %v1264
        %v1345 = vsub.f32 %v1145, %v1265
        %v1346 = vsub.f32 %v1146, %v1266
        %v1347 = vsub.f32 %v1147, %v1267
        %v1348 = vsub.f32 %v1148, %v1268
        %v1349 = vsub.f32 %v1149, %v1269
        %v1350 = vsub.f32 %v1150, %v1270
        %v1351 = vsub.f32 %v1151, %v1271
        %v1352 = vsub.f32 %v1152, %v1272
        %v1353 = vsub.f32 %v1153, %v1273
        %v1354 = vsub.f32 %v1154, %v1274
        %v1355 = vsub.f32 %v1155, %v1275
        %v1356 = vsub.f32 %v1156, %v1276
        %v1357 = vsub.f32 %v1157, %v1277
        %v1358 = vsub.f32 %v1158, %v1278
        %v1359 = vsub.f32 %v1159, %v1279
        %v1360 = vsub.f32 %v1160, %v1280
        %v1361 = vsub.f32 %v1161, %v1281
        %v1362 = vsub.f32 %v1162, %v1282
        %v1363 = vsub.f32 %v1163, %v1283
        %v1364 = vsub.f32 %v1164, %v1284
        %v1365 = vsub.f32 %v1165, %v1285
        %v1366 = vsub.f32 %v1166, %v1286
        %v1367 = vsub.f32 %v1167, %v1287
        %v1368 = vsub.f32 %v1168, %v1288
        %v1369 = vsub.f32 %v1169, %v1289
        %v1370 = vsub.f32 %v1170, %v1290
        %v1371 = vsub.f32 %v1171, %v1291
        %v1372 = vsub.f32 %v1172, %v1292
        %v1373 = vsub.f32 %v1173, %v1293
        %v1374 = vsub.f32 %v1174, %v1294
        %v1375 = vsub.f32 %v1175, %v1295
        %v1376 = vsub.f32 %v1176, %v1296
        %v1377 = vsub.f32 %v1177, %v1297
        %v1378 = vsub.f32 %v1178, %v1298
        %v1379 = vsub.f32 %v1179, %v1299
        %v1380 = vsub.f32 %v1180, %v1300
        %v1381 = vsub.f32 %v1181, %v1301
        %v1382 = vsub.f32 %v1182, %v1302
        %v1383 = vsub.f32 %v1183, %v1303
        %v1384 = vsub.f32 %v1184, %v1304
        %v1385 = vsub.f32 %v1185, %v1305
        %v1386 = vsub.f32 %v1186, %v1306
        %v1387 = vsub.f32 %v1187, %v1307
        %v1388 = vsub.f32 %v1188, %v1308
        %v1389 = vsub.f32 %v1189, %v1309
        %v1390 = vsub.f32 %v1190, %v1310
        %v1391 = vsub.f32 %v1191, %v1311
        %v1392 = vsub.f32 %v1192, %v1312
        %v1393 = vsub.f32 %v1193, %v1313
        %v1394 = vsub.f32 %v1194, %v1314
        %v1395 = vsub.f32 %v1195, %v1315
        %v1396 = vsub.f32 %v1196, %v1316
        %v1397 = vsub.f32 %v1197, %v1317
        %v1398 = vsub.f32 %v1198, %v1318
        %v1399 = vsub.f32 %v1199, %v1319
        %v1400 = vsub.f32 %v1200, %v1320
        %v1401 = vsub.f32 %v1201, %v1321
        %v1402 = vsub.f32 %v1202, %v1322
        %v1403 = vsub.f32 %v1203, %v1323
        %v1404 = vsub.f32 %v1204, %v1324
        %v1405 = vsub.f32 %v1205, %v1325
        %v1406 = vsub.f32 %v1206, %v1326
        %v1407 = vsub.f32 %v1207, %v1327
        %v1408 = vsub.f32 %v1208, %v1328
        %v1409 = vsub.f32 %v1209, %v1329
        %v1410 = vsub.f32 %v1210, %v1330
        %v1411 = vsub.f32 %v1211, %v1331
        %v1412 = vsub.f32 %v1212, %v1332
        %v1413 = vsub.f32 %v1213, %v1333
        %v1414 = vsub.f32 %v1214, %v1334
        %v1415 = vsub.f32 %v1215, %v1335
        %v1416 = vsub.f32 %v1216, %v1336
        %v1417 = vsub.f32 %v1217, %v1337
        %v1418 = vsub.f32 %v1218, %v1338
        %v1419 = vsub.f32 %v1219, %v1339
        %v1420 = vsub.f32 %v1220, %v1340
        %v1421 = vsub.f32 %v1221, %v1341
        %v1422 = vsub.f32 %v1222, %v1342
        %v1423 = vsub.f32 %v1223, %v1343
        %v1424 = vsub.f32 %v1224, %v1344
        %v1425 = vpack.c.bf16 %v1347, %v1345
        %v1426 = vpack.c.bf16 %v1348, %v1346
        %v1427 = vpack.c.bf16 %v1351, %v1349
        %v1428 = vpack.c.bf16 %v1352, %v1350
        %v1429 = vpack.c.bf16 %v1355, %v1353
        %v1430 = vpack.c.bf16 %v1356, %v1354
        %v1431 = vpack.c.bf16 %v1359, %v1357
        %v1432 = vpack.c.bf16 %v1360, %v1358
        %v1433 = vpack.c.bf16 %v1363, %v1361
        %v1434 = vpack.c.bf16 %v1364, %v1362
        %v1435 = vpack.c.bf16 %v1367, %v1365
        %v1436 = vpack.c.bf16 %v1368, %v1366
        %v1437 = vpack.c.bf16 %v1371, %v1369
        %v1438 = vpack.c.bf16 %v1372, %v1370
        %v1439 = vpack.c.bf16 %v1375, %v1373
        %v1440 = vpack.c.bf16 %v1376, %v1374
        %v1441 = vpack.c.bf16 %v1379, %v1377
        %v1442 = vpack.c.bf16 %v1380, %v1378
        %v1443 = vpack.c.bf16 %v1383, %v1381
        %v1444 = vpack.c.bf16 %v1384, %v1382
        %v1445 = vpack.c.bf16 %v1387, %v1385
        %v1446 = vpack.c.bf16 %v1388, %v1386
        %v1447 = vpack.c.bf16 %v1391, %v1389
        %v1448 = vpack.c.bf16 %v1392, %v1390
        %v1449 = vpack.c.bf16 %v1395, %v1393
        %v1450 = vpack.c.bf16 %v1396, %v1394
        %v1451 = vpack.c.bf16 %v1399, %v1397
        %v1452 = vpack.c.bf16 %v1400, %v1398
        %v1453 = vpack.c.bf16 %v1403, %v1401
        %v1454 = vpack.c.bf16 %v1404, %v1402
        %v1455 = vpack.c.bf16 %v1407, %v1405
        %v1456 = vpack.c.bf16 %v1408, %v1406
        %v1457 = vpack.c.bf16 %v1411, %v1409
        %v1458 = vpack.c.bf16 %v1412, %v1410
        %v1459 = vpack.c.bf16 %v1415, %v1413
        %v1460 = vpack.c.bf16 %v1416, %v1414
        %v1461 = vpack.c.bf16 %v1419, %v1417
        %v1462 = vpack.c.bf16 %v1420, %v1418
        %v1463 = vpack.c.bf16 %v1423, %v1421
        %v1464 = vpack.c.bf16 %v1424, %v1422
        %v1507 = vunpack.c.l.b16 %v360
        %v1508 = vunpack.c.h.b16 %v360
        %v1509 = vunpack.c.l.b16 %v361
        %v1510 = vunpack.c.l.b16 %v362
        %v1511 = vunpack.c.h.b16 %v362
        %v1512 = vunpack.c.l.b16 %v363
        %v1513 = vunpack.c.l.b16 %v364
        %v1514 = vunpack.c.h.b16 %v364
        %v1515 = vunpack.c.l.b16 %v365
        %v1516 = vunpack.c.l.b16 %v366
        %v1517 = vunpack.c.h.b16 %v366
        %v1518 = vunpack.c.l.b16 %v367
        %v1519 = vunpack.c.l.b16 %v368
        %v1520 = vunpack.c.h.b16 %v368
        %v1521 = vunpack.c.l.b16 %v369
        %v1522 = vunpack.c.l.b16 %v370
        %v1523 = vunpack.c.h.b16 %v370
        %v1524 = vunpack.c.l.b16 %v371
        %v1525 = vunpack.c.l.b16 %v372
        %v1526 = vunpack.c.h.b16 %v372
        %v1527 = vunpack.c.l.b16 %v373
        %v1528 = vunpack.c.l.b16 %v374
        %v1529 = vunpack.c.h.b16 %v374
        %v1530 = vunpack.c.l.b16 %v375
        %v1531 = vunpack.c.l.b16 %v376
        %v1532 = vunpack.c.h.b16 %v376
        %v1533 = vunpack.c.l.b16 %v377
        %v1534 = vunpack.c.l.b16 %v378
        %v1535 = vunpack.c.h.b16 %v378
        %v1536 = vunpack.c.l.b16 %v379
        %v1537 = vunpack.c.l.b16 %v380
        %v1538 = vunpack.c.h.b16 %v380
        %v1539 = vunpack.c.l.b16 %v381
        %v1540 = vunpack.c.l.b16 %v382
        %v1541 = vunpack.c.h.b16 %v382
        %v1542 = vunpack.c.l.b16 %v383
        %v1543 = vunpack.c.l.b16 %v384
        %v1544 = vunpack.c.h.b16 %v384
        %v1545 = vunpack.c.l.b16 %v385
        %v1546 = vunpack.c.l.b16 %v386
        %v1547 = vunpack.c.h.b16 %v386
        %v1548 = vunpack.c.l.b16 %v387
        %v1549 = vunpack.c.l.b16 %v388
        %v1550 = vunpack.c.h.b16 %v388
        %v1551 = vunpack.c.l.b16 %v389
        %v1552 = vunpack.c.l.b16 %v390
        %v1553 = vunpack.c.h.b16 %v390
        %v1554 = vunpack.c.l.b16 %v391
        %v1555 = vunpack.c.l.b16 %v392
        %v1556 = vunpack.c.h.b16 %v392
        %v1557 = vunpack.c.l.b16 %v393
        %v1558 = vunpack.c.l.b16 %v394
        %v1559 = vunpack.c.h.b16 %v394
        %v1560 = vunpack.c.l.b16 %v395
        %v1561 = vunpack.c.l.b16 %v396
        %v1562 = vunpack.c.h.b16 %v396
        %v1563 = vunpack.c.l.b16 %v397
        %v1564 = vunpack.c.l.b16 %v398
        %v1565 = vunpack.c.h.b16 %v398
        %v1566 = vunpack.c.l.b16 %v399
        %v1567 = vunpack.c.l.b16 %v400
        %v1568 = vunpack.c.h.b16 %v400
        %v1569 = vunpack.c.l.b16 %v401
        %v1570 = vpack.c.b16 %v1510, %v1507
        %v1571 = vpack.c.b16 %v1511, %v1508
        %v1572 = vpack.c.b16 %v1512, %v1509
        %v1573 = vpack.c.b16 %v1516, %v1513
        %v1574 = vpack.c.b16 %v1517, %v1514
        %v1575 = vpack.c.b16 %v1518, %v1515
        %v1576 = vpack.c.b16 %v1522, %v1519
        %v1577 = vpack.c.b16 %v1523, %v1520
        %v1578 = vpack.c.b16 %v1524, %v1521
        %v1579 = vpack.c.b16 %v1528, %v1525
        %v1580 = vpack.c.b16 %v1529, %v1526
        %v1581 = vpack.c.b16 %v1530, %v1527
        %v1582 = vpack.c.b16 %v1534, %v1531
        %v1583 = vpack.c.b16 %v1535, %v1532
        %v1584 = vpack.c.b16 %v1536, %v1533
        %v1585 = vpack.c.b16 %v1540, %v1537
        %v1586 = vpack.c.b16 %v1541, %v1538
        %v1587 = vpack.c.b16 %v1542, %v1539
        %v1588 = vpack.c.b16 %v1546, %v1543
        %v1589 = vpack.c.b16 %v1547, %v1544
        %v1590 = vpack.c.b16 %v1548, %v1545
        %v1591 = vpack.c.b16 %v1552, %v1549
        %v1592 = vpack.c.b16 %v1553, %v1550
        %v1593 = vpack.c.b16 %v1554, %v1551
        %v1594 = vpack.c.b16 %v1558, %v1555
        %v1595 = vpack.c.b16 %v1559, %v1556
        %v1596 = vpack.c.b16 %v1560, %v1557
        %v1597 = vpack.c.b16 %v1564, %v1561
        %v1598 = vpack.c.b16 %v1565, %v1562
        %v1599 = vpack.c.b16 %v1566, %v1563
        %v1600 = vpack.c.b16 %v1567, %v1567
        %v1601 = vpack.c.b16 %v1568, %v1568
        %v1602 = vpack.c.b16 %v1569, %v1569
        %v1665 = vunpack.c.l.b16 %v905
        %v1666 = vunpack.c.h.b16 %v905
        %v1667 = vunpack.c.l.b16 %v906
        %v1668 = vunpack.c.h.b16 %v906
        %v1669 = vunpack.c.l.b16 %v907
        %v1670 = vunpack.c.h.b16 %v907
        %v1671 = vunpack.c.l.b16 %v908
        %v1672 = vunpack.c.h.b16 %v908
        %v1673 = vunpack.c.l.b16 %v909
        %v1674 = vunpack.c.h.b16 %v909
        %v1675 = vunpack.c.l.b16 %v910
        %v1676 = vunpack.c.h.b16 %v910
        %v1677 = vunpack.c.l.b16 %v911
        %v1678 = vunpack.c.h.b16 %v911
        %v1679 = vunpack.c.l.b16 %v912
        %v1680 = vunpack.c.h.b16 %v912
        %v1681 = vunpack.c.l.b16 %v913
        %v1682 = vunpack.c.h.b16 %v913
        %v1683 = vunpack.c.l.b16 %v914
        %v1684 = vunpack.c.h.b16 %v914
        %v1685 = vunpack.c.l.b16 %v915
        %v1686 = vunpack.c.h.b16 %v915
        %v1687 = vunpack.c.l.b16 %v916
        %v1688 = vunpack.c.h.b16 %v916
        %v1689 = vunpack.c.l.b16 %v917
        %v1690 = vunpack.c.h.b16 %v917
        %v1691 = vunpack.c.l.b16 %v918
        %v1692 = vunpack.c.h.b16 %v918
        %v1693 = vunpack.c.l.b16 %v919
        %v1694 = vunpack.c.h.b16 %v919
        %v1695 = vunpack.c.l.b16 %v920
        %v1696 = vunpack.c.h.b16 %v920
        %v1697 = vunpack.c.l.b16 %v921
        %v1698 = vunpack.c.h.b16 %v921
        %v1699 = vunpack.c.l.b16 %v922
        %v1700 = vunpack.c.h.b16 %v922
        %v1701 = vunpack.c.l.b16 %v923
        %v1702 = vunpack.c.h.b16 %v923
        %v1703 = vunpack.c.l.b16 %v924
        %v1704 = vunpack.c.h.b16 %v924
        %v1705 = vunpack.c.l.b16 %v925
        %v1706 = vunpack.c.h.b16 %v925
        %v1707 = vunpack.c.l.b16 %v926
        %v1708 = vunpack.c.h.b16 %v926
        %v1709 = vunpack.c.l.b16 %v927
        %v1710 = vunpack.c.h.b16 %v927
        %v1711 = vunpack.c.l.b16 %v928
        %v1712 = vunpack.c.h.b16 %v928
        %v1713 = vunpack.c.l.b16 %v929
        %v1714 = vunpack.c.h.b16 %v929
        %v1715 = vunpack.c.l.b16 %v930
        %v1716 = vunpack.c.h.b16 %v930
        %v1717 = vunpack.c.l.b16 %v931
        %v1718 = vunpack.c.h.b16 %v931
        %v1719 = vunpack.c.l.b16 %v932
        %v1720 = vunpack.c.h.b16 %v932
        %v1721 = vunpack.c.l.b16 %v933
        %v1722 = vunpack.c.h.b16 %v933
        %v1723 = vunpack.c.l.b16 %v934
        %v1724 = vunpack.c.h.b16 %v934
        %v1725 = vunpack.c.l.b16 %v935
        %v1726 = vunpack.c.h.b16 %v935
        %v1727 = vunpack.c.l.b16 %v936
        %v1728 = vunpack.c.h.b16 %v936
        %v1729 = vunpack.c.l.b16 %v937
        %v1730 = vunpack.c.h.b16 %v937
        %v1731 = vunpack.c.l.b16 %v938
        %v1732 = vunpack.c.h.b16 %v938
        %v1733 = vunpack.c.l.b16 %v939
        %v1734 = vunpack.c.h.b16 %v939
        %v1735 = vunpack.c.l.b16 %v940
        %v1736 = vunpack.c.h.b16 %v940
        %v1737 = vunpack.c.l.b16 %v941
        %v1738 = vunpack.c.h.b16 %v941
        %v1739 = vunpack.c.l.b16 %v942
        %v1740 = vunpack.c.h.b16 %v942
        %v1741 = vunpack.c.l.b16 %v943
        %v1742 = vunpack.c.h.b16 %v943
        %v1743 = vunpack.c.l.b16 %v944
        %v1744 = vunpack.c.h.b16 %v944
        %v1745 = vpack.c.b16 %v1667, %v1665
        %v1746 = vpack.c.b16 %v1668, %v1666
        %v1747 = vpack.c.b16 %v1671, %v1669
        %v1748 = vpack.c.b16 %v1672, %v1670
        %v1749 = vpack.c.b16 %v1675, %v1673
        %v1750 = vpack.c.b16 %v1676, %v1674
        %v1751 = vpack.c.b16 %v1679, %v1677
        %v1752 = vpack.c.b16 %v1680, %v1678
        %v1753 = vpack.c.b16 %v1683, %v1681
        %v1754 = vpack.c.b16 %v1684, %v1682
        %v1755 = vpack.c.b16 %v1687, %v1685
        %v1756 = vpack.c.b16 %v1688, %v1686
        %v1757 = vpack.c.b16 %v1691, %v1689
        %v1758 = vpack.c.b16 %v1692, %v1690
        %v1759 = vpack.c.b16 %v1695, %v1693
        %v1760 = vpack.c.b16 %v1696, %v1694
        %v1761 = vpack.c.b16 %v1699, %v1697
        %v1762 = vpack.c.b16 %v1700, %v1698
        %v1763 = vpack.c.b16 %v1703, %v1701
        %v1764 = vpack.c.b16 %v1704, %v1702
        %v1765 = vpack.c.b16 %v1707, %v1705
        %v1766 = vpack.c.b16 %v1708, %v1706
        %v1767 = vpack.c.b16 %v1711, %v1709
        %v1768 = vpack.c.b16 %v1712, %v1710
        %v1769 = vpack.c.b16 %v1715, %v1713
        %v1770 = vpack.c.b16 %v1716, %v1714
        %v1771 = vpack.c.b16 %v1719, %v1717
        %v1772 = vpack.c.b16 %v1720, %v1718
        %v1773 = vpack.c.b16 %v1723, %v1721
        %v1774 = vpack.c.b16 %v1724, %v1722
        %v1775 = vpack.c.b16 %v1727, %v1725
        %v1776 = vpack.c.b16 %v1728, %v1726
        %v1777 = vpack.c.b16 %v1731, %v1729
        %v1778 = vpack.c.b16 %v1732, %v1730
        %v1779 = vpack.c.b16 %v1735, %v1733
        %v1780 = vpack.c.b16 %v1736, %v1734
        %v1781 = vpack.c.b16 %v1739, %v1737
        %v1782 = vpack.c.b16 %v1740, %v1738
        %v1783 = vpack.c.b16 %v1743, %v1741
        %v1784 = vpack.c.b16 %v1744, %v1742
        %vm1825 = vcmask 523264
        %v1827 = vsel %vm1825, %v1572, 0
        %v1830 = vsel %vm1825, %v1575, 0
        %v1833 = vsel %vm1825, %v1578, 0
        %v1836 = vsel %vm1825, %v1581, 0
        %v1839 = vsel %vm1825, %v1584, 0
        %v1842 = vsel %vm1825, %v1587, 0
        %v1845 = vsel %vm1825, %v1590, 0
        %v1848 = vsel %vm1825, %v1593, 0
        %v1851 = vsel %vm1825, %v1596, 0
        %v1854 = vsel %vm1825, %v1599, 0
        %v1857 = vsel %vm1825, %v1602, 0
        %1859 = vmatpush.bf16.msra.mxu0 %v1759
        %1860 = vmatpush.bf16.msra.mxu0 %v1757
        %1861 = vmatpush.bf16.msra.mxu0 %v1755
        %1862 = vmatpush.bf16.msra.mxu0 %v1753
        %1863 = vmatpush.bf16.msra.mxu0 %v1751
        %1864 = vmatpush.bf16.msra.mxu0 %v1749
        %1865 = vmatpush.bf16.msra.mxu0 %v1747
        %1866 = vmatpush.bf16.msra.mxu0 %v1745
        %1867 = vmatmul.bf16.gmra.mxu0 %v1570
        %v1868 = vpop.f32.mrf.mxu0
        %v1869 = vadd.f32 0.0, %v1868
        %v1870 = vpop.f32.mrf.mxu0
        %v1871 = vadd.f32 0.0, %v1870
        %1872 = vmatmul.bf16.gmra.mxu0 %v1573
        %v1873 = vpop.f32.mrf.mxu0
        %v1874 = vadd.f32 0.0, %v1873
        %v1875 = vpop.f32.mrf.mxu0
        %v1876 = vadd.f32 0.0, %v1875
        %1877 = vmatmul.bf16.gmra.mxu0 %v1576
        %v1878 = vpop.f32.mrf.mxu0
        %v1879 = vadd.f32 0.0, %v1878
        %v1880 = vpop.f32.mrf.mxu0
        %v1881 = vadd.f32 0.0, %v1880
        %1882 = vmatmul.bf16.gmra.mxu0 %v1579
        %v1883 = vpop.f32.mrf.mxu0
        %v1884 = vadd.f32 0.0, %v1883
        %v1885 = vpop.f32.mrf.mxu0
        %v1886 = vadd.f32 0.0, %v1885
        %1887 = vmatmul.bf16.gmra.mxu0 %v1582
        %v1888 = vpop.f32.mrf.mxu0
        %v1889 = vadd.f32 0.0, %v1888
        %v1890 = vpop.f32.mrf.mxu0
        %v1891 = vadd.f32 0.0, %v1890
        %1892 = vmatmul.bf16.gmra.mxu0 %v1585
        %v1893 = vpop.f32.mrf.mxu0
        %v1894 = vadd.f32 0.0, %v1893
        %v1895 = vpop.f32.mrf.mxu0
        %v1896 = vadd.f32 0.0, %v1895
        %1897 = vmatmul.bf16.gmra.mxu0 %v1588
        %v1898 = vpop.f32.mrf.mxu0
        %v1899 = vadd.f32 0.0, %v1898
        %v1900 = vpop.f32.mrf.mxu0
        %v1901 = vadd.f32 0.0, %v1900
        %1902 = vmatmul.bf16.gmra.mxu0 %v1591
        %v1903 = vpop.f32.mrf.mxu0
        %v1904 = vadd.f32 0.0, %v1903
        %v1905 = vpop.f32.mrf.mxu0
        %v1906 = vadd.f32 0.0, %v1905
        %1907 = vmatmul.bf16.gmra.mxu0 %v1594
        %v1908 = vpop.f32.mrf.mxu0
        %v1909 = vadd.f32 0.0, %v1908
        %v1910 = vpop.f32.mrf.mxu0
        %v1911 = vadd.f32 0.0, %v1910
        %1912 = vmatmul.bf16.gmra.mxu0 %v1597
        %v1913 = vpop.f32.mrf.mxu0
        %v1914 = vadd.f32 0.0, %v1913
        %v1915 = vpop.f32.mrf.mxu0
        %v1916 = vadd.f32 0.0, %v1915
        %1917 = vmatmul.bf16.gmra.mxu0 %v1600
        %v1918 = vpop.f32.mrf.mxu0
        %v1919 = vadd.f32 0.0, %v1918
        %v1920 = vpop.f32.mrf.mxu0
        %1921 = vdwg.mxu0
        %1922 = vmatpush.bf16.msra.mxu0 %v1775
        %1923 = vmatpush.bf16.msra.mxu0 %v1773
        %1924 = vmatpush.bf16.msra.mxu0 %v1771
        %1925 = vmatpush.bf16.msra.mxu0 %v1769
        %1926 = vmatpush.bf16.msra.mxu0 %v1767
        %1927 = vmatpush.bf16.msra.mxu0 %v1765
        %1928 = vmatpush.bf16.msra.mxu0 %v1763
        %1929 = vmatpush.bf16.msra.mxu0 %v1761
        %1930 = vmatmul.bf16.gmra.mxu0 %v1571
        %v1931 = vpop.f32.mrf.mxu0
        %v1932 = vadd.f32 %v1869, %v1931
        %v1933 = vpop.f32.mrf.mxu0
        %v1934 = vadd.f32 %v1871, %v1933
        %1935 = vmatmul.bf16.gmra.mxu0 %v1574
        %v1936 = vpop.f32.mrf.mxu0
        %v1937 = vadd.f32 %v1874, %v1936
        %v1938 = vpop.f32.mrf.mxu0
        %v1939 = vadd.f32 %v1876, %v1938
        %1940 = vmatmul.bf16.gmra.mxu0 %v1577
        %v1941 = vpop.f32.mrf.mxu0
        %v1942 = vadd.f32 %v1879, %v1941
        %v1943 = vpop.f32.mrf.mxu0
        %v1944 = vadd.f32 %v1881, %v1943
        %1945 = vmatmul.bf16.gmra.mxu0 %v1580
        %v1946 = vpop.f32.mrf.mxu0
        %v1947 = vadd.f32 %v1884, %v1946
        %v1948 = vpop.f32.mrf.mxu0
        %v1949 = vadd.f32 %v1886, %v1948
        %1950 = vmatmul.bf16.gmra.mxu0 %v1583
        %v1951 = vpop.f32.mrf.mxu0
        %v1952 = vadd.f32 %v1889, %v1951
        %v1953 = vpop.f32.mrf.mxu0
        %v1954 = vadd.f32 %v1891, %v1953
        %1955 = vmatmul.bf16.gmra.mxu0 %v1586
        %v1956 = vpop.f32.mrf.mxu0
        %v1957 = vadd.f32 %v1894, %v1956
        %v1958 = vpop.f32.mrf.mxu0
        %v1959 = vadd.f32 %v1896, %v1958
        %1960 = vmatmul.bf16.gmra.mxu0 %v1589
        %v1961 = vpop.f32.mrf.mxu0
        %v1962 = vadd.f32 %v1899, %v1961
        %v1963 = vpop.f32.mrf.mxu0
        %v1964 = vadd.f32 %v1901, %v1963
        %1965 = vmatmul.bf16.gmra.mxu0 %v1592
        %v1966 = vpop.f32.mrf.mxu0
        %v1967 = vadd.f32 %v1904, %v1966
        %v1968 = vpop.f32.mrf.mxu0
        %v1969 = vadd.f32 %v1906, %v1968
        %1970 = vmatmul.bf16.gmra.mxu0 %v1595
        %v1971 = vpop.f32.mrf.mxu0
        %v1972 = vadd.f32 %v1909, %v1971
        %v1973 = vpop.f32.mrf.mxu0
        %v1974 = vadd.f32 %v1911, %v1973
        %1975 = vmatmul.bf16.gmra.mxu0 %v1598
        %v1976 = vpop.f32.mrf.mxu0
        %v1977 = vadd.f32 %v1914, %v1976
        %v1978 = vpop.f32.mrf.mxu0
        %v1979 = vadd.f32 %v1916, %v1978
        %1980 = vmatmul.bf16.gmra.mxu0 %v1601
        %v1981 = vpop.f32.mrf.mxu0
        %v1982 = vadd.f32 %v1919, %v1981
        %v1983 = vpop.f32.mrf.mxu0
        %1984 = vdwg.mxu0
        %1985 = vmatpush.bf16.msra.mxu0 0
        %1986 = vmatpush.bf16.msra.mxu0 0
        %1987 = vmatpush.bf16.msra.mxu0 0
        %1988 = vmatpush.bf16.msra.mxu0 0
        %1989 = vmatpush.bf16.msra.mxu0 %v1783
        %1990 = vmatpush.bf16.msra.mxu0 %v1781
        %1991 = vmatpush.bf16.msra.mxu0 %v1779
        %1992 = vmatpush.bf16.msra.mxu0 %v1777
        %1993 = vmatmul.bf16.gmra.mxu0 %v1827
        %v1994 = vpop.f32.mrf.mxu0
        %v1995 = vadd.f32 %v1932, %v1994
        %v1996 = vpop.f32.mrf.mxu0
        %v1997 = vadd.f32 %v1934, %v1996
        %1998 = vmatmul.bf16.gmra.mxu0 %v1830
        %v1999 = vpop.f32.mrf.mxu0
        %v2000 = vadd.f32 %v1937, %v1999
        %v2001 = vpop.f32.mrf.mxu0
        %v2002 = vadd.f32 %v1939, %v2001
        %2003 = vmatmul.bf16.gmra.mxu0 %v1833
        %v2004 = vpop.f32.mrf.mxu0
        %v2005 = vadd.f32 %v1942, %v2004
        %v2006 = vpop.f32.mrf.mxu0
        %v2007 = vadd.f32 %v1944, %v2006
        %2008 = vmatmul.bf16.gmra.mxu0 %v1836
        %v2009 = vpop.f32.mrf.mxu0
        %v2010 = vadd.f32 %v1947, %v2009
        %v2011 = vpop.f32.mrf.mxu0
        %v2012 = vadd.f32 %v1949, %v2011
        %2013 = vmatmul.bf16.gmra.mxu0 %v1839
        %v2014 = vpop.f32.mrf.mxu0
        %v2015 = vadd.f32 %v1952, %v2014
        %v2016 = vpop.f32.mrf.mxu0
        %v2017 = vadd.f32 %v1954, %v2016
        %2018 = vmatmul.bf16.gmra.mxu0 %v1842
        %v2019 = vpop.f32.mrf.mxu0
        %v2020 = vadd.f32 %v1957, %v2019
        %v2021 = vpop.f32.mrf.mxu0
        %v2022 = vadd.f32 %v1959, %v2021
        %2023 = vmatmul.bf16.gmra.mxu0 %v1845
        %v2024 = vpop.f32.mrf.mxu0
        %v2025 = vadd.f32 %v1962, %v2024
        %v2026 = vpop.f32.mrf.mxu0
        %v2027 = vadd.f32 %v1964, %v2026
        %2028 = vmatmul.bf16.gmra.mxu0 %v1848
        %v2029 = vpop.f32.mrf.mxu0
        %v2030 = vadd.f32 %v1967, %v2029
        %v2031 = vpop.f32.mrf.mxu0
        %v2032 = vadd.f32 %v1969, %v2031
        %2033 = vmatmul.bf16.gmra.mxu0 %v1851
        %v2034 = vpop.f32.mrf.mxu0
        %v2035 = vadd.f32 %v1972, %v2034
        %v2036 = vpop.f32.mrf.mxu0
        %v2037 = vadd.f32 %v1974, %v2036
        %2038 = vmatmul.bf16.gmra.mxu0 %v1854
        %v2039 = vpop.f32.mrf.mxu0
        %v2040 = vadd.f32 %v1977, %v2039
        %v2041 = vpop.f32.mrf.mxu0
        %v2042 = vadd.f32 %v1979, %v2041
        %2043 = vmatmul.bf16.gmra.mxu0 %v1857
        %v2044 = vpop.f32.mrf.mxu0
        %v2045 = vadd.f32 %v1982, %v2044
        %v2046 = vpop.f32.mrf.mxu0
        %2047 = vdwg.mxu0
        %2048 = vmatpush.bf16.msra.mxu0 %v1760
        %2049 = vmatpush.bf16.msra.mxu0 %v1758
        %2050 = vmatpush.bf16.msra.mxu0 %v1756
        %2051 = vmatpush.bf16.msra.mxu0 %v1754
        %2052 = vmatpush.bf16.msra.mxu0 %v1752
        %2053 = vmatpush.bf16.msra.mxu0 %v1750
        %2054 = vmatpush.bf16.msra.mxu0 %v1748
        %2055 = vmatpush.bf16.msra.mxu0 %v1746
        %2056 = vmatmul.bf16.gmra.mxu0 %v1570
        %v2057 = vpop.f32.mrf.mxu0
        %v2058 = vadd.f32 0.0, %v2057
        %v2059 = vpop.f32.mrf.mxu0
        %v2060 = vadd.f32 0.0, %v2059
        %2061 = vmatmul.bf16.gmra.mxu0 %v1573
        %v2062 = vpop.f32.mrf.mxu0
        %v2063 = vadd.f32 0.0, %v2062
        %v2064 = vpop.f32.mrf.mxu0
        %v2065 = vadd.f32 0.0, %v2064
        %2066 = vmatmul.bf16.gmra.mxu0 %v1576
        %v2067 = vpop.f32.mrf.mxu0
        %v2068 = vadd.f32 0.0, %v2067
        %v2069 = vpop.f32.mrf.mxu0
        %v2070 = vadd.f32 0.0, %v2069
        %2071 = vmatmul.bf16.gmra.mxu0 %v1579
        %v2072 = vpop.f32.mrf.mxu0
        %v2073 = vadd.f32 0.0, %v2072
        %v2074 = vpop.f32.mrf.mxu0
        %v2075 = vadd.f32 0.0, %v2074
        %2076 = vmatmul.bf16.gmra.mxu0 %v1582
        %v2077 = vpop.f32.mrf.mxu0
        %v2078 = vadd.f32 0.0, %v2077
        %v2079 = vpop.f32.mrf.mxu0
        %v2080 = vadd.f32 0.0, %v2079
        %2081 = vmatmul.bf16.gmra.mxu0 %v1585
        %v2082 = vpop.f32.mrf.mxu0
        %v2083 = vadd.f32 0.0, %v2082
        %v2084 = vpop.f32.mrf.mxu0
        %v2085 = vadd.f32 0.0, %v2084
        %2086 = vmatmul.bf16.gmra.mxu0 %v1588
        %v2087 = vpop.f32.mrf.mxu0
        %v2088 = vadd.f32 0.0, %v2087
        %v2089 = vpop.f32.mrf.mxu0
        %v2090 = vadd.f32 0.0, %v2089
        %2091 = vmatmul.bf16.gmra.mxu0 %v1591
        %v2092 = vpop.f32.mrf.mxu0
        %v2093 = vadd.f32 0.0, %v2092
        %v2094 = vpop.f32.mrf.mxu0
        %v2095 = vadd.f32 0.0, %v2094
        %2096 = vmatmul.bf16.gmra.mxu0 %v1594
        %v2097 = vpop.f32.mrf.mxu0
        %v2098 = vadd.f32 0.0, %v2097
        %v2099 = vpop.f32.mrf.mxu0
        %v2100 = vadd.f32 0.0, %v2099
        %2101 = vmatmul.bf16.gmra.mxu0 %v1597
        %v2102 = vpop.f32.mrf.mxu0
        %v2103 = vadd.f32 0.0, %v2102
        %v2104 = vpop.f32.mrf.mxu0
        %v2105 = vadd.f32 0.0, %v2104
        %2106 = vmatmul.bf16.gmra.mxu0 %v1600
        %v2107 = vpop.f32.mrf.mxu0
        %v2108 = vadd.f32 0.0, %v2107
        %v2109 = vpop.f32.mrf.mxu0
        %2110 = vdwg.mxu0
        %2111 = vmatpush.bf16.msra.mxu0 %v1776
        %2112 = vmatpush.bf16.msra.mxu0 %v1774
        %2113 = vmatpush.bf16.msra.mxu0 %v1772
        %2114 = vmatpush.bf16.msra.mxu0 %v1770
        %2115 = vmatpush.bf16.msra.mxu0 %v1768
        %2116 = vmatpush.bf16.msra.mxu0 %v1766
        %2117 = vmatpush.bf16.msra.mxu0 %v1764
        %2118 = vmatpush.bf16.msra.mxu0 %v1762
        %2119 = vmatmul.bf16.gmra.mxu0 %v1571
        %v2120 = vpop.f32.mrf.mxu0
        %v2121 = vadd.f32 %v2058, %v2120
        %v2122 = vpop.f32.mrf.mxu0
        %v2123 = vadd.f32 %v2060, %v2122
        %2124 = vmatmul.bf16.gmra.mxu0 %v1574
        %v2125 = vpop.f32.mrf.mxu0
        %v2126 = vadd.f32 %v2063, %v2125
        %v2127 = vpop.f32.mrf.mxu0
        %v2128 = vadd.f32 %v2065, %v2127
        %2129 = vmatmul.bf16.gmra.mxu0 %v1577
        %v2130 = vpop.f32.mrf.mxu0
        %v2131 = vadd.f32 %v2068, %v2130
        %v2132 = vpop.f32.mrf.mxu0
        %v2133 = vadd.f32 %v2070, %v2132
        %2134 = vmatmul.bf16.gmra.mxu0 %v1580
        %v2135 = vpop.f32.mrf.mxu0
        %v2136 = vadd.f32 %v2073, %v2135
        %v2137 = vpop.f32.mrf.mxu0
        %v2138 = vadd.f32 %v2075, %v2137
        %2139 = vmatmul.bf16.gmra.mxu0 %v1583
        %v2140 = vpop.f32.mrf.mxu0
        %v2141 = vadd.f32 %v2078, %v2140
        %v2142 = vpop.f32.mrf.mxu0
        %v2143 = vadd.f32 %v2080, %v2142
        %2144 = vmatmul.bf16.gmra.mxu0 %v1586
        %v2145 = vpop.f32.mrf.mxu0
        %v2146 = vadd.f32 %v2083, %v2145
        %v2147 = vpop.f32.mrf.mxu0
        %v2148 = vadd.f32 %v2085, %v2147
        %2149 = vmatmul.bf16.gmra.mxu0 %v1589
        %v2150 = vpop.f32.mrf.mxu0
        %v2151 = vadd.f32 %v2088, %v2150
        %v2152 = vpop.f32.mrf.mxu0
        %v2153 = vadd.f32 %v2090, %v2152
        %2154 = vmatmul.bf16.gmra.mxu0 %v1592
        %v2155 = vpop.f32.mrf.mxu0
        %v2156 = vadd.f32 %v2093, %v2155
        %v2157 = vpop.f32.mrf.mxu0
        %v2158 = vadd.f32 %v2095, %v2157
        %2159 = vmatmul.bf16.gmra.mxu0 %v1595
        %v2160 = vpop.f32.mrf.mxu0
        %v2161 = vadd.f32 %v2098, %v2160
        %v2162 = vpop.f32.mrf.mxu0
        %v2163 = vadd.f32 %v2100, %v2162
        %2164 = vmatmul.bf16.gmra.mxu0 %v1598
        %v2165 = vpop.f32.mrf.mxu0
        %v2166 = vadd.f32 %v2103, %v2165
        %v2167 = vpop.f32.mrf.mxu0
        %v2168 = vadd.f32 %v2105, %v2167
        %2169 = vmatmul.bf16.gmra.mxu0 %v1601
        %v2170 = vpop.f32.mrf.mxu0
        %v2171 = vadd.f32 %v2108, %v2170
        %v2172 = vpop.f32.mrf.mxu0
        %2173 = vdwg.mxu0
        %2174 = vmatpush.bf16.msra.mxu0 0
        %2175 = vmatpush.bf16.msra.mxu0 0
        %2176 = vmatpush.bf16.msra.mxu0 0
        %2177 = vmatpush.bf16.msra.mxu0 0
        %2178 = vmatpush.bf16.msra.mxu0 %v1784
        %2179 = vmatpush.bf16.msra.mxu0 %v1782
        %2180 = vmatpush.bf16.msra.mxu0 %v1780
        %2181 = vmatpush.bf16.msra.mxu0 %v1778
        %2182 = vmatmul.bf16.gmra.mxu0 %v1827
        %v2183 = vpop.f32.mrf.mxu0
        %v2184 = vadd.f32 %v2121, %v2183
        %v2185 = vpop.f32.mrf.mxu0
        %v2186 = vadd.f32 %v2123, %v2185
        %2187 = vmatmul.bf16.gmra.mxu0 %v1830
        %v2188 = vpop.f32.mrf.mxu0
        %v2189 = vadd.f32 %v2126, %v2188
        %v2190 = vpop.f32.mrf.mxu0
        %v2191 = vadd.f32 %v2128, %v2190
        %2192 = vmatmul.bf16.gmra.mxu0 %v1833
        %v2193 = vpop.f32.mrf.mxu0
        %v2194 = vadd.f32 %v2131, %v2193
        %v2195 = vpop.f32.mrf.mxu0
        %v2196 = vadd.f32 %v2133, %v2195
        %2197 = vmatmul.bf16.gmra.mxu0 %v1836
        %v2198 = vpop.f32.mrf.mxu0
        %v2199 = vadd.f32 %v2136, %v2198
        %v2200 = vpop.f32.mrf.mxu0
        %v2201 = vadd.f32 %v2138, %v2200
        %2202 = vmatmul.bf16.gmra.mxu0 %v1839
        %v2203 = vpop.f32.mrf.mxu0
        %v2204 = vadd.f32 %v2141, %v2203
        %v2205 = vpop.f32.mrf.mxu0
        %v2206 = vadd.f32 %v2143, %v2205
        %2207 = vmatmul.bf16.gmra.mxu0 %v1842
        %v2208 = vpop.f32.mrf.mxu0
        %v2209 = vadd.f32 %v2146, %v2208
        %v2210 = vpop.f32.mrf.mxu0
        %v2211 = vadd.f32 %v2148, %v2210
        %2212 = vmatmul.bf16.gmra.mxu0 %v1845
        %v2213 = vpop.f32.mrf.mxu0
        %v2214 = vadd.f32 %v2151, %v2213
        %v2215 = vpop.f32.mrf.mxu0
        %v2216 = vadd.f32 %v2153, %v2215
        %2217 = vmatmul.bf16.gmra.mxu0 %v1848
        %v2218 = vpop.f32.mrf.mxu0
        %v2219 = vadd.f32 %v2156, %v2218
        %v2220 = vpop.f32.mrf.mxu0
        %v2221 = vadd.f32 %v2158, %v2220
        %2222 = vmatmul.bf16.gmra.mxu0 %v1851
        %v2223 = vpop.f32.mrf.mxu0
        %v2224 = vadd.f32 %v2161, %v2223
        %v2225 = vpop.f32.mrf.mxu0
        %v2226 = vadd.f32 %v2163, %v2225
        %2227 = vmatmul.bf16.gmra.mxu0 %v1854
        %v2228 = vpop.f32.mrf.mxu0
        %v2229 = vadd.f32 %v2166, %v2228
        %v2230 = vpop.f32.mrf.mxu0
        %v2231 = vadd.f32 %v2168, %v2230
        %2232 = vmatmul.bf16.gmra.mxu0 %v1857
        %v2233 = vpop.f32.mrf.mxu0
        %v2234 = vadd.f32 %v2171, %v2233
        %v2235 = vpop.f32.mrf.mxu0
        %2236 = vdwg.mxu0
        %2237 = vst [vmem:[%s292] sm:$0xff] %v1995
        %2238 = vst [vmem:[%s292 + $0x8] sm:$0xff] %v2184
        %2239 = vst [vmem:[%s292 + $0x10] sm:$0xff] %v1997
        %2240 = vst [vmem:[%s292 + $0x18] sm:$0xff] %v2186
        %2241 = vst [vmem:[%s292 + $0x20] sm:$0xff] %v2000
        %2242 = vst [vmem:[%s292 + $0x28] sm:$0xff] %v2189
        %2243 = vst [vmem:[%s292 + $0x30] sm:$0xff] %v2002
        %2244 = vst [vmem:[%s292 + $0x38] sm:$0xff] %v2191
        %2245 = vst [vmem:[%s292 + $0x40] sm:$0xff] %v2005
        %2246 = vst [vmem:[%s292 + $0x48] sm:$0xff] %v2194
        %2247 = vst [vmem:[%s292 + $0x50] sm:$0xff] %v2007
        %2248 = vst [vmem:[%s292 + $0x58] sm:$0xff] %v2196
        %2249 = vst [vmem:[%s292 + $0x60] sm:$0xff] %v2010
        %2250 = vst [vmem:[%s292 + $0x68] sm:$0xff] %v2199
        %2251 = vst [vmem:[%s292 + $0x70] sm:$0xff] %v2012
        %2252 = vst [vmem:[%s292 + $0x78] sm:$0xff] %v2201
        %2253 = vst [vmem:[%s292 + $0x80] sm:$0xff] %v2015
        %2254 = vst [vmem:[%s292 + $0x88] sm:$0xff] %v2204
        %2255 = vst [vmem:[%s292 + $0x90] sm:$0xff] %v2017
        %2256 = vst [vmem:[%s292 + $0x98] sm:$0xff] %v2206
        %2257 = vst [vmem:[%s292 + $0xa0] sm:$0xff] %v2020
        %2258 = vst [vmem:[%s292 + $0xa8] sm:$0xff] %v2209
        %2259 = vst [vmem:[%s292 + $0xb0] sm:$0xff] %v2022
        %2260 = vst [vmem:[%s292 + $0xb8] sm:$0xff] %v2211
        %2261 = vst [vmem:[%s292 + $0xc0] sm:$0xff] %v2025
        %2262 = vst [vmem:[%s292 + $0xc8] sm:$0xff] %v2214
        %2263 = vst [vmem:[%s292 + $0xd0] sm:$0xff] %v2027
        %2264 = vst [vmem:[%s292 + $0xd8] sm:$0xff] %v2216
        %2265 = vst [vmem:[%s292 + $0xe0] sm:$0xff] %v2030
        %2266 = vst [vmem:[%s292 + $0xe8] sm:$0xff] %v2219
        %2267 = vst [vmem:[%s292 + $0xf0] sm:$0xff] %v2032
        %2268 = vst [vmem:[%s292 + $0xf8] sm:$0xff] %v2221
        %2269 = vst [vmem:[%s292 + $0x100] sm:$0xff] %v2035
        %2270 = vst [vmem:[%s292 + $0x108] sm:$0xff] %v2224
        %2271 = vst [vmem:[%s292 + $0x110] sm:$0xff] %v2037
        %2272 = vst [vmem:[%s292 + $0x118] sm:$0xff] %v2226
        %2273 = vst [vmem:[%s292 + $0x120] sm:$0xff] %v2040
        %2274 = vst [vmem:[%s292 + $0x128] sm:$0xff] %v2229
        %2275 = vst [vmem:[%s292 + $0x130] sm:$0xff] %v2042
        %2276 = vst [vmem:[%s292 + $0x138] sm:$0xff] %v2231
        %2277 = vst [vmem:[%s292 + $0x140] sm:$0x3f] %v2045
        %2278 = vst [vmem:[%s292 + $0x148] sm:$0x3f] %v2234
        %v2279 = vld [vmem:[%s292] sm:$0xff]
        %v2280 = vld [vmem:[%s292 + $0x8] sm:$0xff]
        %v2281 = vld [vmem:[%s292 + $0x10] sm:$0xff]
        %v2282 = vld [vmem:[%s292 + $0x18] sm:$0xff]
        %v2283 = vld [vmem:[%s292 + $0x20] sm:$0xff]
        %v2284 = vld [vmem:[%s292 + $0x28] sm:$0xff]
        %v2285 = vld [vmem:[%s292 + $0x30] sm:$0xff]
        %v2286 = vld [vmem:[%s292 + $0x38] sm:$0xff]
        %v2287 = vld [vmem:[%s292 + $0x40] sm:$0xff]
        %v2288 = vld [vmem:[%s292 + $0x48] sm:$0xff]
        %v2289 = vld [vmem:[%s292 + $0x50] sm:$0xff]
        %v2290 = vld [vmem:[%s292 + $0x58] sm:$0xff]
        %v2291 = vld [vmem:[%s292 + $0x60] sm:$0xff]
        %v2292 = vld [vmem:[%s292 + $0x68] sm:$0xff]
        %v2293 = vld [vmem:[%s292 + $0x70] sm:$0xff]
        %v2294 = vld [vmem:[%s292 + $0x78] sm:$0xff]
        %v2295 = vld [vmem:[%s292 + $0x80] sm:$0xff]
        %v2296 = vld [vmem:[%s292 + $0x88] sm:$0xff]
        %v2297 = vld [vmem:[%s292 + $0x90] sm:$0xff]
        %v2298 = vld [vmem:[%s292 + $0x98] sm:$0xff]
        %v2299 = vld [vmem:[%s292 + $0xa0] sm:$0xff]
        %v2300 = vld [vmem:[%s292 + $0xa8] sm:$0xff]
        %v2301 = vld [vmem:[%s292 + $0xb0] sm:$0xff]
        %v2302 = vld [vmem:[%s292 + $0xb8] sm:$0xff]
        %v2303 = vld [vmem:[%s292 + $0xc0] sm:$0xff]
        %v2304 = vld [vmem:[%s292 + $0xc8] sm:$0xff]
        %v2305 = vld [vmem:[%s292 + $0xd0] sm:$0xff]
        %v2306 = vld [vmem:[%s292 + $0xd8] sm:$0xff]
        %v2307 = vld [vmem:[%s292 + $0xe0] sm:$0xff]
        %v2308 = vld [vmem:[%s292 + $0xe8] sm:$0xff]
        %v2309 = vld [vmem:[%s292 + $0xf0] sm:$0xff]
        %v2310 = vld [vmem:[%s292 + $0xf8] sm:$0xff]
        %v2311 = vld [vmem:[%s292 + $0x100] sm:$0xff]
        %v2312 = vld [vmem:[%s292 + $0x108] sm:$0xff]
        %v2313 = vld [vmem:[%s292 + $0x110] sm:$0xff]
        %v2314 = vld [vmem:[%s292 + $0x118] sm:$0xff]
        %v2315 = vld [vmem:[%s292 + $0x120] sm:$0xff]
        %v2316 = vld [vmem:[%s292 + $0x128] sm:$0xff]
        %v2317 = vld [vmem:[%s292 + $0x130] sm:$0xff]
        %v2318 = vld [vmem:[%s292 + $0x138] sm:$0xff]
        %v2319 = vld [vmem:[%s292 + $0x140] sm:$0x3f]
        %v2320 = vld [vmem:[%s292 + $0x148] sm:$0x3f]
        %v2363 = vunpack.c.l.b16 %v624
        %v2364 = vunpack.c.h.b16 %v624
        %v2365 = vunpack.c.l.b16 %v625
        %v2366 = vunpack.c.l.b16 %v626
        %v2367 = vunpack.c.h.b16 %v626
        %v2368 = vunpack.c.l.b16 %v627
        %v2369 = vunpack.c.l.b16 %v628
        %v2370 = vunpack.c.h.b16 %v628
        %v2371 = vunpack.c.l.b16 %v629
        %v2372 = vunpack.c.l.b16 %v630
        %v2373 = vunpack.c.h.b16 %v630
        %v2374 = vunpack.c.l.b16 %v631
        %v2375 = vunpack.c.l.b16 %v632
        %v2376 = vunpack.c.h.b16 %v632
        %v2377 = vunpack.c.l.b16 %v633
        %v2378 = vunpack.c.l.b16 %v634
        %v2379 = vunpack.c.h.b16 %v634
        %v2380 = vunpack.c.l.b16 %v635
        %v2381 = vunpack.c.l.b16 %v636
        %v2382 = vunpack.c.h.b16 %v636
        %v2383 = vunpack.c.l.b16 %v637
        %v2384 = vunpack.c.l.b16 %v638
        %v2385 = vunpack.c.h.b16 %v638
        %v2386 = vunpack.c.l.b16 %v639
        %v2387 = vunpack.c.l.b16 %v640
        %v2388 = vunpack.c.h.b16 %v640
        %v2389 = vunpack.c.l.b16 %v641
        %v2390 = vunpack.c.l.b16 %v642
        %v2391 = vunpack.c.h.b16 %v642
        %v2392 = vunpack.c.l.b16 %v643
        %v2393 = vunpack.c.l.b16 %v644
        %v2394 = vunpack.c.h.b16 %v644
        %v2395 = vunpack.c.l.b16 %v645
        %v2396 = vunpack.c.l.b16 %v646
        %v2397 = vunpack.c.h.b16 %v646
        %v2398 = vunpack.c.l.b16 %v647
        %v2399 = vunpack.c.l.b16 %v648
        %v2400 = vunpack.c.h.b16 %v648
        %v2401 = vunpack.c.l.b16 %v649
        %v2402 = vunpack.c.l.b16 %v650
        %v2403 = vunpack.c.h.b16 %v650
        %v2404 = vunpack.c.l.b16 %v651
        %v2405 = vunpack.c.l.b16 %v652
        %v2406 = vunpack.c.h.b16 %v652
        %v2407 = vunpack.c.l.b16 %v653
        %v2408 = vunpack.c.l.b16 %v654
        %v2409 = vunpack.c.h.b16 %v654
        %v2410 = vunpack.c.l.b16 %v655
        %v2411 = vunpack.c.l.b16 %v656
        %v2412 = vunpack.c.h.b16 %v656
        %v2413 = vunpack.c.l.b16 %v657
        %v2414 = vunpack.c.l.b16 %v658
        %v2415 = vunpack.c.h.b16 %v658
        %v2416 = vunpack.c.l.b16 %v659
        %v2417 = vunpack.c.l.b16 %v660
        %v2418 = vunpack.c.h.b16 %v660
        %v2419 = vunpack.c.l.b16 %v661
        %v2420 = vunpack.c.l.b16 %v662
        %v2421 = vunpack.c.h.b16 %v662
        %v2422 = vunpack.c.l.b16 %v663
        %v2423 = vunpack.c.l.b16 %v664
        %v2424 = vunpack.c.h.b16 %v664
        %v2425 = vunpack.c.l.b16 %v665
        %v2426 = vpack.c.b16 %v2366, %v2363
        %v2427 = vpack.c.b16 %v2367, %v2364
        %v2428 = vpack.c.b16 %v2368, %v2365
        %v2429 = vpack.c.b16 %v2372, %v2369
        %v2430 = vpack.c.b16 %v2373, %v2370
        %v2431 = vpack.c.b16 %v2374, %v2371
        %v2432 = vpack.c.b16 %v2378, %v2375
        %v2433 = vpack.c.b16 %v2379, %v2376
        %v2434 = vpack.c.b16 %v2380, %v2377
        %v2435 = vpack.c.b16 %v2384, %v2381
        %v2436 = vpack.c.b16 %v2385, %v2382
        %v2437 = vpack.c.b16 %v2386, %v2383
        %v2438 = vpack.c.b16 %v2390, %v2387
        %v2439 = vpack.c.b16 %v2391, %v2388
        %v2440 = vpack.c.b16 %v2392, %v2389
        %v2441 = vpack.c.b16 %v2396, %v2393
        %v2442 = vpack.c.b16 %v2397, %v2394
        %v2443 = vpack.c.b16 %v2398, %v2395
        %v2444 = vpack.c.b16 %v2402, %v2399
        %v2445 = vpack.c.b16 %v2403, %v2400
        %v2446 = vpack.c.b16 %v2404, %v2401
        %v2447 = vpack.c.b16 %v2408, %v2405
        %v2448 = vpack.c.b16 %v2409, %v2406
        %v2449 = vpack.c.b16 %v2410, %v2407
        %v2450 = vpack.c.b16 %v2414, %v2411
        %v2451 = vpack.c.b16 %v2415, %v2412
        %v2452 = vpack.c.b16 %v2416, %v2413
        %v2453 = vpack.c.b16 %v2420, %v2417
        %v2454 = vpack.c.b16 %v2421, %v2418
        %v2455 = vpack.c.b16 %v2422, %v2419
        %v2456 = vpack.c.b16 %v2423, %v2423
        %v2457 = vpack.c.b16 %v2424, %v2424
        %v2458 = vpack.c.b16 %v2425, %v2425
        %v2521 = vunpack.c.l.b16 %v1225
        %v2522 = vunpack.c.h.b16 %v1225
        %v2523 = vunpack.c.l.b16 %v1226
        %v2524 = vunpack.c.h.b16 %v1226
        %v2525 = vunpack.c.l.b16 %v1227
        %v2526 = vunpack.c.h.b16 %v1227
        %v2527 = vunpack.c.l.b16 %v1228
        %v2528 = vunpack.c.h.b16 %v1228
        %v2529 = vunpack.c.l.b16 %v1229
        %v2530 = vunpack.c.h.b16 %v1229
        %v2531 = vunpack.c.l.b16 %v1230
        %v2532 = vunpack.c.h.b16 %v1230
        %v2533 = vunpack.c.l.b16 %v1231
        %v2534 = vunpack.c.h.b16 %v1231
        %v2535 = vunpack.c.l.b16 %v1232
        %v2536 = vunpack.c.h.b16 %v1232
        %v2537 = vunpack.c.l.b16 %v1233
        %v2538 = vunpack.c.h.b16 %v1233
        %v2539 = vunpack.c.l.b16 %v1234
        %v2540 = vunpack.c.h.b16 %v1234
        %v2541 = vunpack.c.l.b16 %v1235
        %v2542 = vunpack.c.h.b16 %v1235
        %v2543 = vunpack.c.l.b16 %v1236
        %v2544 = vunpack.c.h.b16 %v1236
        %v2545 = vunpack.c.l.b16 %v1237
        %v2546 = vunpack.c.h.b16 %v1237
        %v2547 = vunpack.c.l.b16 %v1238
        %v2548 = vunpack.c.h.b16 %v1238
        %v2549 = vunpack.c.l.b16 %v1239
        %v2550 = vunpack.c.h.b16 %v1239
        %v2551 = vunpack.c.l.b16 %v1240
        %v2552 = vunpack.c.h.b16 %v1240
        %v2553 = vunpack.c.l.b16 %v1241
        %v2554 = vunpack.c.h.b16 %v1241
        %v2555 = vunpack.c.l.b16 %v1242
        %v2556 = vunpack.c.h.b16 %v1242
        %v2557 = vunpack.c.l.b16 %v1243
        %v2558 = vunpack.c.h.b16 %v1243
        %v2559 = vunpack.c.l.b16 %v1244
        %v2560 = vunpack.c.h.b16 %v1244
        %v2561 = vunpack.c.l.b16 %v1245
        %v2562 = vunpack.c.h.b16 %v1245
        %v2563 = vunpack.c.l.b16 %v1246
        %v2564 = vunpack.c.h.b16 %v1246
        %v2565 = vunpack.c.l.b16 %v1247
        %v2566 = vunpack.c.h.b16 %v1247
        %v2567 = vunpack.c.l.b16 %v1248
        %v2568 = vunpack.c.h.b16 %v1248
        %v2569 = vunpack.c.l.b16 %v1249
        %v2570 = vunpack.c.h.b16 %v1249
        %v2571 = vunpack.c.l.b16 %v1250
        %v2572 = vunpack.c.h.b16 %v1250
        %v2573 = vunpack.c.l.b16 %v1251
        %v2574 = vunpack.c.h.b16 %v1251
        %v2575 = vunpack.c.l.b16 %v1252
        %v2576 = vunpack.c.h.b16 %v1252
        %v2577 = vunpack.c.l.b16 %v1253
        %v2578 = vunpack.c.h.b16 %v1253
        %v2579 = vunpack.c.l.b16 %v1254
        %v2580 = vunpack.c.h.b16 %v1254
        %v2581 = vunpack.c.l.b16 %v1255
        %v2582 = vunpack.c.h.b16 %v1255
        %v2583 = vunpack.c.l.b16 %v1256
        %v2584 = vunpack.c.h.b16 %v1256
        %v2585 = vunpack.c.l.b16 %v1257
        %v2586 = vunpack.c.h.b16 %v1257
        %v2587 = vunpack.c.l.b16 %v1258
        %v2588 = vunpack.c.h.b16 %v1258
        %v2589 = vunpack.c.l.b16 %v1259
        %v2590 = vunpack.c.h.b16 %v1259
        %v2591 = vunpack.c.l.b16 %v1260
        %v2592 = vunpack.c.h.b16 %v1260
        %v2593 = vunpack.c.l.b16 %v1261
        %v2594 = vunpack.c.h.b16 %v1261
        %v2595 = vunpack.c.l.b16 %v1262
        %v2596 = vunpack.c.h.b16 %v1262
        %v2597 = vunpack.c.l.b16 %v1263
        %v2598 = vunpack.c.h.b16 %v1263
        %v2599 = vunpack.c.l.b16 %v1264
        %v2600 = vunpack.c.h.b16 %v1264
        %v2601 = vpack.c.b16 %v2523, %v2521
        %v2602 = vpack.c.b16 %v2524, %v2522
        %v2603 = vpack.c.b16 %v2527, %v2525
        %v2604 = vpack.c.b16 %v2528, %v2526
        %v2605 = vpack.c.b16 %v2531, %v2529
        %v2606 = vpack.c.b16 %v2532, %v2530
        %v2607 = vpack.c.b16 %v2535, %v2533
        %v2608 = vpack.c.b16 %v2536, %v2534
        %v2609 = vpack.c.b16 %v2539, %v2537
        %v2610 = vpack.c.b16 %v2540, %v2538
        %v2611 = vpack.c.b16 %v2543, %v2541
        %v2612 = vpack.c.b16 %v2544, %v2542
        %v2613 = vpack.c.b16 %v2547, %v2545
        %v2614 = vpack.c.b16 %v2548, %v2546
        %v2615 = vpack.c.b16 %v2551, %v2549
        %v2616 = vpack.c.b16 %v2552, %v2550
        %v2617 = vpack.c.b16 %v2555, %v2553
        %v2618 = vpack.c.b16 %v2556, %v2554
        %v2619 = vpack.c.b16 %v2559, %v2557
        %v2620 = vpack.c.b16 %v2560, %v2558
        %v2621 = vpack.c.b16 %v2563, %v2561
        %v2622 = vpack.c.b16 %v2564, %v2562
        %v2623 = vpack.c.b16 %v2567, %v2565
        %v2624 = vpack.c.b16 %v2568, %v2566
        %v2625 = vpack.c.b16 %v2571, %v2569
        %v2626 = vpack.c.b16 %v2572, %v2570
        %v2627 = vpack.c.b16 %v2575, %v2573
        %v2628 = vpack.c.b16 %v2576, %v2574
        %v2629 = vpack.c.b16 %v2579, %v2577
        %v2630 = vpack.c.b16 %v2580, %v2578
        %v2631 = vpack.c.b16 %v2583, %v2581
        %v2632 = vpack.c.b16 %v2584, %v2582
        %v2633 = vpack.c.b16 %v2587, %v2585
        %v2634 = vpack.c.b16 %v2588, %v2586
        %v2635 = vpack.c.b16 %v2591, %v2589
        %v2636 = vpack.c.b16 %v2592, %v2590
        %v2637 = vpack.c.b16 %v2595, %v2593
        %v2638 = vpack.c.b16 %v2596, %v2594
        %v2639 = vpack.c.b16 %v2599, %v2597
        %v2640 = vpack.c.b16 %v2600, %v2598
        %v2682 = vsel %vm1825, %v2428, 0
        %v2685 = vsel %vm1825, %v2431, 0
        %v2688 = vsel %vm1825, %v2434, 0
        %v2691 = vsel %vm1825, %v2437, 0
        %v2694 = vsel %vm1825, %v2440, 0
        %v2697 = vsel %vm1825, %v2443, 0
        %v2700 = vsel %vm1825, %v2446, 0
        %v2703 = vsel %vm1825, %v2449, 0
        %v2706 = vsel %vm1825, %v2452, 0
        %v2709 = vsel %vm1825, %v2455, 0
        %v2712 = vsel %vm1825, %v2458, 0
        %2714 = vmatpush.bf16.msra.mxu0 %v2615
        %2715 = vmatpush.bf16.msra.mxu0 %v2613
        %2716 = vmatpush.bf16.msra.mxu0 %v2611
        %2717 = vmatpush.bf16.msra.mxu0 %v2609
        %2718 = vmatpush.bf16.msra.mxu0 %v2607
        %2719 = vmatpush.bf16.msra.mxu0 %v2605
        %2720 = vmatpush.bf16.msra.mxu0 %v2603
        %2721 = vmatpush.bf16.msra.mxu0 %v2601
        %2722 = vmatmul.bf16.gmra.mxu0 %v2426
        %v2723 = vpop.f32.mrf.mxu0
        %v2724 = vadd.f32 0.0, %v2723
        %v2725 = vpop.f32.mrf.mxu0
        %v2726 = vadd.f32 0.0, %v2725
        %2727 = vmatmul.bf16.gmra.mxu0 %v2429
        %v2728 = vpop.f32.mrf.mxu0
        %v2729 = vadd.f32 0.0, %v2728
        %v2730 = vpop.f32.mrf.mxu0
        %v2731 = vadd.f32 0.0, %v2730
        %2732 = vmatmul.bf16.gmra.mxu0 %v2432
        %v2733 = vpop.f32.mrf.mxu0
        %v2734 = vadd.f32 0.0, %v2733
        %v2735 = vpop.f32.mrf.mxu0
        %v2736 = vadd.f32 0.0, %v2735
        %2737 = vmatmul.bf16.gmra.mxu0 %v2435
        %v2738 = vpop.f32.mrf.mxu0
        %v2739 = vadd.f32 0.0, %v2738
        %v2740 = vpop.f32.mrf.mxu0
        %v2741 = vadd.f32 0.0, %v2740
        %2742 = vmatmul.bf16.gmra.mxu0 %v2438
        %v2743 = vpop.f32.mrf.mxu0
        %v2744 = vadd.f32 0.0, %v2743
        %v2745 = vpop.f32.mrf.mxu0
        %v2746 = vadd.f32 0.0, %v2745
        %2747 = vmatmul.bf16.gmra.mxu0 %v2441
        %v2748 = vpop.f32.mrf.mxu0
        %v2749 = vadd.f32 0.0, %v2748
        %v2750 = vpop.f32.mrf.mxu0
        %v2751 = vadd.f32 0.0, %v2750
        %2752 = vmatmul.bf16.gmra.mxu0 %v2444
        %v2753 = vpop.f32.mrf.mxu0
        %v2754 = vadd.f32 0.0, %v2753
        %v2755 = vpop.f32.mrf.mxu0
        %v2756 = vadd.f32 0.0, %v2755
        %2757 = vmatmul.bf16.gmra.mxu0 %v2447
        %v2758 = vpop.f32.mrf.mxu0
        %v2759 = vadd.f32 0.0, %v2758
        %v2760 = vpop.f32.mrf.mxu0
        %v2761 = vadd.f32 0.0, %v2760
        %2762 = vmatmul.bf16.gmra.mxu0 %v2450
        %v2763 = vpop.f32.mrf.mxu0
        %v2764 = vadd.f32 0.0, %v2763
        %v2765 = vpop.f32.mrf.mxu0
        %v2766 = vadd.f32 0.0, %v2765
        %2767 = vmatmul.bf16.gmra.mxu0 %v2453
        %v2768 = vpop.f32.mrf.mxu0
        %v2769 = vadd.f32 0.0, %v2768
        %v2770 = vpop.f32.mrf.mxu0
        %v2771 = vadd.f32 0.0, %v2770
        %2772 = vmatmul.bf16.gmra.mxu0 %v2456
        %v2773 = vpop.f32.mrf.mxu0
        %v2774 = vadd.f32 0.0, %v2773
        %v2775 = vpop.f32.mrf.mxu0
        %2776 = vdwg.mxu0
        %2777 = vmatpush.bf16.msra.mxu0 %v2631
        %2778 = vmatpush.bf16.msra.mxu0 %v2629
        %2779 = vmatpush.bf16.msra.mxu0 %v2627
        %2780 = vmatpush.bf16.msra.mxu0 %v2625
        %2781 = vmatpush.bf16.msra.mxu0 %v2623
        %2782 = vmatpush.bf16.msra.mxu0 %v2621
        %2783 = vmatpush.bf16.msra.mxu0 %v2619
        %2784 = vmatpush.bf16.msra.mxu0 %v2617
        %2785 = vmatmul.bf16.gmra.mxu0 %v2427
        %v2786 = vpop.f32.mrf.mxu0
        %v2787 = vadd.f32 %v2724, %v2786
        %v2788 = vpop.f32.mrf.mxu0
        %v2789 = vadd.f32 %v2726, %v2788
        %2790 = vmatmul.bf16.gmra.mxu0 %v2430
        %v2791 = vpop.f32.mrf.mxu0
        %v2792 = vadd.f32 %v2729, %v2791
        %v2793 = vpop.f32.mrf.mxu0
        %v2794 = vadd.f32 %v2731, %v2793
        %2795 = vmatmul.bf16.gmra.mxu0 %v2433
        %v2796 = vpop.f32.mrf.mxu0
        %v2797 = vadd.f32 %v2734, %v2796
        %v2798 = vpop.f32.mrf.mxu0
        %v2799 = vadd.f32 %v2736, %v2798
        %2800 = vmatmul.bf16.gmra.mxu0 %v2436
        %v2801 = vpop.f32.mrf.mxu0
        %v2802 = vadd.f32 %v2739, %v2801
        %v2803 = vpop.f32.mrf.mxu0
        %v2804 = vadd.f32 %v2741, %v2803
        %2805 = vmatmul.bf16.gmra.mxu0 %v2439
        %v2806 = vpop.f32.mrf.mxu0
        %v2807 = vadd.f32 %v2744, %v2806
        %v2808 = vpop.f32.mrf.mxu0
        %v2809 = vadd.f32 %v2746, %v2808
        %2810 = vmatmul.bf16.gmra.mxu0 %v2442
        %v2811 = vpop.f32.mrf.mxu0
        %v2812 = vadd.f32 %v2749, %v2811
        %v2813 = vpop.f32.mrf.mxu0
        %v2814 = vadd.f32 %v2751, %v2813
        %2815 = vmatmul.bf16.gmra.mxu0 %v2445
        %v2816 = vpop.f32.mrf.mxu0
        %v2817 = vadd.f32 %v2754, %v2816
        %v2818 = vpop.f32.mrf.mxu0
        %v2819 = vadd.f32 %v2756, %v2818
        %2820 = vmatmul.bf16.gmra.mxu0 %v2448
        %v2821 = vpop.f32.mrf.mxu0
        %v2822 = vadd.f32 %v2759, %v2821
        %v2823 = vpop.f32.mrf.mxu0
        %v2824 = vadd.f32 %v2761, %v2823
        %2825 = vmatmul.bf16.gmra.mxu0 %v2451
        %v2826 = vpop.f32.mrf.mxu0
        %v2827 = vadd.f32 %v2764, %v2826
        %v2828 = vpop.f32.mrf.mxu0
        %v2829 = vadd.f32 %v2766, %v2828
        %2830 = vmatmul.bf16.gmra.mxu0 %v2454
        %v2831 = vpop.f32.mrf.mxu0
        %v2832 = vadd.f32 %v2769, %v2831
        %v2833 = vpop.f32.mrf.mxu0
        %v2834 = vadd.f32 %v2771, %v2833
        %2835 = vmatmul.bf16.gmra.mxu0 %v2457
        %v2836 = vpop.f32.mrf.mxu0
        %v2837 = vadd.f32 %v2774, %v2836
        %v2838 = vpop.f32.mrf.mxu0
        %2839 = vdwg.mxu0
        %2840 = vmatpush.bf16.msra.mxu0 0
        %2841 = vmatpush.bf16.msra.mxu0 0
        %2842 = vmatpush.bf16.msra.mxu0 0
        %2843 = vmatpush.bf16.msra.mxu0 0
        %2844 = vmatpush.bf16.msra.mxu0 %v2639
        %2845 = vmatpush.bf16.msra.mxu0 %v2637
        %2846 = vmatpush.bf16.msra.mxu0 %v2635
        %2847 = vmatpush.bf16.msra.mxu0 %v2633
        %2848 = vmatmul.bf16.gmra.mxu0 %v2682
        %v2849 = vpop.f32.mrf.mxu0
        %v2850 = vadd.f32 %v2787, %v2849
        %v2851 = vpop.f32.mrf.mxu0
        %v2852 = vadd.f32 %v2789, %v2851
        %2853 = vmatmul.bf16.gmra.mxu0 %v2685
        %v2854 = vpop.f32.mrf.mxu0
        %v2855 = vadd.f32 %v2792, %v2854
        %v2856 = vpop.f32.mrf.mxu0
        %v2857 = vadd.f32 %v2794, %v2856
        %2858 = vmatmul.bf16.gmra.mxu0 %v2688
        %v2859 = vpop.f32.mrf.mxu0
        %v2860 = vadd.f32 %v2797, %v2859
        %v2861 = vpop.f32.mrf.mxu0
        %v2862 = vadd.f32 %v2799, %v2861
        %2863 = vmatmul.bf16.gmra.mxu0 %v2691
        %v2864 = vpop.f32.mrf.mxu0
        %v2865 = vadd.f32 %v2802, %v2864
        %v2866 = vpop.f32.mrf.mxu0
        %v2867 = vadd.f32 %v2804, %v2866
        %2868 = vmatmul.bf16.gmra.mxu0 %v2694
        %v2869 = vpop.f32.mrf.mxu0
        %v2870 = vadd.f32 %v2807, %v2869
        %v2871 = vpop.f32.mrf.mxu0
        %v2872 = vadd.f32 %v2809, %v2871
        %2873 = vmatmul.bf16.gmra.mxu0 %v2697
        %v2874 = vpop.f32.mrf.mxu0
        %v2875 = vadd.f32 %v2812, %v2874
        %v2876 = vpop.f32.mrf.mxu0
        %v2877 = vadd.f32 %v2814, %v2876
        %2878 = vmatmul.bf16.gmra.mxu0 %v2700
        %v2879 = vpop.f32.mrf.mxu0
        %v2880 = vadd.f32 %v2817, %v2879
        %v2881 = vpop.f32.mrf.mxu0
        %v2882 = vadd.f32 %v2819, %v2881
        %2883 = vmatmul.bf16.gmra.mxu0 %v2703
        %v2884 = vpop.f32.mrf.mxu0
        %v2885 = vadd.f32 %v2822, %v2884
        %v2886 = vpop.f32.mrf.mxu0
        %v2887 = vadd.f32 %v2824, %v2886
        %2888 = vmatmul.bf16.gmra.mxu0 %v2706
        %v2889 = vpop.f32.mrf.mxu0
        %v2890 = vadd.f32 %v2827, %v2889
        %v2891 = vpop.f32.mrf.mxu0
        %v2892 = vadd.f32 %v2829, %v2891
        %2893 = vmatmul.bf16.gmra.mxu0 %v2709
        %v2894 = vpop.f32.mrf.mxu0
        %v2895 = vadd.f32 %v2832, %v2894
        %v2896 = vpop.f32.mrf.mxu0
        %v2897 = vadd.f32 %v2834, %v2896
        %2898 = vmatmul.bf16.gmra.mxu0 %v2712
        %v2899 = vpop.f32.mrf.mxu0
        %v2900 = vadd.f32 %v2837, %v2899
        %v2901 = vpop.f32.mrf.mxu0
        %2902 = vdwg.mxu0
        %2903 = vmatpush.bf16.msra.mxu0 %v2616
        %2904 = vmatpush.bf16.msra.mxu0 %v2614
        %2905 = vmatpush.bf16.msra.mxu0 %v2612
        %2906 = vmatpush.bf16.msra.mxu0 %v2610
        %2907 = vmatpush.bf16.msra.mxu0 %v2608
        %2908 = vmatpush.bf16.msra.mxu0 %v2606
        %2909 = vmatpush.bf16.msra.mxu0 %v2604
        %2910 = vmatpush.bf16.msra.mxu0 %v2602
        %2911 = vmatmul.bf16.gmra.mxu0 %v2426
        %v2912 = vpop.f32.mrf.mxu0
        %v2913 = vadd.f32 0.0, %v2912
        %v2914 = vpop.f32.mrf.mxu0
        %v2915 = vadd.f32 0.0, %v2914
        %2916 = vmatmul.bf16.gmra.mxu0 %v2429
        %v2917 = vpop.f32.mrf.mxu0
        %v2918 = vadd.f32 0.0, %v2917
        %v2919 = vpop.f32.mrf.mxu0
        %v2920 = vadd.f32 0.0, %v2919
        %2921 = vmatmul.bf16.gmra.mxu0 %v2432
        %v2922 = vpop.f32.mrf.mxu0
        %v2923 = vadd.f32 0.0, %v2922
        %v2924 = vpop.f32.mrf.mxu0
        %v2925 = vadd.f32 0.0, %v2924
        %2926 = vmatmul.bf16.gmra.mxu0 %v2435
        %v2927 = vpop.f32.mrf.mxu0
        %v2928 = vadd.f32 0.0, %v2927
        %v2929 = vpop.f32.mrf.mxu0
        %v2930 = vadd.f32 0.0, %v2929
        %2931 = vmatmul.bf16.gmra.mxu0 %v2438
        %v2932 = vpop.f32.mrf.mxu0
        %v2933 = vadd.f32 0.0, %v2932
        %v2934 = vpop.f32.mrf.mxu0
        %v2935 = vadd.f32 0.0, %v2934
        %2936 = vmatmul.bf16.gmra.mxu0 %v2441
        %v2937 = vpop.f32.mrf.mxu0
        %v2938 = vadd.f32 0.0, %v2937
        %v2939 = vpop.f32.mrf.mxu0
        %v2940 = vadd.f32 0.0, %v2939
        %2941 = vmatmul.bf16.gmra.mxu0 %v2444
        %v2942 = vpop.f32.mrf.mxu0
        %v2943 = vadd.f32 0.0, %v2942
        %v2944 = vpop.f32.mrf.mxu0
        %v2945 = vadd.f32 0.0, %v2944
        %2946 = vmatmul.bf16.gmra.mxu0 %v2447
        %v2947 = vpop.f32.mrf.mxu0
        %v2948 = vadd.f32 0.0, %v2947
        %v2949 = vpop.f32.mrf.mxu0
        %v2950 = vadd.f32 0.0, %v2949
        %2951 = vmatmul.bf16.gmra.mxu0 %v2450
        %v2952 = vpop.f32.mrf.mxu0
        %v2953 = vadd.f32 0.0, %v2952
        %v2954 = vpop.f32.mrf.mxu0
        %v2955 = vadd.f32 0.0, %v2954
        %2956 = vmatmul.bf16.gmra.mxu0 %v2453
        %v2957 = vpop.f32.mrf.mxu0
        %v2958 = vadd.f32 0.0, %v2957
        %v2959 = vpop.f32.mrf.mxu0
        %v2960 = vadd.f32 0.0, %v2959
        %2961 = vmatmul.bf16.gmra.mxu0 %v2456
        %v2962 = vpop.f32.mrf.mxu0
        %v2963 = vadd.f32 0.0, %v2962
        %v2964 = vpop.f32.mrf.mxu0
        %2965 = vdwg.mxu0
        %2966 = vmatpush.bf16.msra.mxu0 %v2632
        %2967 = vmatpush.bf16.msra.mxu0 %v2630
        %2968 = vmatpush.bf16.msra.mxu0 %v2628
        %2969 = vmatpush.bf16.msra.mxu0 %v2626
        %2970 = vmatpush.bf16.msra.mxu0 %v2624
        %2971 = vmatpush.bf16.msra.mxu0 %v2622
        %2972 = vmatpush.bf16.msra.mxu0 %v2620
        %2973 = vmatpush.bf16.msra.mxu0 %v2618
        %2974 = vmatmul.bf16.gmra.mxu0 %v2427
        %v2975 = vpop.f32.mrf.mxu0
        %v2976 = vadd.f32 %v2913, %v2975
        %v2977 = vpop.f32.mrf.mxu0
        %v2978 = vadd.f32 %v2915, %v2977
        %2979 = vmatmul.bf16.gmra.mxu0 %v2430
        %v2980 = vpop.f32.mrf.mxu0
        %v2981 = vadd.f32 %v2918, %v2980
        %v2982 = vpop.f32.mrf.mxu0
        %v2983 = vadd.f32 %v2920, %v2982
        %2984 = vmatmul.bf16.gmra.mxu0 %v2433
        %v2985 = vpop.f32.mrf.mxu0
        %v2986 = vadd.f32 %v2923, %v2985
        %v2987 = vpop.f32.mrf.mxu0
        %v2988 = vadd.f32 %v2925, %v2987
        %2989 = vmatmul.bf16.gmra.mxu0 %v2436
        %v2990 = vpop.f32.mrf.mxu0
        %v2991 = vadd.f32 %v2928, %v2990
        %v2992 = vpop.f32.mrf.mxu0
        %v2993 = vadd.f32 %v2930, %v2992
        %2994 = vmatmul.bf16.gmra.mxu0 %v2439
        %v2995 = vpop.f32.mrf.mxu0
        %v2996 = vadd.f32 %v2933, %v2995
        %v2997 = vpop.f32.mrf.mxu0
        %v2998 = vadd.f32 %v2935, %v2997
        %2999 = vmatmul.bf16.gmra.mxu0 %v2442
        %v3000 = vpop.f32.mrf.mxu0
        %v3001 = vadd.f32 %v2938, %v3000
        %v3002 = vpop.f32.mrf.mxu0
        %v3003 = vadd.f32 %v2940, %v3002
        %3004 = vmatmul.bf16.gmra.mxu0 %v2445
        %v3005 = vpop.f32.mrf.mxu0
        %v3006 = vadd.f32 %v2943, %v3005
        %v3007 = vpop.f32.mrf.mxu0
        %v3008 = vadd.f32 %v2945, %v3007
        %3009 = vmatmul.bf16.gmra.mxu0 %v2448
        %v3010 = vpop.f32.mrf.mxu0
        %v3011 = vadd.f32 %v2948, %v3010
        %v3012 = vpop.f32.mrf.mxu0
        %v3013 = vadd.f32 %v2950, %v3012
        %3014 = vmatmul.bf16.gmra.mxu0 %v2451
        %v3015 = vpop.f32.mrf.mxu0
        %v3016 = vadd.f32 %v2953, %v3015
        %v3017 = vpop.f32.mrf.mxu0
        %v3018 = vadd.f32 %v2955, %v3017
        %3019 = vmatmul.bf16.gmra.mxu0 %v2454
        %v3020 = vpop.f32.mrf.mxu0
        %v3021 = vadd.f32 %v2958, %v3020
        %v3022 = vpop.f32.mrf.mxu0
        %v3023 = vadd.f32 %v2960, %v3022
        %3024 = vmatmul.bf16.gmra.mxu0 %v2457
        %v3025 = vpop.f32.mrf.mxu0
        %v3026 = vadd.f32 %v2963, %v3025
        %v3027 = vpop.f32.mrf.mxu0
        %3028 = vdwg.mxu0
        %3029 = vmatpush.bf16.msra.mxu0 0
        %3030 = vmatpush.bf16.msra.mxu0 0
        %3031 = vmatpush.bf16.msra.mxu0 0
        %3032 = vmatpush.bf16.msra.mxu0 0
        %3033 = vmatpush.bf16.msra.mxu0 %v2640
        %3034 = vmatpush.bf16.msra.mxu0 %v2638
        %3035 = vmatpush.bf16.msra.mxu0 %v2636
        %3036 = vmatpush.bf16.msra.mxu0 %v2634
        %3037 = vmatmul.bf16.gmra.mxu0 %v2682
        %v3038 = vpop.f32.mrf.mxu0
        %v3039 = vadd.f32 %v2976, %v3038
        %v3040 = vpop.f32.mrf.mxu0
        %v3041 = vadd.f32 %v2978, %v3040
        %3042 = vmatmul.bf16.gmra.mxu0 %v2685
        %v3043 = vpop.f32.mrf.mxu0
        %v3044 = vadd.f32 %v2981, %v3043
        %v3045 = vpop.f32.mrf.mxu0
        %v3046 = vadd.f32 %v2983, %v3045
        %3047 = vmatmul.bf16.gmra.mxu0 %v2688
        %v3048 = vpop.f32.mrf.mxu0
        %v3049 = vadd.f32 %v2986, %v3048
        %v3050 = vpop.f32.mrf.mxu0
        %v3051 = vadd.f32 %v2988, %v3050
        %3052 = vmatmul.bf16.gmra.mxu0 %v2691
        %v3053 = vpop.f32.mrf.mxu0
        %v3054 = vadd.f32 %v2991, %v3053
        %v3055 = vpop.f32.mrf.mxu0
        %v3056 = vadd.f32 %v2993, %v3055
        %3057 = vmatmul.bf16.gmra.mxu0 %v2694
        %v3058 = vpop.f32.mrf.mxu0
        %v3059 = vadd.f32 %v2996, %v3058
        %v3060 = vpop.f32.mrf.mxu0
        %v3061 = vadd.f32 %v2998, %v3060
        %3062 = vmatmul.bf16.gmra.mxu0 %v2697
        %v3063 = vpop.f32.mrf.mxu0
        %v3064 = vadd.f32 %v3001, %v3063
        %v3065 = vpop.f32.mrf.mxu0
        %v3066 = vadd.f32 %v3003, %v3065
        %3067 = vmatmul.bf16.gmra.mxu0 %v2700
        %v3068 = vpop.f32.mrf.mxu0
        %v3069 = vadd.f32 %v3006, %v3068
        %v3070 = vpop.f32.mrf.mxu0
        %v3071 = vadd.f32 %v3008, %v3070
        %3072 = vmatmul.bf16.gmra.mxu0 %v2703
        %v3073 = vpop.f32.mrf.mxu0
        %v3074 = vadd.f32 %v3011, %v3073
        %v3075 = vpop.f32.mrf.mxu0
        %v3076 = vadd.f32 %v3013, %v3075
        %3077 = vmatmul.bf16.gmra.mxu0 %v2706
        %v3078 = vpop.f32.mrf.mxu0
        %v3079 = vadd.f32 %v3016, %v3078
        %v3080 = vpop.f32.mrf.mxu0
        %v3081 = vadd.f32 %v3018, %v3080
        %3082 = vmatmul.bf16.gmra.mxu0 %v2709
        %v3083 = vpop.f32.mrf.mxu0
        %v3084 = vadd.f32 %v3021, %v3083
        %v3085 = vpop.f32.mrf.mxu0
        %v3086 = vadd.f32 %v3023, %v3085
        %3087 = vmatmul.bf16.gmra.mxu0 %v2712
        %v3088 = vpop.f32.mrf.mxu0
        %v3089 = vadd.f32 %v3026, %v3088
        %v3090 = vpop.f32.mrf.mxu0
        %3091 = vdwg.mxu0
        %v3092 = vadd.f32 %v2279, %v2850
        %v3093 = vadd.f32 %v2280, %v3039
        %v3094 = vadd.f32 %v2281, %v2852
        %v3095 = vadd.f32 %v2282, %v3041
        %v3096 = vadd.f32 %v2283, %v2855
        %v3097 = vadd.f32 %v2284, %v3044
        %v3098 = vadd.f32 %v2285, %v2857
        %v3099 = vadd.f32 %v2286, %v3046
        %v3100 = vadd.f32 %v2287, %v2860
        %v3101 = vadd.f32 %v2288, %v3049
        %v3102 = vadd.f32 %v2289, %v2862
        %v3103 = vadd.f32 %v2290, %v3051
        %v3104 = vadd.f32 %v2291, %v2865
        %v3105 = vadd.f32 %v2292, %v3054
        %v3106 = vadd.f32 %v2293, %v2867
        %v3107 = vadd.f32 %v2294, %v3056
        %v3108 = vadd.f32 %v2295, %v2870
        %v3109 = vadd.f32 %v2296, %v3059
        %v3110 = vadd.f32 %v2297, %v2872
        %v3111 = vadd.f32 %v2298, %v3061
        %v3112 = vadd.f32 %v2299, %v2875
        %v3113 = vadd.f32 %v2300, %v3064
        %v3114 = vadd.f32 %v2301, %v2877
        %v3115 = vadd.f32 %v2302, %v3066
        %v3116 = vadd.f32 %v2303, %v2880
        %v3117 = vadd.f32 %v2304, %v3069
        %v3118 = vadd.f32 %v2305, %v2882
        %v3119 = vadd.f32 %v2306, %v3071
        %v3120 = vadd.f32 %v2307, %v2885
        %v3121 = vadd.f32 %v2308, %v3074
        %v3122 = vadd.f32 %v2309, %v2887
        %v3123 = vadd.f32 %v2310, %v3076
        %v3124 = vadd.f32 %v2311, %v2890
        %v3125 = vadd.f32 %v2312, %v3079
        %v3126 = vadd.f32 %v2313, %v2892
        %v3127 = vadd.f32 %v2314, %v3081
        %v3128 = vadd.f32 %v2315, %v2895
        %v3129 = vadd.f32 %v2316, %v3084
        %v3130 = vadd.f32 %v2317, %v2897
        %v3131 = vadd.f32 %v2318, %v3086
        %v3132 = vadd.f32 %v2319, %v2900
        %v3133 = vadd.f32 %v2320, %v3089
        %3134 = vst [vmem:[%s292] sm:$0xff] %v3092
        %3135 = vst [vmem:[%s292 + $0x8] sm:$0xff] %v3093
        %3136 = vst [vmem:[%s292 + $0x10] sm:$0xff] %v3094
        %3137 = vst [vmem:[%s292 + $0x18] sm:$0xff] %v3095
        %3138 = vst [vmem:[%s292 + $0x20] sm:$0xff] %v3096
        %3139 = vst [vmem:[%s292 + $0x28] sm:$0xff] %v3097
        %3140 = vst [vmem:[%s292 + $0x30] sm:$0xff] %v3098
        %3141 = vst [vmem:[%s292 + $0x38] sm:$0xff] %v3099
        %3142 = vst [vmem:[%s292 + $0x40] sm:$0xff] %v3100
        %3143 = vst [vmem:[%s292 + $0x48] sm:$0xff] %v3101
        %3144 = vst [vmem:[%s292 + $0x50] sm:$0xff] %v3102
        %3145 = vst [vmem:[%s292 + $0x58] sm:$0xff] %v3103
        %3146 = vst [vmem:[%s292 + $0x60] sm:$0xff] %v3104
        %3147 = vst [vmem:[%s292 + $0x68] sm:$0xff] %v3105
        %3148 = vst [vmem:[%s292 + $0x70] sm:$0xff] %v3106
        %3149 = vst [vmem:[%s292 + $0x78] sm:$0xff] %v3107
        %3150 = vst [vmem:[%s292 + $0x80] sm:$0xff] %v3108
        %3151 = vst [vmem:[%s292 + $0x88] sm:$0xff] %v3109
        %3152 = vst [vmem:[%s292 + $0x90] sm:$0xff] %v3110
        %3153 = vst [vmem:[%s292 + $0x98] sm:$0xff] %v3111
        %3154 = vst [vmem:[%s292 + $0xa0] sm:$0xff] %v3112
        %3155 = vst [vmem:[%s292 + $0xa8] sm:$0xff] %v3113
        %3156 = vst [vmem:[%s292 + $0xb0] sm:$0xff] %v3114
        %3157 = vst [vmem:[%s292 + $0xb8] sm:$0xff] %v3115
        %3158 = vst [vmem:[%s292 + $0xc0] sm:$0xff] %v3116
        %3159 = vst [vmem:[%s292 + $0xc8] sm:$0xff] %v3117
        %3160 = vst [vmem:[%s292 + $0xd0] sm:$0xff] %v3118
        %3161 = vst [vmem:[%s292 + $0xd8] sm:$0xff] %v3119
        %3162 = vst [vmem:[%s292 + $0xe0] sm:$0xff] %v3120
        %3163 = vst [vmem:[%s292 + $0xe8] sm:$0xff] %v3121
        %3164 = vst [vmem:[%s292 + $0xf0] sm:$0xff] %v3122
        %3165 = vst [vmem:[%s292 + $0xf8] sm:$0xff] %v3123
        %3166 = vst [vmem:[%s292 + $0x100] sm:$0xff] %v3124
        %3167 = vst [vmem:[%s292 + $0x108] sm:$0xff] %v3125
        %3168 = vst [vmem:[%s292 + $0x110] sm:$0xff] %v3126
        %3169 = vst [vmem:[%s292 + $0x118] sm:$0xff] %v3127
        %3170 = vst [vmem:[%s292 + $0x120] sm:$0xff] %v3128
        %3171 = vst [vmem:[%s292 + $0x128] sm:$0xff] %v3129
        %3172 = vst [vmem:[%s292 + $0x130] sm:$0xff] %v3130
        %3173 = vst [vmem:[%s292 + $0x138] sm:$0xff] %v3131
        %3174 = vst [vmem:[%s292 + $0x140] sm:$0x3f] %v3132
        %3175 = vst [vmem:[%s292 + $0x148] sm:$0x3f] %v3133
        %v3176 = vld [vmem:[%s292] sm:$0xff]
        %v3177 = vld [vmem:[%s292 + $0x8] sm:$0xff]
        %v3178 = vld [vmem:[%s292 + $0x10] sm:$0xff]
        %v3179 = vld [vmem:[%s292 + $0x18] sm:$0xff]
        %v3180 = vld [vmem:[%s292 + $0x20] sm:$0xff]
        %v3181 = vld [vmem:[%s292 + $0x28] sm:$0xff]
        %v3182 = vld [vmem:[%s292 + $0x30] sm:$0xff]
        %v3183 = vld [vmem:[%s292 + $0x38] sm:$0xff]
        %v3184 = vld [vmem:[%s292 + $0x40] sm:$0xff]
        %v3185 = vld [vmem:[%s292 + $0x48] sm:$0xff]
        %v3186 = vld [vmem:[%s292 + $0x50] sm:$0xff]
        %v3187 = vld [vmem:[%s292 + $0x58] sm:$0xff]
        %v3188 = vld [vmem:[%s292 + $0x60] sm:$0xff]
        %v3189 = vld [vmem:[%s292 + $0x68] sm:$0xff]
        %v3190 = vld [vmem:[%s292 + $0x70] sm:$0xff]
        %v3191 = vld [vmem:[%s292 + $0x78] sm:$0xff]
        %v3192 = vld [vmem:[%s292 + $0x80] sm:$0xff]
        %v3193 = vld [vmem:[%s292 + $0x88] sm:$0xff]
        %v3194 = vld [vmem:[%s292 + $0x90] sm:$0xff]
        %v3195 = vld [vmem:[%s292 + $0x98] sm:$0xff]
        %v3196 = vld [vmem:[%s292 + $0xa0] sm:$0xff]
        %v3197 = vld [vmem:[%s292 + $0xa8] sm:$0xff]
        %v3198 = vld [vmem:[%s292 + $0xb0] sm:$0xff]
        %v3199 = vld [vmem:[%s292 + $0xb8] sm:$0xff]
        %v3200 = vld [vmem:[%s292 + $0xc0] sm:$0xff]
        %v3201 = vld [vmem:[%s292 + $0xc8] sm:$0xff]
        %v3202 = vld [vmem:[%s292 + $0xd0] sm:$0xff]
        %v3203 = vld [vmem:[%s292 + $0xd8] sm:$0xff]
        %v3204 = vld [vmem:[%s292 + $0xe0] sm:$0xff]
        %v3205 = vld [vmem:[%s292 + $0xe8] sm:$0xff]
        %v3206 = vld [vmem:[%s292 + $0xf0] sm:$0xff]
        %v3207 = vld [vmem:[%s292 + $0xf8] sm:$0xff]
        %v3208 = vld [vmem:[%s292 + $0x100] sm:$0xff]
        %v3209 = vld [vmem:[%s292 + $0x108] sm:$0xff]
        %v3210 = vld [vmem:[%s292 + $0x110] sm:$0xff]
        %v3211 = vld [vmem:[%s292 + $0x118] sm:$0xff]
        %v3212 = vld [vmem:[%s292 + $0x120] sm:$0xff]
        %v3213 = vld [vmem:[%s292 + $0x128] sm:$0xff]
        %v3214 = vld [vmem:[%s292 + $0x130] sm:$0xff]
        %v3215 = vld [vmem:[%s292 + $0x138] sm:$0xff]
        %v3216 = vld [vmem:[%s292 + $0x140] sm:$0x3f]
        %v3217 = vld [vmem:[%s292 + $0x148] sm:$0x3f]
        %3218 = vmatpush.bf16.msra.mxu0 %v1119
        %3219 = vmatpush.bf16.msra.mxu0 %v1117
        %3220 = vmatpush.bf16.msra.mxu0 %v1115
        %3221 = vmatpush.bf16.msra.mxu0 %v1113
        %3222 = vmatpush.bf16.msra.mxu0 %v1111
        %3223 = vmatpush.bf16.msra.mxu0 %v1109
        %3224 = vmatpush.bf16.msra.mxu0 %v1107
        %3225 = vmatpush.bf16.msra.mxu0 %v1105
        %3226 = vmatmul.bf16.gmra.mxu0 %v1570
        %v3227 = vpop.f32.mrf.mxu0
        %v3228 = vadd.f32 0.0, %v3227
        %v3229 = vpop.f32.mrf.mxu0
        %v3230 = vadd.f32 0.0, %v3229
        %3231 = vmatmul.bf16.gmra.mxu0 %v1573
        %v3232 = vpop.f32.mrf.mxu0
        %v3233 = vadd.f32 0.0, %v3232
        %v3234 = vpop.f32.mrf.mxu0
        %v3235 = vadd.f32 0.0, %v3234
        %3236 = vmatmul.bf16.gmra.mxu0 %v1576
        %v3237 = vpop.f32.mrf.mxu0
        %v3238 = vadd.f32 0.0, %v3237
        %v3239 = vpop.f32.mrf.mxu0
        %v3240 = vadd.f32 0.0, %v3239
        %3241 = vmatmul.bf16.gmra.mxu0 %v1579
        %v3242 = vpop.f32.mrf.mxu0
        %v3243 = vadd.f32 0.0, %v3242
        %v3244 = vpop.f32.mrf.mxu0
        %v3245 = vadd.f32 0.0, %v3244
        %3246 = vmatmul.bf16.gmra.mxu0 %v1582
        %v3247 = vpop.f32.mrf.mxu0
        %v3248 = vadd.f32 0.0, %v3247
        %v3249 = vpop.f32.mrf.mxu0
        %v3250 = vadd.f32 0.0, %v3249
        %3251 = vmatmul.bf16.gmra.mxu0 %v1585
        %v3252 = vpop.f32.mrf.mxu0
        %v3253 = vadd.f32 0.0, %v3252
        %v3254 = vpop.f32.mrf.mxu0
        %v3255 = vadd.f32 0.0, %v3254
        %3256 = vmatmul.bf16.gmra.mxu0 %v1588
        %v3257 = vpop.f32.mrf.mxu0
        %v3258 = vadd.f32 0.0, %v3257
        %v3259 = vpop.f32.mrf.mxu0
        %v3260 = vadd.f32 0.0, %v3259
        %3261 = vmatmul.bf16.gmra.mxu0 %v1591
        %v3262 = vpop.f32.mrf.mxu0
        %v3263 = vadd.f32 0.0, %v3262
        %v3264 = vpop.f32.mrf.mxu0
        %v3265 = vadd.f32 0.0, %v3264
        %3266 = vmatmul.bf16.gmra.mxu0 %v1594
        %v3267 = vpop.f32.mrf.mxu0
        %v3268 = vadd.f32 0.0, %v3267
        %v3269 = vpop.f32.mrf.mxu0
        %v3270 = vadd.f32 0.0, %v3269
        %3271 = vmatmul.bf16.gmra.mxu0 %v1597
        %v3272 = vpop.f32.mrf.mxu0
        %v3273 = vadd.f32 0.0, %v3272
        %v3274 = vpop.f32.mrf.mxu0
        %v3275 = vadd.f32 0.0, %v3274
        %3276 = vmatmul.bf16.gmra.mxu0 %v1600
        %v3277 = vpop.f32.mrf.mxu0
        %v3278 = vadd.f32 0.0, %v3277
        %v3279 = vpop.f32.mrf.mxu0
        %3280 = vdwg.mxu0
        %3281 = vmatpush.bf16.msra.mxu0 %v1135
        %3282 = vmatpush.bf16.msra.mxu0 %v1133
        %3283 = vmatpush.bf16.msra.mxu0 %v1131
        %3284 = vmatpush.bf16.msra.mxu0 %v1129
        %3285 = vmatpush.bf16.msra.mxu0 %v1127
        %3286 = vmatpush.bf16.msra.mxu0 %v1125
        %3287 = vmatpush.bf16.msra.mxu0 %v1123
        %3288 = vmatpush.bf16.msra.mxu0 %v1121
        %3289 = vmatmul.bf16.gmra.mxu0 %v1571
        %v3290 = vpop.f32.mrf.mxu0
        %v3291 = vadd.f32 %v3228, %v3290
        %v3292 = vpop.f32.mrf.mxu0
        %v3293 = vadd.f32 %v3230, %v3292
        %3294 = vmatmul.bf16.gmra.mxu0 %v1574
        %v3295 = vpop.f32.mrf.mxu0
        %v3296 = vadd.f32 %v3233, %v3295
        %v3297 = vpop.f32.mrf.mxu0
        %v3298 = vadd.f32 %v3235, %v3297
        %3299 = vmatmul.bf16.gmra.mxu0 %v1577
        %v3300 = vpop.f32.mrf.mxu0
        %v3301 = vadd.f32 %v3238, %v3300
        %v3302 = vpop.f32.mrf.mxu0
        %v3303 = vadd.f32 %v3240, %v3302
        %3304 = vmatmul.bf16.gmra.mxu0 %v1580
        %v3305 = vpop.f32.mrf.mxu0
        %v3306 = vadd.f32 %v3243, %v3305
        %v3307 = vpop.f32.mrf.mxu0
        %v3308 = vadd.f32 %v3245, %v3307
        %3309 = vmatmul.bf16.gmra.mxu0 %v1583
        %v3310 = vpop.f32.mrf.mxu0
        %v3311 = vadd.f32 %v3248, %v3310
        %v3312 = vpop.f32.mrf.mxu0
        %v3313 = vadd.f32 %v3250, %v3312
        %3314 = vmatmul.bf16.gmra.mxu0 %v1586
        %v3315 = vpop.f32.mrf.mxu0
        %v3316 = vadd.f32 %v3253, %v3315
        %v3317 = vpop.f32.mrf.mxu0
        %v3318 = vadd.f32 %v3255, %v3317
        %3319 = vmatmul.bf16.gmra.mxu0 %v1589
        %v3320 = vpop.f32.mrf.mxu0
        %v3321 = vadd.f32 %v3258, %v3320
        %v3322 = vpop.f32.mrf.mxu0
        %v3323 = vadd.f32 %v3260, %v3322
        %3324 = vmatmul.bf16.gmra.mxu0 %v1592
        %v3325 = vpop.f32.mrf.mxu0
        %v3326 = vadd.f32 %v3263, %v3325
        %v3327 = vpop.f32.mrf.mxu0
        %v3328 = vadd.f32 %v3265, %v3327
        %3329 = vmatmul.bf16.gmra.mxu0 %v1595
        %v3330 = vpop.f32.mrf.mxu0
        %v3331 = vadd.f32 %v3268, %v3330
        %v3332 = vpop.f32.mrf.mxu0
        %v3333 = vadd.f32 %v3270, %v3332
        %3334 = vmatmul.bf16.gmra.mxu0 %v1598
        %v3335 = vpop.f32.mrf.mxu0
        %v3336 = vadd.f32 %v3273, %v3335
        %v3337 = vpop.f32.mrf.mxu0
        %v3338 = vadd.f32 %v3275, %v3337
        %3339 = vmatmul.bf16.gmra.mxu0 %v1601
        %v3340 = vpop.f32.mrf.mxu0
        %v3341 = vadd.f32 %v3278, %v3340
        %v3342 = vpop.f32.mrf.mxu0
        %3343 = vdwg.mxu0
        %3344 = vmatpush.bf16.msra.mxu0 0
        %3345 = vmatpush.bf16.msra.mxu0 0
        %3346 = vmatpush.bf16.msra.mxu0 0
        %3347 = vmatpush.bf16.msra.mxu0 0
        %3348 = vmatpush.bf16.msra.mxu0 %v1143
        %3349 = vmatpush.bf16.msra.mxu0 %v1141
        %3350 = vmatpush.bf16.msra.mxu0 %v1139
        %3351 = vmatpush.bf16.msra.mxu0 %v1137
        %3352 = vmatmul.bf16.gmra.mxu0 %v1827
        %v3353 = vpop.f32.mrf.mxu0
        %v3354 = vadd.f32 %v3291, %v3353
        %v3355 = vpop.f32.mrf.mxu0
        %v3356 = vadd.f32 %v3293, %v3355
        %3357 = vmatmul.bf16.gmra.mxu0 %v1830
        %v3358 = vpop.f32.mrf.mxu0
        %v3359 = vadd.f32 %v3296, %v3358
        %v3360 = vpop.f32.mrf.mxu0
        %v3361 = vadd.f32 %v3298, %v3360
        %3362 = vmatmul.bf16.gmra.mxu0 %v1833
        %v3363 = vpop.f32.mrf.mxu0
        %v3364 = vadd.f32 %v3301, %v3363
        %v3365 = vpop.f32.mrf.mxu0
        %v3366 = vadd.f32 %v3303, %v3365
        %3367 = vmatmul.bf16.gmra.mxu0 %v1836
        %v3368 = vpop.f32.mrf.mxu0
        %v3369 = vadd.f32 %v3306, %v3368
        %v3370 = vpop.f32.mrf.mxu0
        %v3371 = vadd.f32 %v3308, %v3370
        %3372 = vmatmul.bf16.gmra.mxu0 %v1839
        %v3373 = vpop.f32.mrf.mxu0
        %v3374 = vadd.f32 %v3311, %v3373
        %v3375 = vpop.f32.mrf.mxu0
        %v3376 = vadd.f32 %v3313, %v3375
        %3377 = vmatmul.bf16.gmra.mxu0 %v1842
        %v3378 = vpop.f32.mrf.mxu0
        %v3379 = vadd.f32 %v3316, %v3378
        %v3380 = vpop.f32.mrf.mxu0
        %v3381 = vadd.f32 %v3318, %v3380
        %3382 = vmatmul.bf16.gmra.mxu0 %v1845
        %v3383 = vpop.f32.mrf.mxu0
        %v3384 = vadd.f32 %v3321, %v3383
        %v3385 = vpop.f32.mrf.mxu0
        %v3386 = vadd.f32 %v3323, %v3385
        %3387 = vmatmul.bf16.gmra.mxu0 %v1848
        %v3388 = vpop.f32.mrf.mxu0
        %v3389 = vadd.f32 %v3326, %v3388
        %v3390 = vpop.f32.mrf.mxu0
        %v3391 = vadd.f32 %v3328, %v3390
        %3392 = vmatmul.bf16.gmra.mxu0 %v1851
        %v3393 = vpop.f32.mrf.mxu0
        %v3394 = vadd.f32 %v3331, %v3393
        %v3395 = vpop.f32.mrf.mxu0
        %v3396 = vadd.f32 %v3333, %v3395
        %3397 = vmatmul.bf16.gmra.mxu0 %v1854
        %v3398 = vpop.f32.mrf.mxu0
        %v3399 = vadd.f32 %v3336, %v3398
        %v3400 = vpop.f32.mrf.mxu0
        %v3401 = vadd.f32 %v3338, %v3400
        %3402 = vmatmul.bf16.gmra.mxu0 %v1857
        %v3403 = vpop.f32.mrf.mxu0
        %v3404 = vadd.f32 %v3341, %v3403
        %v3405 = vpop.f32.mrf.mxu0
        %3406 = vdwg.mxu0
        %3407 = vmatpush.bf16.msra.mxu0 %v1120
        %3408 = vmatpush.bf16.msra.mxu0 %v1118
        %3409 = vmatpush.bf16.msra.mxu0 %v1116
        %3410 = vmatpush.bf16.msra.mxu0 %v1114
        %3411 = vmatpush.bf16.msra.mxu0 %v1112
        %3412 = vmatpush.bf16.msra.mxu0 %v1110
        %3413 = vmatpush.bf16.msra.mxu0 %v1108
        %3414 = vmatpush.bf16.msra.mxu0 %v1106
        %3415 = vmatmul.bf16.gmra.mxu0 %v1570
        %v3416 = vpop.f32.mrf.mxu0
        %v3417 = vadd.f32 0.0, %v3416
        %v3418 = vpop.f32.mrf.mxu0
        %v3419 = vadd.f32 0.0, %v3418
        %3420 = vmatmul.bf16.gmra.mxu0 %v1573
        %v3421 = vpop.f32.mrf.mxu0
        %v3422 = vadd.f32 0.0, %v3421
        %v3423 = vpop.f32.mrf.mxu0
        %v3424 = vadd.f32 0.0, %v3423
        %3425 = vmatmul.bf16.gmra.mxu0 %v1576
        %v3426 = vpop.f32.mrf.mxu0
        %v3427 = vadd.f32 0.0, %v3426
        %v3428 = vpop.f32.mrf.mxu0
        %v3429 = vadd.f32 0.0, %v3428
        %3430 = vmatmul.bf16.gmra.mxu0 %v1579
        %v3431 = vpop.f32.mrf.mxu0
        %v3432 = vadd.f32 0.0, %v3431
        %v3433 = vpop.f32.mrf.mxu0
        %v3434 = vadd.f32 0.0, %v3433
        %3435 = vmatmul.bf16.gmra.mxu0 %v1582
        %v3436 = vpop.f32.mrf.mxu0
        %v3437 = vadd.f32 0.0, %v3436
        %v3438 = vpop.f32.mrf.mxu0
        %v3439 = vadd.f32 0.0, %v3438
        %3440 = vmatmul.bf16.gmra.mxu0 %v1585
        %v3441 = vpop.f32.mrf.mxu0
        %v3442 = vadd.f32 0.0, %v3441
        %v3443 = vpop.f32.mrf.mxu0
        %v3444 = vadd.f32 0.0, %v3443
        %3445 = vmatmul.bf16.gmra.mxu0 %v1588
        %v3446 = vpop.f32.mrf.mxu0
        %v3447 = vadd.f32 0.0, %v3446
        %v3448 = vpop.f32.mrf.mxu0
        %v3449 = vadd.f32 0.0, %v3448
        %3450 = vmatmul.bf16.gmra.mxu0 %v1591
        %v3451 = vpop.f32.mrf.mxu0
        %v3452 = vadd.f32 0.0, %v3451
        %v3453 = vpop.f32.mrf.mxu0
        %v3454 = vadd.f32 0.0, %v3453
        %3455 = vmatmul.bf16.gmra.mxu0 %v1594
        %v3456 = vpop.f32.mrf.mxu0
        %v3457 = vadd.f32 0.0, %v3456
        %v3458 = vpop.f32.mrf.mxu0
        %v3459 = vadd.f32 0.0, %v3458
        %3460 = vmatmul.bf16.gmra.mxu0 %v1597
        %v3461 = vpop.f32.mrf.mxu0
        %v3462 = vadd.f32 0.0, %v3461
        %v3463 = vpop.f32.mrf.mxu0
        %v3464 = vadd.f32 0.0, %v3463
        %3465 = vmatmul.bf16.gmra.mxu0 %v1600
        %v3466 = vpop.f32.mrf.mxu0
        %v3467 = vadd.f32 0.0, %v3466
        %v3468 = vpop.f32.mrf.mxu0
        %3469 = vdwg.mxu0
        %3470 = vmatpush.bf16.msra.mxu0 %v1136
        %3471 = vmatpush.bf16.msra.mxu0 %v1134
        %3472 = vmatpush.bf16.msra.mxu0 %v1132
        %3473 = vmatpush.bf16.msra.mxu0 %v1130
        %3474 = vmatpush.bf16.msra.mxu0 %v1128
        %3475 = vmatpush.bf16.msra.mxu0 %v1126
        %3476 = vmatpush.bf16.msra.mxu0 %v1124
        %3477 = vmatpush.bf16.msra.mxu0 %v1122
        %3478 = vmatmul.bf16.gmra.mxu0 %v1571
        %v3479 = vpop.f32.mrf.mxu0
        %v3480 = vadd.f32 %v3417, %v3479
        %v3481 = vpop.f32.mrf.mxu0
        %v3482 = vadd.f32 %v3419, %v3481
        %3483 = vmatmul.bf16.gmra.mxu0 %v1574
        %v3484 = vpop.f32.mrf.mxu0
        %v3485 = vadd.f32 %v3422, %v3484
        %v3486 = vpop.f32.mrf.mxu0
        %v3487 = vadd.f32 %v3424, %v3486
        %3488 = vmatmul.bf16.gmra.mxu0 %v1577
        %v3489 = vpop.f32.mrf.mxu0
        %v3490 = vadd.f32 %v3427, %v3489
        %v3491 = vpop.f32.mrf.mxu0
        %v3492 = vadd.f32 %v3429, %v3491
        %3493 = vmatmul.bf16.gmra.mxu0 %v1580
        %v3494 = vpop.f32.mrf.mxu0
        %v3495 = vadd.f32 %v3432, %v3494
        %v3496 = vpop.f32.mrf.mxu0
        %v3497 = vadd.f32 %v3434, %v3496
        %3498 = vmatmul.bf16.gmra.mxu0 %v1583
        %v3499 = vpop.f32.mrf.mxu0
        %v3500 = vadd.f32 %v3437, %v3499
        %v3501 = vpop.f32.mrf.mxu0
        %v3502 = vadd.f32 %v3439, %v3501
        %3503 = vmatmul.bf16.gmra.mxu0 %v1586
        %v3504 = vpop.f32.mrf.mxu0
        %v3505 = vadd.f32 %v3442, %v3504
        %v3506 = vpop.f32.mrf.mxu0
        %v3507 = vadd.f32 %v3444, %v3506
        %3508 = vmatmul.bf16.gmra.mxu0 %v1589
        %v3509 = vpop.f32.mrf.mxu0
        %v3510 = vadd.f32 %v3447, %v3509
        %v3511 = vpop.f32.mrf.mxu0
        %v3512 = vadd.f32 %v3449, %v3511
        %3513 = vmatmul.bf16.gmra.mxu0 %v1592
        %v3514 = vpop.f32.mrf.mxu0
        %v3515 = vadd.f32 %v3452, %v3514
        %v3516 = vpop.f32.mrf.mxu0
        %v3517 = vadd.f32 %v3454, %v3516
        %3518 = vmatmul.bf16.gmra.mxu0 %v1595
        %v3519 = vpop.f32.mrf.mxu0
        %v3520 = vadd.f32 %v3457, %v3519
        %v3521 = vpop.f32.mrf.mxu0
        %v3522 = vadd.f32 %v3459, %v3521
        %3523 = vmatmul.bf16.gmra.mxu0 %v1598
        %v3524 = vpop.f32.mrf.mxu0
        %v3525 = vadd.f32 %v3462, %v3524
        %v3526 = vpop.f32.mrf.mxu0
        %v3527 = vadd.f32 %v3464, %v3526
        %3528 = vmatmul.bf16.gmra.mxu0 %v1601
        %v3529 = vpop.f32.mrf.mxu0
        %v3530 = vadd.f32 %v3467, %v3529
        %v3531 = vpop.f32.mrf.mxu0
        %3532 = vdwg.mxu0
        %3533 = vmatpush.bf16.msra.mxu0 0
        %3534 = vmatpush.bf16.msra.mxu0 0
        %3535 = vmatpush.bf16.msra.mxu0 0
        %3536 = vmatpush.bf16.msra.mxu0 0
        %3537 = vmatpush.bf16.msra.mxu0 %v1144
        %3538 = vmatpush.bf16.msra.mxu0 %v1142
        %3539 = vmatpush.bf16.msra.mxu0 %v1140
        %3540 = vmatpush.bf16.msra.mxu0 %v1138
        %3541 = vmatmul.bf16.gmra.mxu0 %v1827
        %v3542 = vpop.f32.mrf.mxu0
        %v3543 = vadd.f32 %v3480, %v3542
        %v3544 = vpop.f32.mrf.mxu0
        %v3545 = vadd.f32 %v3482, %v3544
        %3546 = vmatmul.bf16.gmra.mxu0 %v1830
        %v3547 = vpop.f32.mrf.mxu0
        %v3548 = vadd.f32 %v3485, %v3547
        %v3549 = vpop.f32.mrf.mxu0
        %v3550 = vadd.f32 %v3487, %v3549
        %3551 = vmatmul.bf16.gmra.mxu0 %v1833
        %v3552 = vpop.f32.mrf.mxu0
        %v3553 = vadd.f32 %v3490, %v3552
        %v3554 = vpop.f32.mrf.mxu0
        %v3555 = vadd.f32 %v3492, %v3554
        %3556 = vmatmul.bf16.gmra.mxu0 %v1836
        %v3557 = vpop.f32.mrf.mxu0
        %v3558 = vadd.f32 %v3495, %v3557
        %v3559 = vpop.f32.mrf.mxu0
        %v3560 = vadd.f32 %v3497, %v3559
        %3561 = vmatmul.bf16.gmra.mxu0 %v1839
        %v3562 = vpop.f32.mrf.mxu0
        %v3563 = vadd.f32 %v3500, %v3562
        %v3564 = vpop.f32.mrf.mxu0
        %v3565 = vadd.f32 %v3502, %v3564
        %3566 = vmatmul.bf16.gmra.mxu0 %v1842
        %v3567 = vpop.f32.mrf.mxu0
        %v3568 = vadd.f32 %v3505, %v3567
        %v3569 = vpop.f32.mrf.mxu0
        %v3570 = vadd.f32 %v3507, %v3569
        %3571 = vmatmul.bf16.gmra.mxu0 %v1845
        %v3572 = vpop.f32.mrf.mxu0
        %v3573 = vadd.f32 %v3510, %v3572
        %v3574 = vpop.f32.mrf.mxu0
        %v3575 = vadd.f32 %v3512, %v3574
        %3576 = vmatmul.bf16.gmra.mxu0 %v1848
        %v3577 = vpop.f32.mrf.mxu0
        %v3578 = vadd.f32 %v3515, %v3577
        %v3579 = vpop.f32.mrf.mxu0
        %v3580 = vadd.f32 %v3517, %v3579
        %3581 = vmatmul.bf16.gmra.mxu0 %v1851
        %v3582 = vpop.f32.mrf.mxu0
        %v3583 = vadd.f32 %v3520, %v3582
        %v3584 = vpop.f32.mrf.mxu0
        %v3585 = vadd.f32 %v3522, %v3584
        %3586 = vmatmul.bf16.gmra.mxu0 %v1854
        %v3587 = vpop.f32.mrf.mxu0
        %v3588 = vadd.f32 %v3525, %v3587
        %v3589 = vpop.f32.mrf.mxu0
        %v3590 = vadd.f32 %v3527, %v3589
        %3591 = vmatmul.bf16.gmra.mxu0 %v1857
        %v3592 = vpop.f32.mrf.mxu0
        %v3593 = vadd.f32 %v3530, %v3592
        %v3594 = vpop.f32.mrf.mxu0
        %3595 = vdwg.mxu0
        %v3596 = vadd.f32 %v3176, %v3354
        %v3597 = vadd.f32 %v3177, %v3543
        %v3598 = vadd.f32 %v3178, %v3356
        %v3599 = vadd.f32 %v3179, %v3545
        %v3600 = vadd.f32 %v3180, %v3359
        %v3601 = vadd.f32 %v3181, %v3548
        %v3602 = vadd.f32 %v3182, %v3361
        %v3603 = vadd.f32 %v3183, %v3550
        %v3604 = vadd.f32 %v3184, %v3364
        %v3605 = vadd.f32 %v3185, %v3553
        %v3606 = vadd.f32 %v3186, %v3366
        %v3607 = vadd.f32 %v3187, %v3555
        %v3608 = vadd.f32 %v3188, %v3369
        %v3609 = vadd.f32 %v3189, %v3558
        %v3610 = vadd.f32 %v3190, %v3371
        %v3611 = vadd.f32 %v3191, %v3560
        %v3612 = vadd.f32 %v3192, %v3374
        %v3613 = vadd.f32 %v3193, %v3563
        %v3614 = vadd.f32 %v3194, %v3376
        %v3615 = vadd.f32 %v3195, %v3565
        %v3616 = vadd.f32 %v3196, %v3379
        %v3617 = vadd.f32 %v3197, %v3568
        %v3618 = vadd.f32 %v3198, %v3381
        %v3619 = vadd.f32 %v3199, %v3570
        %v3620 = vadd.f32 %v3200, %v3384
        %v3621 = vadd.f32 %v3201, %v3573
        %v3622 = vadd.f32 %v3202, %v3386
        %v3623 = vadd.f32 %v3203, %v3575
        %v3624 = vadd.f32 %v3204, %v3389
        %v3625 = vadd.f32 %v3205, %v3578
        %v3626 = vadd.f32 %v3206, %v3391
        %v3627 = vadd.f32 %v3207, %v3580
        %v3628 = vadd.f32 %v3208, %v3394
        %v3629 = vadd.f32 %v3209, %v3583
        %v3630 = vadd.f32 %v3210, %v3396
        %v3631 = vadd.f32 %v3211, %v3585
        %v3632 = vadd.f32 %v3212, %v3399
        %v3633 = vadd.f32 %v3213, %v3588
        %v3634 = vadd.f32 %v3214, %v3401
        %v3635 = vadd.f32 %v3215, %v3590
        %v3636 = vadd.f32 %v3216, %v3404
        %v3637 = vadd.f32 %v3217, %v3593
        %3638 = vst [vmem:[%s292] sm:$0xff] %v3596
        %3639 = vst [vmem:[%s292 + $0x8] sm:$0xff] %v3597
        %3640 = vst [vmem:[%s292 + $0x10] sm:$0xff] %v3598
        %3641 = vst [vmem:[%s292 + $0x18] sm:$0xff] %v3599
        %3642 = vst [vmem:[%s292 + $0x20] sm:$0xff] %v3600
        %3643 = vst [vmem:[%s292 + $0x28] sm:$0xff] %v3601
        %3644 = vst [vmem:[%s292 + $0x30] sm:$0xff] %v3602
        %3645 = vst [vmem:[%s292 + $0x38] sm:$0xff] %v3603
        %3646 = vst [vmem:[%s292 + $0x40] sm:$0xff] %v3604
        %3647 = vst [vmem:[%s292 + $0x48] sm:$0xff] %v3605
        %3648 = vst [vmem:[%s292 + $0x50] sm:$0xff] %v3606
        %3649 = vst [vmem:[%s292 + $0x58] sm:$0xff] %v3607
        %3650 = vst [vmem:[%s292 + $0x60] sm:$0xff] %v3608
        %3651 = vst [vmem:[%s292 + $0x68] sm:$0xff] %v3609
        %3652 = vst [vmem:[%s292 + $0x70] sm:$0xff] %v3610
        %3653 = vst [vmem:[%s292 + $0x78] sm:$0xff] %v3611
        %3654 = vst [vmem:[%s292 + $0x80] sm:$0xff] %v3612
        %3655 = vst [vmem:[%s292 + $0x88] sm:$0xff] %v3613
        %3656 = vst [vmem:[%s292 + $0x90] sm:$0xff] %v3614
        %3657 = vst [vmem:[%s292 + $0x98] sm:$0xff] %v3615
        %3658 = vst [vmem:[%s292 + $0xa0] sm:$0xff] %v3616
        %3659 = vst [vmem:[%s292 + $0xa8] sm:$0xff] %v3617
        %3660 = vst [vmem:[%s292 + $0xb0] sm:$0xff] %v3618
        %3661 = vst [vmem:[%s292 + $0xb8] sm:$0xff] %v3619
        %3662 = vst [vmem:[%s292 + $0xc0] sm:$0xff] %v3620
        %3663 = vst [vmem:[%s292 + $0xc8] sm:$0xff] %v3621
        %3664 = vst [vmem:[%s292 + $0xd0] sm:$0xff] %v3622
        %3665 = vst [vmem:[%s292 + $0xd8] sm:$0xff] %v3623
        %3666 = vst [vmem:[%s292 + $0xe0] sm:$0xff] %v3624
        %3667 = vst [vmem:[%s292 + $0xe8] sm:$0xff] %v3625
        %3668 = vst [vmem:[%s292 + $0xf0] sm:$0xff] %v3626
        %3669 = vst [vmem:[%s292 + $0xf8] sm:$0xff] %v3627
        %3670 = vst [vmem:[%s292 + $0x100] sm:$0xff] %v3628
        %3671 = vst [vmem:[%s292 + $0x108] sm:$0xff] %v3629
        %3672 = vst [vmem:[%s292 + $0x110] sm:$0xff] %v3630
        %3673 = vst [vmem:[%s292 + $0x118] sm:$0xff] %v3631
        %3674 = vst [vmem:[%s292 + $0x120] sm:$0xff] %v3632
        %3675 = vst [vmem:[%s292 + $0x128] sm:$0xff] %v3633
        %3676 = vst [vmem:[%s292 + $0x130] sm:$0xff] %v3634
        %3677 = vst [vmem:[%s292 + $0x138] sm:$0xff] %v3635
        %3678 = vst [vmem:[%s292 + $0x140] sm:$0x3f] %v3636
        %3679 = vst [vmem:[%s292 + $0x148] sm:$0x3f] %v3637
        %v3680 = vld [vmem:[%s292] sm:$0xff]
        %v3681 = vld [vmem:[%s292 + $0x8] sm:$0xff]
        %v3682 = vld [vmem:[%s292 + $0x10] sm:$0xff]
        %v3683 = vld [vmem:[%s292 + $0x18] sm:$0xff]
        %v3684 = vld [vmem:[%s292 + $0x20] sm:$0xff]
        %v3685 = vld [vmem:[%s292 + $0x28] sm:$0xff]
        %v3686 = vld [vmem:[%s292 + $0x30] sm:$0xff]
        %v3687 = vld [vmem:[%s292 + $0x38] sm:$0xff]
        %v3688 = vld [vmem:[%s292 + $0x40] sm:$0xff]
        %v3689 = vld [vmem:[%s292 + $0x48] sm:$0xff]
        %v3690 = vld [vmem:[%s292 + $0x50] sm:$0xff]
        %v3691 = vld [vmem:[%s292 + $0x58] sm:$0xff]
        %v3692 = vld [vmem:[%s292 + $0x60] sm:$0xff]
        %v3693 = vld [vmem:[%s292 + $0x68] sm:$0xff]
        %v3694 = vld [vmem:[%s292 + $0x70] sm:$0xff]
        %v3695 = vld [vmem:[%s292 + $0x78] sm:$0xff]
        %v3696 = vld [vmem:[%s292 + $0x80] sm:$0xff]
        %v3697 = vld [vmem:[%s292 + $0x88] sm:$0xff]
        %v3698 = vld [vmem:[%s292 + $0x90] sm:$0xff]
        %v3699 = vld [vmem:[%s292 + $0x98] sm:$0xff]
        %v3700 = vld [vmem:[%s292 + $0xa0] sm:$0xff]
        %v3701 = vld [vmem:[%s292 + $0xa8] sm:$0xff]
        %v3702 = vld [vmem:[%s292 + $0xb0] sm:$0xff]
        %v3703 = vld [vmem:[%s292 + $0xb8] sm:$0xff]
        %v3704 = vld [vmem:[%s292 + $0xc0] sm:$0xff]
        %v3705 = vld [vmem:[%s292 + $0xc8] sm:$0xff]
        %v3706 = vld [vmem:[%s292 + $0xd0] sm:$0xff]
        %v3707 = vld [vmem:[%s292 + $0xd8] sm:$0xff]
        %v3708 = vld [vmem:[%s292 + $0xe0] sm:$0xff]
        %v3709 = vld [vmem:[%s292 + $0xe8] sm:$0xff]
        %v3710 = vld [vmem:[%s292 + $0xf0] sm:$0xff]
        %v3711 = vld [vmem:[%s292 + $0xf8] sm:$0xff]
        %v3712 = vld [vmem:[%s292 + $0x100] sm:$0xff]
        %v3713 = vld [vmem:[%s292 + $0x108] sm:$0xff]
        %v3714 = vld [vmem:[%s292 + $0x110] sm:$0xff]
        %v3715 = vld [vmem:[%s292 + $0x118] sm:$0xff]
        %v3716 = vld [vmem:[%s292 + $0x120] sm:$0xff]
        %v3717 = vld [vmem:[%s292 + $0x128] sm:$0xff]
        %v3718 = vld [vmem:[%s292 + $0x130] sm:$0xff]
        %v3719 = vld [vmem:[%s292 + $0x138] sm:$0xff]
        %v3720 = vld [vmem:[%s292 + $0x140] sm:$0x3f]
        %v3721 = vld [vmem:[%s292 + $0x148] sm:$0x3f]
        %v3723 = vsel %vm1825, %v530, 0
        %v3726 = vsel %vm1825, %v533, 0
        %v3729 = vsel %vm1825, %v536, 0
        %v3732 = vsel %vm1825, %v539, 0
        %v3735 = vsel %vm1825, %v542, 0
        %v3738 = vsel %vm1825, %v545, 0
        %v3741 = vsel %vm1825, %v548, 0
        %v3744 = vsel %vm1825, %v551, 0
        %v3747 = vsel %vm1825, %v554, 0
        %v3750 = vsel %vm1825, %v557, 0
        %v3753 = vsel %vm1825, %v560, 0
        %3755 = vmatpush.bf16.msra.mxu0 %v1759
        %3756 = vmatpush.bf16.msra.mxu0 %v1757
        %3757 = vmatpush.bf16.msra.mxu0 %v1755
        %3758 = vmatpush.bf16.msra.mxu0 %v1753
        %3759 = vmatpush.bf16.msra.mxu0 %v1751
        %3760 = vmatpush.bf16.msra.mxu0 %v1749
        %3761 = vmatpush.bf16.msra.mxu0 %v1747
        %3762 = vmatpush.bf16.msra.mxu0 %v1745
        %3763 = vmatmul.bf16.gmra.mxu0 %v528
        %v3764 = vpop.f32.mrf.mxu0
        %v3765 = vadd.f32 0.0, %v3764
        %v3766 = vpop.f32.mrf.mxu0
        %v3767 = vadd.f32 0.0, %v3766
        %3768 = vmatmul.bf16.gmra.mxu0 %v531
        %v3769 = vpop.f32.mrf.mxu0
        %v3770 = vadd.f32 0.0, %v3769
        %v3771 = vpop.f32.mrf.mxu0
        %v3772 = vadd.f32 0.0, %v3771
        %3773 = vmatmul.bf16.gmra.mxu0 %v534
        %v3774 = vpop.f32.mrf.mxu0
        %v3775 = vadd.f32 0.0, %v3774
        %v3776 = vpop.f32.mrf.mxu0
        %v3777 = vadd.f32 0.0, %v3776
        %3778 = vmatmul.bf16.gmra.mxu0 %v537
        %v3779 = vpop.f32.mrf.mxu0
        %v3780 = vadd.f32 0.0, %v3779
        %v3781 = vpop.f32.mrf.mxu0
        %v3782 = vadd.f32 0.0, %v3781
        %3783 = vmatmul.bf16.gmra.mxu0 %v540
        %v3784 = vpop.f32.mrf.mxu0
        %v3785 = vadd.f32 0.0, %v3784
        %v3786 = vpop.f32.mrf.mxu0
        %v3787 = vadd.f32 0.0, %v3786
        %3788 = vmatmul.bf16.gmra.mxu0 %v543
        %v3789 = vpop.f32.mrf.mxu0
        %v3790 = vadd.f32 0.0, %v3789
        %v3791 = vpop.f32.mrf.mxu0
        %v3792 = vadd.f32 0.0, %v3791
        %3793 = vmatmul.bf16.gmra.mxu0 %v546
        %v3794 = vpop.f32.mrf.mxu0
        %v3795 = vadd.f32 0.0, %v3794
        %v3796 = vpop.f32.mrf.mxu0
        %v3797 = vadd.f32 0.0, %v3796
        %3798 = vmatmul.bf16.gmra.mxu0 %v549
        %v3799 = vpop.f32.mrf.mxu0
        %v3800 = vadd.f32 0.0, %v3799
        %v3801 = vpop.f32.mrf.mxu0
        %v3802 = vadd.f32 0.0, %v3801
        %3803 = vmatmul.bf16.gmra.mxu0 %v552
        %v3804 = vpop.f32.mrf.mxu0
        %v3805 = vadd.f32 0.0, %v3804
        %v3806 = vpop.f32.mrf.mxu0
        %v3807 = vadd.f32 0.0, %v3806
        %3808 = vmatmul.bf16.gmra.mxu0 %v555
        %v3809 = vpop.f32.mrf.mxu0
        %v3810 = vadd.f32 0.0, %v3809
        %v3811 = vpop.f32.mrf.mxu0
        %v3812 = vadd.f32 0.0, %v3811
        %3813 = vmatmul.bf16.gmra.mxu0 %v558
        %v3814 = vpop.f32.mrf.mxu0
        %v3815 = vadd.f32 0.0, %v3814
        %v3816 = vpop.f32.mrf.mxu0
        %3817 = vdwg.mxu0
        %3818 = vmatpush.bf16.msra.mxu0 %v1775
        %3819 = vmatpush.bf16.msra.mxu0 %v1773
        %3820 = vmatpush.bf16.msra.mxu0 %v1771
        %3821 = vmatpush.bf16.msra.mxu0 %v1769
        %3822 = vmatpush.bf16.msra.mxu0 %v1767
        %3823 = vmatpush.bf16.msra.mxu0 %v1765
        %3824 = vmatpush.bf16.msra.mxu0 %v1763
        %3825 = vmatpush.bf16.msra.mxu0 %v1761
        %3826 = vmatmul.bf16.gmra.mxu0 %v529
        %v3827 = vpop.f32.mrf.mxu0
        %v3828 = vadd.f32 %v3765, %v3827
        %v3829 = vpop.f32.mrf.mxu0
        %v3830 = vadd.f32 %v3767, %v3829
        %3831 = vmatmul.bf16.gmra.mxu0 %v532
        %v3832 = vpop.f32.mrf.mxu0
        %v3833 = vadd.f32 %v3770, %v3832
        %v3834 = vpop.f32.mrf.mxu0
        %v3835 = vadd.f32 %v3772, %v3834
        %3836 = vmatmul.bf16.gmra.mxu0 %v535
        %v3837 = vpop.f32.mrf.mxu0
        %v3838 = vadd.f32 %v3775, %v3837
        %v3839 = vpop.f32.mrf.mxu0
        %v3840 = vadd.f32 %v3777, %v3839
        %3841 = vmatmul.bf16.gmra.mxu0 %v538
        %v3842 = vpop.f32.mrf.mxu0
        %v3843 = vadd.f32 %v3780, %v3842
        %v3844 = vpop.f32.mrf.mxu0
        %v3845 = vadd.f32 %v3782, %v3844
        %3846 = vmatmul.bf16.gmra.mxu0 %v541
        %v3847 = vpop.f32.mrf.mxu0
        %v3848 = vadd.f32 %v3785, %v3847
        %v3849 = vpop.f32.mrf.mxu0
        %v3850 = vadd.f32 %v3787, %v3849
        %3851 = vmatmul.bf16.gmra.mxu0 %v544
        %v3852 = vpop.f32.mrf.mxu0
        %v3853 = vadd.f32 %v3790, %v3852
        %v3854 = vpop.f32.mrf.mxu0
        %v3855 = vadd.f32 %v3792, %v3854
        %3856 = vmatmul.bf16.gmra.mxu0 %v547
        %v3857 = vpop.f32.mrf.mxu0
        %v3858 = vadd.f32 %v3795, %v3857
        %v3859 = vpop.f32.mrf.mxu0
        %v3860 = vadd.f32 %v3797, %v3859
        %3861 = vmatmul.bf16.gmra.mxu0 %v550
        %v3862 = vpop.f32.mrf.mxu0
        %v3863 = vadd.f32 %v3800, %v3862
        %v3864 = vpop.f32.mrf.mxu0
        %v3865 = vadd.f32 %v3802, %v3864
        %3866 = vmatmul.bf16.gmra.mxu0 %v553
        %v3867 = vpop.f32.mrf.mxu0
        %v3868 = vadd.f32 %v3805, %v3867
        %v3869 = vpop.f32.mrf.mxu0
        %v3870 = vadd.f32 %v3807, %v3869
        %3871 = vmatmul.bf16.gmra.mxu0 %v556
        %v3872 = vpop.f32.mrf.mxu0
        %v3873 = vadd.f32 %v3810, %v3872
        %v3874 = vpop.f32.mrf.mxu0
        %v3875 = vadd.f32 %v3812, %v3874
        %3876 = vmatmul.bf16.gmra.mxu0 %v559
        %v3877 = vpop.f32.mrf.mxu0
        %v3878 = vadd.f32 %v3815, %v3877
        %v3879 = vpop.f32.mrf.mxu0
        %3880 = vdwg.mxu0
        %3881 = vmatpush.bf16.msra.mxu0 0
        %3882 = vmatpush.bf16.msra.mxu0 0
        %3883 = vmatpush.bf16.msra.mxu0 0
        %3884 = vmatpush.bf16.msra.mxu0 0
        %3885 = vmatpush.bf16.msra.mxu0 %v1783
        %3886 = vmatpush.bf16.msra.mxu0 %v1781
        %3887 = vmatpush.bf16.msra.mxu0 %v1779
        %3888 = vmatpush.bf16.msra.mxu0 %v1777
        %3889 = vmatmul.bf16.gmra.mxu0 %v3723
        %v3890 = vpop.f32.mrf.mxu0
        %v3891 = vadd.f32 %v3828, %v3890
        %v3892 = vpop.f32.mrf.mxu0
        %v3893 = vadd.f32 %v3830, %v3892
        %3894 = vmatmul.bf16.gmra.mxu0 %v3726
        %v3895 = vpop.f32.mrf.mxu0
        %v3896 = vadd.f32 %v3833, %v3895
        %v3897 = vpop.f32.mrf.mxu0
        %v3898 = vadd.f32 %v3835, %v3897
        %3899 = vmatmul.bf16.gmra.mxu0 %v3729
        %v3900 = vpop.f32.mrf.mxu0
        %v3901 = vadd.f32 %v3838, %v3900
        %v3902 = vpop.f32.mrf.mxu0
        %v3903 = vadd.f32 %v3840, %v3902
        %3904 = vmatmul.bf16.gmra.mxu0 %v3732
        %v3905 = vpop.f32.mrf.mxu0
        %v3906 = vadd.f32 %v3843, %v3905
        %v3907 = vpop.f32.mrf.mxu0
        %v3908 = vadd.f32 %v3845, %v3907
        %3909 = vmatmul.bf16.gmra.mxu0 %v3735
        %v3910 = vpop.f32.mrf.mxu0
        %v3911 = vadd.f32 %v3848, %v3910
        %v3912 = vpop.f32.mrf.mxu0
        %v3913 = vadd.f32 %v3850, %v3912
        %3914 = vmatmul.bf16.gmra.mxu0 %v3738
        %v3915 = vpop.f32.mrf.mxu0
        %v3916 = vadd.f32 %v3853, %v3915
        %v3917 = vpop.f32.mrf.mxu0
        %v3918 = vadd.f32 %v3855, %v3917
        %3919 = vmatmul.bf16.gmra.mxu0 %v3741
        %v3920 = vpop.f32.mrf.mxu0
        %v3921 = vadd.f32 %v3858, %v3920
        %v3922 = vpop.f32.mrf.mxu0
        %v3923 = vadd.f32 %v3860, %v3922
        %3924 = vmatmul.bf16.gmra.mxu0 %v3744
        %v3925 = vpop.f32.mrf.mxu0
        %v3926 = vadd.f32 %v3863, %v3925
        %v3927 = vpop.f32.mrf.mxu0
        %v3928 = vadd.f32 %v3865, %v3927
        %3929 = vmatmul.bf16.gmra.mxu0 %v3747
        %v3930 = vpop.f32.mrf.mxu0
        %v3931 = vadd.f32 %v3868, %v3930
        %v3932 = vpop.f32.mrf.mxu0
        %v3933 = vadd.f32 %v3870, %v3932
        %3934 = vmatmul.bf16.gmra.mxu0 %v3750
        %v3935 = vpop.f32.mrf.mxu0
        %v3936 = vadd.f32 %v3873, %v3935
        %v3937 = vpop.f32.mrf.mxu0
        %v3938 = vadd.f32 %v3875, %v3937
        %3939 = vmatmul.bf16.gmra.mxu0 %v3753
        %v3940 = vpop.f32.mrf.mxu0
        %v3941 = vadd.f32 %v3878, %v3940
        %v3942 = vpop.f32.mrf.mxu0
        %3943 = vdwg.mxu0
        %3944 = vmatpush.bf16.msra.mxu0 %v1760
        %3945 = vmatpush.bf16.msra.mxu0 %v1758
        %3946 = vmatpush.bf16.msra.mxu0 %v1756
        %3947 = vmatpush.bf16.msra.mxu0 %v1754
        %3948 = vmatpush.bf16.msra.mxu0 %v1752
        %3949 = vmatpush.bf16.msra.mxu0 %v1750
        %3950 = vmatpush.bf16.msra.mxu0 %v1748
        %3951 = vmatpush.bf16.msra.mxu0 %v1746
        %3952 = vmatmul.bf16.gmra.mxu0 %v528
        %v3953 = vpop.f32.mrf.mxu0
        %v3954 = vadd.f32 0.0, %v3953
        %v3955 = vpop.f32.mrf.mxu0
        %v3956 = vadd.f32 0.0, %v3955
        %3957 = vmatmul.bf16.gmra.mxu0 %v531
        %v3958 = vpop.f32.mrf.mxu0
        %v3959 = vadd.f32 0.0, %v3958
        %v3960 = vpop.f32.mrf.mxu0
        %v3961 = vadd.f32 0.0, %v3960
        %3962 = vmatmul.bf16.gmra.mxu0 %v534
        %v3963 = vpop.f32.mrf.mxu0
        %v3964 = vadd.f32 0.0, %v3963
        %v3965 = vpop.f32.mrf.mxu0
        %v3966 = vadd.f32 0.0, %v3965
        %3967 = vmatmul.bf16.gmra.mxu0 %v537
        %v3968 = vpop.f32.mrf.mxu0
        %v3969 = vadd.f32 0.0, %v3968
        %v3970 = vpop.f32.mrf.mxu0
        %v3971 = vadd.f32 0.0, %v3970
        %3972 = vmatmul.bf16.gmra.mxu0 %v540
        %v3973 = vpop.f32.mrf.mxu0
        %v3974 = vadd.f32 0.0, %v3973
        %v3975 = vpop.f32.mrf.mxu0
        %v3976 = vadd.f32 0.0, %v3975
        %3977 = vmatmul.bf16.gmra.mxu0 %v543
        %v3978 = vpop.f32.mrf.mxu0
        %v3979 = vadd.f32 0.0, %v3978
        %v3980 = vpop.f32.mrf.mxu0
        %v3981 = vadd.f32 0.0, %v3980
        %3982 = vmatmul.bf16.gmra.mxu0 %v546
        %v3983 = vpop.f32.mrf.mxu0
        %v3984 = vadd.f32 0.0, %v3983
        %v3985 = vpop.f32.mrf.mxu0
        %v3986 = vadd.f32 0.0, %v3985
        %3987 = vmatmul.bf16.gmra.mxu0 %v549
        %v3988 = vpop.f32.mrf.mxu0
        %v3989 = vadd.f32 0.0, %v3988
        %v3990 = vpop.f32.mrf.mxu0
        %v3991 = vadd.f32 0.0, %v3990
        %3992 = vmatmul.bf16.gmra.mxu0 %v552
        %v3993 = vpop.f32.mrf.mxu0
        %v3994 = vadd.f32 0.0, %v3993
        %v3995 = vpop.f32.mrf.mxu0
        %v3996 = vadd.f32 0.0, %v3995
        %3997 = vmatmul.bf16.gmra.mxu0 %v555
        %v3998 = vpop.f32.mrf.mxu0
        %v3999 = vadd.f32 0.0, %v3998
        %v4000 = vpop.f32.mrf.mxu0
        %v4001 = vadd.f32 0.0, %v4000
        %4002 = vmatmul.bf16.gmra.mxu0 %v558
        %v4003 = vpop.f32.mrf.mxu0
        %v4004 = vadd.f32 0.0, %v4003
        %v4005 = vpop.f32.mrf.mxu0
        %4006 = vdwg.mxu0
        %4007 = vmatpush.bf16.msra.mxu0 %v1776
        %4008 = vmatpush.bf16.msra.mxu0 %v1774
        %4009 = vmatpush.bf16.msra.mxu0 %v1772
        %4010 = vmatpush.bf16.msra.mxu0 %v1770
        %4011 = vmatpush.bf16.msra.mxu0 %v1768
        %4012 = vmatpush.bf16.msra.mxu0 %v1766
        %4013 = vmatpush.bf16.msra.mxu0 %v1764
        %4014 = vmatpush.bf16.msra.mxu0 %v1762
        %4015 = vmatmul.bf16.gmra.mxu0 %v529
        %v4016 = vpop.f32.mrf.mxu0
        %v4017 = vadd.f32 %v3954, %v4016
        %v4018 = vpop.f32.mrf.mxu0
        %v4019 = vadd.f32 %v3956, %v4018
        %4020 = vmatmul.bf16.gmra.mxu0 %v532
        %v4021 = vpop.f32.mrf.mxu0
        %v4022 = vadd.f32 %v3959, %v4021
        %v4023 = vpop.f32.mrf.mxu0
        %v4024 = vadd.f32 %v3961, %v4023
        %4025 = vmatmul.bf16.gmra.mxu0 %v535
        %v4026 = vpop.f32.mrf.mxu0
        %v4027 = vadd.f32 %v3964, %v4026
        %v4028 = vpop.f32.mrf.mxu0
        %v4029 = vadd.f32 %v3966, %v4028
        %4030 = vmatmul.bf16.gmra.mxu0 %v538
        %v4031 = vpop.f32.mrf.mxu0
        %v4032 = vadd.f32 %v3969, %v4031
        %v4033 = vpop.f32.mrf.mxu0
        %v4034 = vadd.f32 %v3971, %v4033
        %4035 = vmatmul.bf16.gmra.mxu0 %v541
        %v4036 = vpop.f32.mrf.mxu0
        %v4037 = vadd.f32 %v3974, %v4036
        %v4038 = vpop.f32.mrf.mxu0
        %v4039 = vadd.f32 %v3976, %v4038
        %4040 = vmatmul.bf16.gmra.mxu0 %v544
        %v4041 = vpop.f32.mrf.mxu0
        %v4042 = vadd.f32 %v3979, %v4041
        %v4043 = vpop.f32.mrf.mxu0
        %v4044 = vadd.f32 %v3981, %v4043
        %4045 = vmatmul.bf16.gmra.mxu0 %v547
        %v4046 = vpop.f32.mrf.mxu0
        %v4047 = vadd.f32 %v3984, %v4046
        %v4048 = vpop.f32.mrf.mxu0
        %v4049 = vadd.f32 %v3986, %v4048
        %4050 = vmatmul.bf16.gmra.mxu0 %v550
        %v4051 = vpop.f32.mrf.mxu0
        %v4052 = vadd.f32 %v3989, %v4051
        %v4053 = vpop.f32.mrf.mxu0
        %v4054 = vadd.f32 %v3991, %v4053
        %4055 = vmatmul.bf16.gmra.mxu0 %v553
        %v4056 = vpop.f32.mrf.mxu0
        %v4057 = vadd.f32 %v3994, %v4056
        %v4058 = vpop.f32.mrf.mxu0
        %v4059 = vadd.f32 %v3996, %v4058
        %4060 = vmatmul.bf16.gmra.mxu0 %v556
        %v4061 = vpop.f32.mrf.mxu0
        %v4062 = vadd.f32 %v3999, %v4061
        %v4063 = vpop.f32.mrf.mxu0
        %v4064 = vadd.f32 %v4001, %v4063
        %4065 = vmatmul.bf16.gmra.mxu0 %v559
        %v4066 = vpop.f32.mrf.mxu0
        %v4067 = vadd.f32 %v4004, %v4066
        %v4068 = vpop.f32.mrf.mxu0
        %4069 = vdwg.mxu0
        %4070 = vmatpush.bf16.msra.mxu0 0
        %4071 = vmatpush.bf16.msra.mxu0 0
        %4072 = vmatpush.bf16.msra.mxu0 0
        %4073 = vmatpush.bf16.msra.mxu0 0
        %4074 = vmatpush.bf16.msra.mxu0 %v1784
        %4075 = vmatpush.bf16.msra.mxu0 %v1782
        %4076 = vmatpush.bf16.msra.mxu0 %v1780
        %4077 = vmatpush.bf16.msra.mxu0 %v1778
        %4078 = vmatmul.bf16.gmra.mxu0 %v3723
        %v4079 = vpop.f32.mrf.mxu0
        %v4080 = vadd.f32 %v4017, %v4079
        %v4081 = vpop.f32.mrf.mxu0
        %v4082 = vadd.f32 %v4019, %v4081
        %4083 = vmatmul.bf16.gmra.mxu0 %v3726
        %v4084 = vpop.f32.mrf.mxu0
        %v4085 = vadd.f32 %v4022, %v4084
        %v4086 = vpop.f32.mrf.mxu0
        %v4087 = vadd.f32 %v4024, %v4086
        %4088 = vmatmul.bf16.gmra.mxu0 %v3729
        %v4089 = vpop.f32.mrf.mxu0
        %v4090 = vadd.f32 %v4027, %v4089
        %v4091 = vpop.f32.mrf.mxu0
        %v4092 = vadd.f32 %v4029, %v4091
        %4093 = vmatmul.bf16.gmra.mxu0 %v3732
        %v4094 = vpop.f32.mrf.mxu0
        %v4095 = vadd.f32 %v4032, %v4094
        %v4096 = vpop.f32.mrf.mxu0
        %v4097 = vadd.f32 %v4034, %v4096
        %4098 = vmatmul.bf16.gmra.mxu0 %v3735
        %v4099 = vpop.f32.mrf.mxu0
        %v4100 = vadd.f32 %v4037, %v4099
        %v4101 = vpop.f32.mrf.mxu0
        %v4102 = vadd.f32 %v4039, %v4101
        %4103 = vmatmul.bf16.gmra.mxu0 %v3738
        %v4104 = vpop.f32.mrf.mxu0
        %v4105 = vadd.f32 %v4042, %v4104
        %v4106 = vpop.f32.mrf.mxu0
        %v4107 = vadd.f32 %v4044, %v4106
        %4108 = vmatmul.bf16.gmra.mxu0 %v3741
        %v4109 = vpop.f32.mrf.mxu0
        %v4110 = vadd.f32 %v4047, %v4109
        %v4111 = vpop.f32.mrf.mxu0
        %v4112 = vadd.f32 %v4049, %v4111
        %4113 = vmatmul.bf16.gmra.mxu0 %v3744
        %v4114 = vpop.f32.mrf.mxu0
        %v4115 = vadd.f32 %v4052, %v4114
        %v4116 = vpop.f32.mrf.mxu0
        %v4117 = vadd.f32 %v4054, %v4116
        %4118 = vmatmul.bf16.gmra.mxu0 %v3747
        %v4119 = vpop.f32.mrf.mxu0
        %v4120 = vadd.f32 %v4057, %v4119
        %v4121 = vpop.f32.mrf.mxu0
        %v4122 = vadd.f32 %v4059, %v4121
        %4123 = vmatmul.bf16.gmra.mxu0 %v3750
        %v4124 = vpop.f32.mrf.mxu0
        %v4125 = vadd.f32 %v4062, %v4124
        %v4126 = vpop.f32.mrf.mxu0
        %v4127 = vadd.f32 %v4064, %v4126
        %4128 = vmatmul.bf16.gmra.mxu0 %v3753
        %v4129 = vpop.f32.mrf.mxu0
        %v4130 = vadd.f32 %v4067, %v4129
        %v4131 = vpop.f32.mrf.mxu0
        %4132 = vdwg.mxu0
        %v4133 = vadd.f32 %v3680, %v3891
        %v4134 = vadd.f32 %v3681, %v4080
        %v4135 = vadd.f32 %v3682, %v3893
        %v4136 = vadd.f32 %v3683, %v4082
        %v4137 = vadd.f32 %v3684, %v3896
        %v4138 = vadd.f32 %v3685, %v4085
        %v4139 = vadd.f32 %v3686, %v3898
        %v4140 = vadd.f32 %v3687, %v4087
        %v4141 = vadd.f32 %v3688, %v3901
        %v4142 = vadd.f32 %v3689, %v4090
        %v4143 = vadd.f32 %v3690, %v3903
        %v4144 = vadd.f32 %v3691, %v4092
        %v4145 = vadd.f32 %v3692, %v3906
        %v4146 = vadd.f32 %v3693, %v4095
        %v4147 = vadd.f32 %v3694, %v3908
        %v4148 = vadd.f32 %v3695, %v4097
        %v4149 = vadd.f32 %v3696, %v3911
        %v4150 = vadd.f32 %v3697, %v4100
        %v4151 = vadd.f32 %v3698, %v3913
        %v4152 = vadd.f32 %v3699, %v4102
        %v4153 = vadd.f32 %v3700, %v3916
        %v4154 = vadd.f32 %v3701, %v4105
        %v4155 = vadd.f32 %v3702, %v3918
        %v4156 = vadd.f32 %v3703, %v4107
        %v4157 = vadd.f32 %v3704, %v3921
        %v4158 = vadd.f32 %v3705, %v4110
        %v4159 = vadd.f32 %v3706, %v3923
        %v4160 = vadd.f32 %v3707, %v4112
        %v4161 = vadd.f32 %v3708, %v3926
        %v4162 = vadd.f32 %v3709, %v4115
        %v4163 = vadd.f32 %v3710, %v3928
        %v4164 = vadd.f32 %v3711, %v4117
        %v4165 = vadd.f32 %v3712, %v3931
        %v4166 = vadd.f32 %v3713, %v4120
        %v4167 = vadd.f32 %v3714, %v3933
        %v4168 = vadd.f32 %v3715, %v4122
        %v4169 = vadd.f32 %v3716, %v3936
        %v4170 = vadd.f32 %v3717, %v4125
        %v4171 = vadd.f32 %v3718, %v3938
        %v4172 = vadd.f32 %v3719, %v4127
        %v4173 = vadd.f32 %v3720, %v3941
        %v4174 = vadd.f32 %v3721, %v4130
        %4175 = vst [vmem:[%s292] sm:$0xff] %v4133
        %4176 = vst [vmem:[%s292 + $0x8] sm:$0xff] %v4134
        %4177 = vst [vmem:[%s292 + $0x10] sm:$0xff] %v4135
        %4178 = vst [vmem:[%s292 + $0x18] sm:$0xff] %v4136
        %4179 = vst [vmem:[%s292 + $0x20] sm:$0xff] %v4137
        %4180 = vst [vmem:[%s292 + $0x28] sm:$0xff] %v4138
        %4181 = vst [vmem:[%s292 + $0x30] sm:$0xff] %v4139
        %4182 = vst [vmem:[%s292 + $0x38] sm:$0xff] %v4140
        %4183 = vst [vmem:[%s292 + $0x40] sm:$0xff] %v4141
        %4184 = vst [vmem:[%s292 + $0x48] sm:$0xff] %v4142
        %4185 = vst [vmem:[%s292 + $0x50] sm:$0xff] %v4143
        %4186 = vst [vmem:[%s292 + $0x58] sm:$0xff] %v4144
        %4187 = vst [vmem:[%s292 + $0x60] sm:$0xff] %v4145
        %4188 = vst [vmem:[%s292 + $0x68] sm:$0xff] %v4146
        %4189 = vst [vmem:[%s292 + $0x70] sm:$0xff] %v4147
        %4190 = vst [vmem:[%s292 + $0x78] sm:$0xff] %v4148
        %4191 = vst [vmem:[%s292 + $0x80] sm:$0xff] %v4149
        %4192 = vst [vmem:[%s292 + $0x88] sm:$0xff] %v4150
        %4193 = vst [vmem:[%s292 + $0x90] sm:$0xff] %v4151
        %4194 = vst [vmem:[%s292 + $0x98] sm:$0xff] %v4152
        %4195 = vst [vmem:[%s292 + $0xa0] sm:$0xff] %v4153
        %4196 = vst [vmem:[%s292 + $0xa8] sm:$0xff] %v4154
        %4197 = vst [vmem:[%s292 + $0xb0] sm:$0xff] %v4155
        %4198 = vst [vmem:[%s292 + $0xb8] sm:$0xff] %v4156
        %4199 = vst [vmem:[%s292 + $0xc0] sm:$0xff] %v4157
        %4200 = vst [vmem:[%s292 + $0xc8] sm:$0xff] %v4158
        %4201 = vst [vmem:[%s292 + $0xd0] sm:$0xff] %v4159
        %4202 = vst [vmem:[%s292 + $0xd8] sm:$0xff] %v4160
        %4203 = vst [vmem:[%s292 + $0xe0] sm:$0xff] %v4161
        %4204 = vst [vmem:[%s292 + $0xe8] sm:$0xff] %v4162
        %4205 = vst [vmem:[%s292 + $0xf0] sm:$0xff] %v4163
        %4206 = vst [vmem:[%s292 + $0xf8] sm:$0xff] %v4164
        %4207 = vst [vmem:[%s292 + $0x100] sm:$0xff] %v4165
        %4208 = vst [vmem:[%s292 + $0x108] sm:$0xff] %v4166
        %4209 = vst [vmem:[%s292 + $0x110] sm:$0xff] %v4167
        %4210 = vst [vmem:[%s292 + $0x118] sm:$0xff] %v4168
        %4211 = vst [vmem:[%s292 + $0x120] sm:$0xff] %v4169
        %4212 = vst [vmem:[%s292 + $0x128] sm:$0xff] %v4170
        %4213 = vst [vmem:[%s292 + $0x130] sm:$0xff] %v4171
        %4214 = vst [vmem:[%s292 + $0x138] sm:$0xff] %v4172
        %4215 = vst [vmem:[%s292 + $0x140] sm:$0x3f] %v4173
        %4216 = vst [vmem:[%s292 + $0x148] sm:$0x3f] %v4174
        %v4217 = vld [vmem:[%s292] sm:$0xff]
        %v4218 = vld [vmem:[%s292 + $0x8] sm:$0xff]
        %v4219 = vld [vmem:[%s292 + $0x10] sm:$0xff]
        %v4220 = vld [vmem:[%s292 + $0x18] sm:$0xff]
        %v4221 = vld [vmem:[%s292 + $0x20] sm:$0xff]
        %v4222 = vld [vmem:[%s292 + $0x28] sm:$0xff]
        %v4223 = vld [vmem:[%s292 + $0x30] sm:$0xff]
        %v4224 = vld [vmem:[%s292 + $0x38] sm:$0xff]
        %v4225 = vld [vmem:[%s292 + $0x40] sm:$0xff]
        %v4226 = vld [vmem:[%s292 + $0x48] sm:$0xff]
        %v4227 = vld [vmem:[%s292 + $0x50] sm:$0xff]
        %v4228 = vld [vmem:[%s292 + $0x58] sm:$0xff]
        %v4229 = vld [vmem:[%s292 + $0x60] sm:$0xff]
        %v4230 = vld [vmem:[%s292 + $0x68] sm:$0xff]
        %v4231 = vld [vmem:[%s292 + $0x70] sm:$0xff]
        %v4232 = vld [vmem:[%s292 + $0x78] sm:$0xff]
        %v4233 = vld [vmem:[%s292 + $0x80] sm:$0xff]
        %v4234 = vld [vmem:[%s292 + $0x88] sm:$0xff]
        %v4235 = vld [vmem:[%s292 + $0x90] sm:$0xff]
        %v4236 = vld [vmem:[%s292 + $0x98] sm:$0xff]
        %v4237 = vld [vmem:[%s292 + $0xa0] sm:$0xff]
        %v4238 = vld [vmem:[%s292 + $0xa8] sm:$0xff]
        %v4239 = vld [vmem:[%s292 + $0xb0] sm:$0xff]
        %v4240 = vld [vmem:[%s292 + $0xb8] sm:$0xff]
        %v4241 = vld [vmem:[%s292 + $0xc0] sm:$0xff]
        %v4242 = vld [vmem:[%s292 + $0xc8] sm:$0xff]
        %v4243 = vld [vmem:[%s292 + $0xd0] sm:$0xff]
        %v4244 = vld [vmem:[%s292 + $0xd8] sm:$0xff]
        %v4245 = vld [vmem:[%s292 + $0xe0] sm:$0xff]
        %v4246 = vld [vmem:[%s292 + $0xe8] sm:$0xff]
        %v4247 = vld [vmem:[%s292 + $0xf0] sm:$0xff]
        %v4248 = vld [vmem:[%s292 + $0xf8] sm:$0xff]
        %v4249 = vld [vmem:[%s292 + $0x100] sm:$0xff]
        %v4250 = vld [vmem:[%s292 + $0x108] sm:$0xff]
        %v4251 = vld [vmem:[%s292 + $0x110] sm:$0xff]
        %v4252 = vld [vmem:[%s292 + $0x118] sm:$0xff]
        %v4253 = vld [vmem:[%s292 + $0x120] sm:$0xff]
        %v4254 = vld [vmem:[%s292 + $0x128] sm:$0xff]
        %v4255 = vld [vmem:[%s292 + $0x130] sm:$0xff]
        %v4256 = vld [vmem:[%s292 + $0x138] sm:$0xff]
        %v4257 = vld [vmem:[%s292 + $0x140] sm:$0x3f]
        %v4258 = vld [vmem:[%s292 + $0x148] sm:$0x3f]
        %4259 = vmatpush.bf16.msra.mxu0 %v1439
        %4260 = vmatpush.bf16.msra.mxu0 %v1437
        %4261 = vmatpush.bf16.msra.mxu0 %v1435
        %4262 = vmatpush.bf16.msra.mxu0 %v1433
        %4263 = vmatpush.bf16.msra.mxu0 %v1431
        %4264 = vmatpush.bf16.msra.mxu0 %v1429
        %4265 = vmatpush.bf16.msra.mxu0 %v1427
        %4266 = vmatpush.bf16.msra.mxu0 %v1425
        %4267 = vmatmul.bf16.gmra.mxu0 %v2426
        %v4268 = vpop.f32.mrf.mxu0
        %v4269 = vadd.f32 0.0, %v4268
        %v4270 = vpop.f32.mrf.mxu0
        %v4271 = vadd.f32 0.0, %v4270
        %4272 = vmatmul.bf16.gmra.mxu0 %v2429
        %v4273 = vpop.f32.mrf.mxu0
        %v4274 = vadd.f32 0.0, %v4273
        %v4275 = vpop.f32.mrf.mxu0
        %v4276 = vadd.f32 0.0, %v4275
        %4277 = vmatmul.bf16.gmra.mxu0 %v2432
        %v4278 = vpop.f32.mrf.mxu0
        %v4279 = vadd.f32 0.0, %v4278
        %v4280 = vpop.f32.mrf.mxu0
        %v4281 = vadd.f32 0.0, %v4280
        %4282 = vmatmul.bf16.gmra.mxu0 %v2435
        %v4283 = vpop.f32.mrf.mxu0
        %v4284 = vadd.f32 0.0, %v4283
        %v4285 = vpop.f32.mrf.mxu0
        %v4286 = vadd.f32 0.0, %v4285
        %4287 = vmatmul.bf16.gmra.mxu0 %v2438
        %v4288 = vpop.f32.mrf.mxu0
        %v4289 = vadd.f32 0.0, %v4288
        %v4290 = vpop.f32.mrf.mxu0
        %v4291 = vadd.f32 0.0, %v4290
        %4292 = vmatmul.bf16.gmra.mxu0 %v2441
        %v4293 = vpop.f32.mrf.mxu0
        %v4294 = vadd.f32 0.0, %v4293
        %v4295 = vpop.f32.mrf.mxu0
        %v4296 = vadd.f32 0.0, %v4295
        %4297 = vmatmul.bf16.gmra.mxu0 %v2444
        %v4298 = vpop.f32.mrf.mxu0
        %v4299 = vadd.f32 0.0, %v4298
        %v4300 = vpop.f32.mrf.mxu0
        %v4301 = vadd.f32 0.0, %v4300
        %4302 = vmatmul.bf16.gmra.mxu0 %v2447
        %v4303 = vpop.f32.mrf.mxu0
        %v4304 = vadd.f32 0.0, %v4303
        %v4305 = vpop.f32.mrf.mxu0
        %v4306 = vadd.f32 0.0, %v4305
        %4307 = vmatmul.bf16.gmra.mxu0 %v2450
        %v4308 = vpop.f32.mrf.mxu0
        %v4309 = vadd.f32 0.0, %v4308
        %v4310 = vpop.f32.mrf.mxu0
        %v4311 = vadd.f32 0.0, %v4310
        %4312 = vmatmul.bf16.gmra.mxu0 %v2453
        %v4313 = vpop.f32.mrf.mxu0
        %v4314 = vadd.f32 0.0, %v4313
        %v4315 = vpop.f32.mrf.mxu0
        %v4316 = vadd.f32 0.0, %v4315
        %4317 = vmatmul.bf16.gmra.mxu0 %v2456
        %v4318 = vpop.f32.mrf.mxu0
        %v4319 = vadd.f32 0.0, %v4318
        %v4320 = vpop.f32.mrf.mxu0
        %4321 = vdwg.mxu0
        %4322 = vmatpush.bf16.msra.mxu0 %v1455
        %4323 = vmatpush.bf16.msra.mxu0 %v1453
        %4324 = vmatpush.bf16.msra.mxu0 %v1451
        %4325 = vmatpush.bf16.msra.mxu0 %v1449
        %4326 = vmatpush.bf16.msra.mxu0 %v1447
        %4327 = vmatpush.bf16.msra.mxu0 %v1445
        %4328 = vmatpush.bf16.msra.mxu0 %v1443
        %4329 = vmatpush.bf16.msra.mxu0 %v1441
        %4330 = vmatmul.bf16.gmra.mxu0 %v2427
        %v4331 = vpop.f32.mrf.mxu0
        %v4332 = vadd.f32 %v4269, %v4331
        %v4333 = vpop.f32.mrf.mxu0
        %v4334 = vadd.f32 %v4271, %v4333
        %4335 = vmatmul.bf16.gmra.mxu0 %v2430
        %v4336 = vpop.f32.mrf.mxu0
        %v4337 = vadd.f32 %v4274, %v4336
        %v4338 = vpop.f32.mrf.mxu0
        %v4339 = vadd.f32 %v4276, %v4338
        %4340 = vmatmul.bf16.gmra.mxu0 %v2433
        %v4341 = vpop.f32.mrf.mxu0
        %v4342 = vadd.f32 %v4279, %v4341
        %v4343 = vpop.f32.mrf.mxu0
        %v4344 = vadd.f32 %v4281, %v4343
        %4345 = vmatmul.bf16.gmra.mxu0 %v2436
        %v4346 = vpop.f32.mrf.mxu0
        %v4347 = vadd.f32 %v4284, %v4346
        %v4348 = vpop.f32.mrf.mxu0
        %v4349 = vadd.f32 %v4286, %v4348
        %4350 = vmatmul.bf16.gmra.mxu0 %v2439
        %v4351 = vpop.f32.mrf.mxu0
        %v4352 = vadd.f32 %v4289, %v4351
        %v4353 = vpop.f32.mrf.mxu0
        %v4354 = vadd.f32 %v4291, %v4353
        %4355 = vmatmul.bf16.gmra.mxu0 %v2442
        %v4356 = vpop.f32.mrf.mxu0
        %v4357 = vadd.f32 %v4294, %v4356
        %v4358 = vpop.f32.mrf.mxu0
        %v4359 = vadd.f32 %v4296, %v4358
        %4360 = vmatmul.bf16.gmra.mxu0 %v2445
        %v4361 = vpop.f32.mrf.mxu0
        %v4362 = vadd.f32 %v4299, %v4361
        %v4363 = vpop.f32.mrf.mxu0
        %v4364 = vadd.f32 %v4301, %v4363
        %4365 = vmatmul.bf16.gmra.mxu0 %v2448
        %v4366 = vpop.f32.mrf.mxu0
        %v4367 = vadd.f32 %v4304, %v4366
        %v4368 = vpop.f32.mrf.mxu0
        %v4369 = vadd.f32 %v4306, %v4368
        %4370 = vmatmul.bf16.gmra.mxu0 %v2451
        %v4371 = vpop.f32.mrf.mxu0
        %v4372 = vadd.f32 %v4309, %v4371
        %v4373 = vpop.f32.mrf.mxu0
        %v4374 = vadd.f32 %v4311, %v4373
        %4375 = vmatmul.bf16.gmra.mxu0 %v2454
        %v4376 = vpop.f32.mrf.mxu0
        %v4377 = vadd.f32 %v4314, %v4376
        %v4378 = vpop.f32.mrf.mxu0
        %v4379 = vadd.f32 %v4316, %v4378
        %4380 = vmatmul.bf16.gmra.mxu0 %v2457
        %v4381 = vpop.f32.mrf.mxu0
        %v4382 = vadd.f32 %v4319, %v4381
        %v4383 = vpop.f32.mrf.mxu0
        %4384 = vdwg.mxu0
        %4385 = vmatpush.bf16.msra.mxu0 0
        %4386 = vmatpush.bf16.msra.mxu0 0
        %4387 = vmatpush.bf16.msra.mxu0 0
        %4388 = vmatpush.bf16.msra.mxu0 0
        %4389 = vmatpush.bf16.msra.mxu0 %v1463
        %4390 = vmatpush.bf16.msra.mxu0 %v1461
        %4391 = vmatpush.bf16.msra.mxu0 %v1459
        %4392 = vmatpush.bf16.msra.mxu0 %v1457
        %4393 = vmatmul.bf16.gmra.mxu0 %v2682
        %v4394 = vpop.f32.mrf.mxu0
        %v4395 = vadd.f32 %v4332, %v4394
        %v4396 = vpop.f32.mrf.mxu0
        %v4397 = vadd.f32 %v4334, %v4396
        %4398 = vmatmul.bf16.gmra.mxu0 %v2685
        %v4399 = vpop.f32.mrf.mxu0
        %v4400 = vadd.f32 %v4337, %v4399
        %v4401 = vpop.f32.mrf.mxu0
        %v4402 = vadd.f32 %v4339, %v4401
        %4403 = vmatmul.bf16.gmra.mxu0 %v2688
        %v4404 = vpop.f32.mrf.mxu0
        %v4405 = vadd.f32 %v4342, %v4404
        %v4406 = vpop.f32.mrf.mxu0
        %v4407 = vadd.f32 %v4344, %v4406
        %4408 = vmatmul.bf16.gmra.mxu0 %v2691
        %v4409 = vpop.f32.mrf.mxu0
        %v4410 = vadd.f32 %v4347, %v4409
        %v4411 = vpop.f32.mrf.mxu0
        %v4412 = vadd.f32 %v4349, %v4411
        %4413 = vmatmul.bf16.gmra.mxu0 %v2694
        %v4414 = vpop.f32.mrf.mxu0
        %v4415 = vadd.f32 %v4352, %v4414
        %v4416 = vpop.f32.mrf.mxu0
        %v4417 = vadd.f32 %v4354, %v4416
        %4418 = vmatmul.bf16.gmra.mxu0 %v2697
        %v4419 = vpop.f32.mrf.mxu0
        %v4420 = vadd.f32 %v4357, %v4419
        %v4421 = vpop.f32.mrf.mxu0
        %v4422 = vadd.f32 %v4359, %v4421
        %4423 = vmatmul.bf16.gmra.mxu0 %v2700
        %v4424 = vpop.f32.mrf.mxu0
        %v4425 = vadd.f32 %v4362, %v4424
        %v4426 = vpop.f32.mrf.mxu0
        %v4427 = vadd.f32 %v4364, %v4426
        %4428 = vmatmul.bf16.gmra.mxu0 %v2703
        %v4429 = vpop.f32.mrf.mxu0
        %v4430 = vadd.f32 %v4367, %v4429
        %v4431 = vpop.f32.mrf.mxu0
        %v4432 = vadd.f32 %v4369, %v4431
        %4433 = vmatmul.bf16.gmra.mxu0 %v2706
        %v4434 = vpop.f32.mrf.mxu0
        %v4435 = vadd.f32 %v4372, %v4434
        %v4436 = vpop.f32.mrf.mxu0
        %v4437 = vadd.f32 %v4374, %v4436
        %4438 = vmatmul.bf16.gmra.mxu0 %v2709
        %v4439 = vpop.f32.mrf.mxu0
        %v4440 = vadd.f32 %v4377, %v4439
        %v4441 = vpop.f32.mrf.mxu0
        %v4442 = vadd.f32 %v4379, %v4441
        %4443 = vmatmul.bf16.gmra.mxu0 %v2712
        %v4444 = vpop.f32.mrf.mxu0
        %v4445 = vadd.f32 %v4382, %v4444
        %v4446 = vpop.f32.mrf.mxu0
        %4447 = vdwg.mxu0
        %4448 = vmatpush.bf16.msra.mxu0 %v1440
        %4449 = vmatpush.bf16.msra.mxu0 %v1438
        %4450 = vmatpush.bf16.msra.mxu0 %v1436
        %4451 = vmatpush.bf16.msra.mxu0 %v1434
        %4452 = vmatpush.bf16.msra.mxu0 %v1432
        %4453 = vmatpush.bf16.msra.mxu0 %v1430
        %4454 = vmatpush.bf16.msra.mxu0 %v1428
        %4455 = vmatpush.bf16.msra.mxu0 %v1426
        %4456 = vmatmul.bf16.gmra.mxu0 %v2426
        %v4457 = vpop.f32.mrf.mxu0
        %v4458 = vadd.f32 0.0, %v4457
        %v4459 = vpop.f32.mrf.mxu0
        %v4460 = vadd.f32 0.0, %v4459
        %4461 = vmatmul.bf16.gmra.mxu0 %v2429
        %v4462 = vpop.f32.mrf.mxu0
        %v4463 = vadd.f32 0.0, %v4462
        %v4464 = vpop.f32.mrf.mxu0
        %v4465 = vadd.f32 0.0, %v4464
        %4466 = vmatmul.bf16.gmra.mxu0 %v2432
        %v4467 = vpop.f32.mrf.mxu0
        %v4468 = vadd.f32 0.0, %v4467
        %v4469 = vpop.f32.mrf.mxu0
        %v4470 = vadd.f32 0.0, %v4469
        %4471 = vmatmul.bf16.gmra.mxu0 %v2435
        %v4472 = vpop.f32.mrf.mxu0
        %v4473 = vadd.f32 0.0, %v4472
        %v4474 = vpop.f32.mrf.mxu0
        %v4475 = vadd.f32 0.0, %v4474
        %4476 = vmatmul.bf16.gmra.mxu0 %v2438
        %v4477 = vpop.f32.mrf.mxu0
        %v4478 = vadd.f32 0.0, %v4477
        %v4479 = vpop.f32.mrf.mxu0
        %v4480 = vadd.f32 0.0, %v4479
        %4481 = vmatmul.bf16.gmra.mxu0 %v2441
        %v4482 = vpop.f32.mrf.mxu0
        %v4483 = vadd.f32 0.0, %v4482
        %v4484 = vpop.f32.mrf.mxu0
        %v4485 = vadd.f32 0.0, %v4484
        %4486 = vmatmul.bf16.gmra.mxu0 %v2444
        %v4487 = vpop.f32.mrf.mxu0
        %v4488 = vadd.f32 0.0, %v4487
        %v4489 = vpop.f32.mrf.mxu0
        %v4490 = vadd.f32 0.0, %v4489
        %4491 = vmatmul.bf16.gmra.mxu0 %v2447
        %v4492 = vpop.f32.mrf.mxu0
        %v4493 = vadd.f32 0.0, %v4492
        %v4494 = vpop.f32.mrf.mxu0
        %v4495 = vadd.f32 0.0, %v4494
        %4496 = vmatmul.bf16.gmra.mxu0 %v2450
        %v4497 = vpop.f32.mrf.mxu0
        %v4498 = vadd.f32 0.0, %v4497
        %v4499 = vpop.f32.mrf.mxu0
        %v4500 = vadd.f32 0.0, %v4499
        %4501 = vmatmul.bf16.gmra.mxu0 %v2453
        %v4502 = vpop.f32.mrf.mxu0
        %v4503 = vadd.f32 0.0, %v4502
        %v4504 = vpop.f32.mrf.mxu0
        %v4505 = vadd.f32 0.0, %v4504
        %4506 = vmatmul.bf16.gmra.mxu0 %v2456
        %v4507 = vpop.f32.mrf.mxu0
        %v4508 = vadd.f32 0.0, %v4507
        %v4509 = vpop.f32.mrf.mxu0
        %4510 = vdwg.mxu0
        %4511 = vmatpush.bf16.msra.mxu0 %v1456
        %4512 = vmatpush.bf16.msra.mxu0 %v1454
        %4513 = vmatpush.bf16.msra.mxu0 %v1452
        %4514 = vmatpush.bf16.msra.mxu0 %v1450
        %4515 = vmatpush.bf16.msra.mxu0 %v1448
        %4516 = vmatpush.bf16.msra.mxu0 %v1446
        %4517 = vmatpush.bf16.msra.mxu0 %v1444
        %4518 = vmatpush.bf16.msra.mxu0 %v1442
        %4519 = vmatmul.bf16.gmra.mxu0 %v2427
        %v4520 = vpop.f32.mrf.mxu0
        %v4521 = vadd.f32 %v4458, %v4520
        %v4522 = vpop.f32.mrf.mxu0
        %v4523 = vadd.f32 %v4460, %v4522
        %4524 = vmatmul.bf16.gmra.mxu0 %v2430
        %v4525 = vpop.f32.mrf.mxu0
        %v4526 = vadd.f32 %v4463, %v4525
        %v4527 = vpop.f32.mrf.mxu0
        %v4528 = vadd.f32 %v4465, %v4527
        %4529 = vmatmul.bf16.gmra.mxu0 %v2433
        %v4530 = vpop.f32.mrf.mxu0
        %v4531 = vadd.f32 %v4468, %v4530
        %v4532 = vpop.f32.mrf.mxu0
        %v4533 = vadd.f32 %v4470, %v4532
        %4534 = vmatmul.bf16.gmra.mxu0 %v2436
        %v4535 = vpop.f32.mrf.mxu0
        %v4536 = vadd.f32 %v4473, %v4535
        %v4537 = vpop.f32.mrf.mxu0
        %v4538 = vadd.f32 %v4475, %v4537
        %4539 = vmatmul.bf16.gmra.mxu0 %v2439
        %v4540 = vpop.f32.mrf.mxu0
        %v4541 = vadd.f32 %v4478, %v4540
        %v4542 = vpop.f32.mrf.mxu0
        %v4543 = vadd.f32 %v4480, %v4542
        %4544 = vmatmul.bf16.gmra.mxu0 %v2442
        %v4545 = vpop.f32.mrf.mxu0
        %v4546 = vadd.f32 %v4483, %v4545
        %v4547 = vpop.f32.mrf.mxu0
        %v4548 = vadd.f32 %v4485, %v4547
        %4549 = vmatmul.bf16.gmra.mxu0 %v2445
        %v4550 = vpop.f32.mrf.mxu0
        %v4551 = vadd.f32 %v4488, %v4550
        %v4552 = vpop.f32.mrf.mxu0
        %v4553 = vadd.f32 %v4490, %v4552
        %4554 = vmatmul.bf16.gmra.mxu0 %v2448
        %v4555 = vpop.f32.mrf.mxu0
        %v4556 = vadd.f32 %v4493, %v4555
        %v4557 = vpop.f32.mrf.mxu0
        %v4558 = vadd.f32 %v4495, %v4557
        %4559 = vmatmul.bf16.gmra.mxu0 %v2451
        %v4560 = vpop.f32.mrf.mxu0
        %v4561 = vadd.f32 %v4498, %v4560
        %v4562 = vpop.f32.mrf.mxu0
        %v4563 = vadd.f32 %v4500, %v4562
        %4564 = vmatmul.bf16.gmra.mxu0 %v2454
        %v4565 = vpop.f32.mrf.mxu0
        %v4566 = vadd.f32 %v4503, %v4565
        %v4567 = vpop.f32.mrf.mxu0
        %v4568 = vadd.f32 %v4505, %v4567
        %4569 = vmatmul.bf16.gmra.mxu0 %v2457
        %v4570 = vpop.f32.mrf.mxu0
        %v4571 = vadd.f32 %v4508, %v4570
        %v4572 = vpop.f32.mrf.mxu0
        %4573 = vdwg.mxu0
        %4574 = vmatpush.bf16.msra.mxu0 0
        %4575 = vmatpush.bf16.msra.mxu0 0
        %4576 = vmatpush.bf16.msra.mxu0 0
        %4577 = vmatpush.bf16.msra.mxu0 0
        %4578 = vmatpush.bf16.msra.mxu0 %v1464
        %4579 = vmatpush.bf16.msra.mxu0 %v1462
        %4580 = vmatpush.bf16.msra.mxu0 %v1460
        %4581 = vmatpush.bf16.msra.mxu0 %v1458
        %4582 = vmatmul.bf16.gmra.mxu0 %v2682
        %v4583 = vpop.f32.mrf.mxu0
        %v4584 = vadd.f32 %v4521, %v4583
        %v4585 = vpop.f32.mrf.mxu0
        %v4586 = vadd.f32 %v4523, %v4585
        %4587 = vmatmul.bf16.gmra.mxu0 %v2685
        %v4588 = vpop.f32.mrf.mxu0
        %v4589 = vadd.f32 %v4526, %v4588
        %v4590 = vpop.f32.mrf.mxu0
        %v4591 = vadd.f32 %v4528, %v4590
        %4592 = vmatmul.bf16.gmra.mxu0 %v2688
        %v4593 = vpop.f32.mrf.mxu0
        %v4594 = vadd.f32 %v4531, %v4593
        %v4595 = vpop.f32.mrf.mxu0
        %v4596 = vadd.f32 %v4533, %v4595
        %4597 = vmatmul.bf16.gmra.mxu0 %v2691
        %v4598 = vpop.f32.mrf.mxu0
        %v4599 = vadd.f32 %v4536, %v4598
        %v4600 = vpop.f32.mrf.mxu0
        %v4601 = vadd.f32 %v4538, %v4600
        %4602 = vmatmul.bf16.gmra.mxu0 %v2694
        %v4603 = vpop.f32.mrf.mxu0
        %v4604 = vadd.f32 %v4541, %v4603
        %v4605 = vpop.f32.mrf.mxu0
        %v4606 = vadd.f32 %v4543, %v4605
        %4607 = vmatmul.bf16.gmra.mxu0 %v2697
        %v4608 = vpop.f32.mrf.mxu0
        %v4609 = vadd.f32 %v4546, %v4608
        %v4610 = vpop.f32.mrf.mxu0
        %v4611 = vadd.f32 %v4548, %v4610
        %4612 = vmatmul.bf16.gmra.mxu0 %v2700
        %v4613 = vpop.f32.mrf.mxu0
        %v4614 = vadd.f32 %v4551, %v4613
        %v4615 = vpop.f32.mrf.mxu0
        %v4616 = vadd.f32 %v4553, %v4615
        %4617 = vmatmul.bf16.gmra.mxu0 %v2703
        %v4618 = vpop.f32.mrf.mxu0
        %v4619 = vadd.f32 %v4556, %v4618
        %v4620 = vpop.f32.mrf.mxu0
        %v4621 = vadd.f32 %v4558, %v4620
        %4622 = vmatmul.bf16.gmra.mxu0 %v2706
        %v4623 = vpop.f32.mrf.mxu0
        %v4624 = vadd.f32 %v4561, %v4623
        %v4625 = vpop.f32.mrf.mxu0
        %v4626 = vadd.f32 %v4563, %v4625
        %4627 = vmatmul.bf16.gmra.mxu0 %v2709
        %v4628 = vpop.f32.mrf.mxu0
        %v4629 = vadd.f32 %v4566, %v4628
        %v4630 = vpop.f32.mrf.mxu0
        %v4631 = vadd.f32 %v4568, %v4630
        %4632 = vmatmul.bf16.gmra.mxu0 %v2712
        %v4633 = vpop.f32.mrf.mxu0
        %v4634 = vadd.f32 %v4571, %v4633
        %v4635 = vpop.f32.mrf.mxu0
        %4636 = vdwg.mxu0
        %v4637 = vadd.f32 %v4217, %v4395
        %v4638 = vadd.f32 %v4218, %v4584
        %v4639 = vadd.f32 %v4219, %v4397
        %v4640 = vadd.f32 %v4220, %v4586
        %v4641 = vadd.f32 %v4221, %v4400
        %v4642 = vadd.f32 %v4222, %v4589
        %v4643 = vadd.f32 %v4223, %v4402
        %v4644 = vadd.f32 %v4224, %v4591
        %v4645 = vadd.f32 %v4225, %v4405
        %v4646 = vadd.f32 %v4226, %v4594
        %v4647 = vadd.f32 %v4227, %v4407
        %v4648 = vadd.f32 %v4228, %v4596
        %v4649 = vadd.f32 %v4229, %v4410
        %v4650 = vadd.f32 %v4230, %v4599
        %v4651 = vadd.f32 %v4231, %v4412
        %v4652 = vadd.f32 %v4232, %v4601
        %v4653 = vadd.f32 %v4233, %v4415
        %v4654 = vadd.f32 %v4234, %v4604
        %v4655 = vadd.f32 %v4235, %v4417
        %v4656 = vadd.f32 %v4236, %v4606
        %v4657 = vadd.f32 %v4237, %v4420
        %v4658 = vadd.f32 %v4238, %v4609
        %v4659 = vadd.f32 %v4239, %v4422
        %v4660 = vadd.f32 %v4240, %v4611
        %v4661 = vadd.f32 %v4241, %v4425
        %v4662 = vadd.f32 %v4242, %v4614
        %v4663 = vadd.f32 %v4243, %v4427
        %v4664 = vadd.f32 %v4244, %v4616
        %v4665 = vadd.f32 %v4245, %v4430
        %v4666 = vadd.f32 %v4246, %v4619
        %v4667 = vadd.f32 %v4247, %v4432
        %v4668 = vadd.f32 %v4248, %v4621
        %v4669 = vadd.f32 %v4249, %v4435
        %v4670 = vadd.f32 %v4250, %v4624
        %v4671 = vadd.f32 %v4251, %v4437
        %v4672 = vadd.f32 %v4252, %v4626
        %v4673 = vadd.f32 %v4253, %v4440
        %v4674 = vadd.f32 %v4254, %v4629
        %v4675 = vadd.f32 %v4255, %v4442
        %v4676 = vadd.f32 %v4256, %v4631
        %v4677 = vadd.f32 %v4257, %v4445
        %v4678 = vadd.f32 %v4258, %v4634
        %4679 = vst [vmem:[%s292] sm:$0xff] %v4637
        %4680 = vst [vmem:[%s292 + $0x8] sm:$0xff] %v4638
        %4681 = vst [vmem:[%s292 + $0x10] sm:$0xff] %v4639
        %4682 = vst [vmem:[%s292 + $0x18] sm:$0xff] %v4640
        %4683 = vst [vmem:[%s292 + $0x20] sm:$0xff] %v4641
        %4684 = vst [vmem:[%s292 + $0x28] sm:$0xff] %v4642
        %4685 = vst [vmem:[%s292 + $0x30] sm:$0xff] %v4643
        %4686 = vst [vmem:[%s292 + $0x38] sm:$0xff] %v4644
        %4687 = vst [vmem:[%s292 + $0x40] sm:$0xff] %v4645
        %4688 = vst [vmem:[%s292 + $0x48] sm:$0xff] %v4646
        %4689 = vst [vmem:[%s292 + $0x50] sm:$0xff] %v4647
        %4690 = vst [vmem:[%s292 + $0x58] sm:$0xff] %v4648
        %4691 = vst [vmem:[%s292 + $0x60] sm:$0xff] %v4649
        %4692 = vst [vmem:[%s292 + $0x68] sm:$0xff] %v4650
        %4693 = vst [vmem:[%s292 + $0x70] sm:$0xff] %v4651
        %4694 = vst [vmem:[%s292 + $0x78] sm:$0xff] %v4652
        %4695 = vst [vmem:[%s292 + $0x80] sm:$0xff] %v4653
        %4696 = vst [vmem:[%s292 + $0x88] sm:$0xff] %v4654
        %4697 = vst [vmem:[%s292 + $0x90] sm:$0xff] %v4655
        %4698 = vst [vmem:[%s292 + $0x98] sm:$0xff] %v4656
        %4699 = vst [vmem:[%s292 + $0xa0] sm:$0xff] %v4657
        %4700 = vst [vmem:[%s292 + $0xa8] sm:$0xff] %v4658
        %4701 = vst [vmem:[%s292 + $0xb0] sm:$0xff] %v4659
        %4702 = vst [vmem:[%s292 + $0xb8] sm:$0xff] %v4660
        %4703 = vst [vmem:[%s292 + $0xc0] sm:$0xff] %v4661
        %4704 = vst [vmem:[%s292 + $0xc8] sm:$0xff] %v4662
        %4705 = vst [vmem:[%s292 + $0xd0] sm:$0xff] %v4663
        %4706 = vst [vmem:[%s292 + $0xd8] sm:$0xff] %v4664
        %4707 = vst [vmem:[%s292 + $0xe0] sm:$0xff] %v4665
        %4708 = vst [vmem:[%s292 + $0xe8] sm:$0xff] %v4666
        %4709 = vst [vmem:[%s292 + $0xf0] sm:$0xff] %v4667
        %4710 = vst [vmem:[%s292 + $0xf8] sm:$0xff] %v4668
        %4711 = vst [vmem:[%s292 + $0x100] sm:$0xff] %v4669
        %4712 = vst [vmem:[%s292 + $0x108] sm:$0xff] %v4670
        %4713 = vst [vmem:[%s292 + $0x110] sm:$0xff] %v4671
        %4714 = vst [vmem:[%s292 + $0x118] sm:$0xff] %v4672
        %4715 = vst [vmem:[%s292 + $0x120] sm:$0xff] %v4673
        %4716 = vst [vmem:[%s292 + $0x128] sm:$0xff] %v4674
        %4717 = vst [vmem:[%s292 + $0x130] sm:$0xff] %v4675
        %4718 = vst [vmem:[%s292 + $0x138] sm:$0xff] %v4676
        %4719 = vst [vmem:[%s292 + $0x140] sm:$0x3f] %v4677
        %4720 = vst [vmem:[%s292 + $0x148] sm:$0x3f] %v4678
        %v4721 = vld [vmem:[%s292] sm:$0xff]
        %v4722 = vld [vmem:[%s292 + $0x8] sm:$0xff]
        %v4723 = vld [vmem:[%s292 + $0x10] sm:$0xff]
        %v4724 = vld [vmem:[%s292 + $0x18] sm:$0xff]
        %v4725 = vld [vmem:[%s292 + $0x20] sm:$0xff]
        %v4726 = vld [vmem:[%s292 + $0x28] sm:$0xff]
        %v4727 = vld [vmem:[%s292 + $0x30] sm:$0xff]
        %v4728 = vld [vmem:[%s292 + $0x38] sm:$0xff]
        %v4729 = vld [vmem:[%s292 + $0x40] sm:$0xff]
        %v4730 = vld [vmem:[%s292 + $0x48] sm:$0xff]
        %v4731 = vld [vmem:[%s292 + $0x50] sm:$0xff]
        %v4732 = vld [vmem:[%s292 + $0x58] sm:$0xff]
        %v4733 = vld [vmem:[%s292 + $0x60] sm:$0xff]
        %v4734 = vld [vmem:[%s292 + $0x68] sm:$0xff]
        %v4735 = vld [vmem:[%s292 + $0x70] sm:$0xff]
        %v4736 = vld [vmem:[%s292 + $0x78] sm:$0xff]
        %v4737 = vld [vmem:[%s292 + $0x80] sm:$0xff]
        %v4738 = vld [vmem:[%s292 + $0x88] sm:$0xff]
        %v4739 = vld [vmem:[%s292 + $0x90] sm:$0xff]
        %v4740 = vld [vmem:[%s292 + $0x98] sm:$0xff]
        %v4741 = vld [vmem:[%s292 + $0xa0] sm:$0xff]
        %v4742 = vld [vmem:[%s292 + $0xa8] sm:$0xff]
        %v4743 = vld [vmem:[%s292 + $0xb0] sm:$0xff]
        %v4744 = vld [vmem:[%s292 + $0xb8] sm:$0xff]
        %v4745 = vld [vmem:[%s292 + $0xc0] sm:$0xff]
        %v4746 = vld [vmem:[%s292 + $0xc8] sm:$0xff]
        %v4747 = vld [vmem:[%s292 + $0xd0] sm:$0xff]
        %v4748 = vld [vmem:[%s292 + $0xd8] sm:$0xff]
        %v4749 = vld [vmem:[%s292 + $0xe0] sm:$0xff]
        %v4750 = vld [vmem:[%s292 + $0xe8] sm:$0xff]
        %v4751 = vld [vmem:[%s292 + $0xf0] sm:$0xff]
        %v4752 = vld [vmem:[%s292 + $0xf8] sm:$0xff]
        %v4753 = vld [vmem:[%s292 + $0x100] sm:$0xff]
        %v4754 = vld [vmem:[%s292 + $0x108] sm:$0xff]
        %v4755 = vld [vmem:[%s292 + $0x110] sm:$0xff]
        %v4756 = vld [vmem:[%s292 + $0x118] sm:$0xff]
        %v4757 = vld [vmem:[%s292 + $0x120] sm:$0xff]
        %v4758 = vld [vmem:[%s292 + $0x128] sm:$0xff]
        %v4759 = vld [vmem:[%s292 + $0x130] sm:$0xff]
        %v4760 = vld [vmem:[%s292 + $0x138] sm:$0xff]
        %v4761 = vld [vmem:[%s292 + $0x140] sm:$0x3f]
        %v4762 = vld [vmem:[%s292 + $0x148] sm:$0x3f]
        %v4764 = vsel %vm1825, %v794, 0
        %v4767 = vsel %vm1825, %v797, 0
        %v4770 = vsel %vm1825, %v800, 0
        %v4773 = vsel %vm1825, %v803, 0
        %v4776 = vsel %vm1825, %v806, 0
        %v4779 = vsel %vm1825, %v809, 0
        %v4782 = vsel %vm1825, %v812, 0
        %v4785 = vsel %vm1825, %v815, 0
        %v4788 = vsel %vm1825, %v818, 0
        %v4791 = vsel %vm1825, %v821, 0
        %v4794 = vsel %vm1825, %v824, 0
        %4796 = vmatpush.bf16.msra.mxu0 %v2615
        %4797 = vmatpush.bf16.msra.mxu0 %v2613
        %4798 = vmatpush.bf16.msra.mxu0 %v2611
        %4799 = vmatpush.bf16.msra.mxu0 %v2609
        %4800 = vmatpush.bf16.msra.mxu0 %v2607
        %4801 = vmatpush.bf16.msra.mxu0 %v2605
        %4802 = vmatpush.bf16.msra.mxu0 %v2603
        %4803 = vmatpush.bf16.msra.mxu0 %v2601
        %4804 = vmatmul.bf16.gmra.mxu0 %v792
        %v4805 = vpop.f32.mrf.mxu0
        %v4806 = vadd.f32 0.0, %v4805
        %v4807 = vpop.f32.mrf.mxu0
        %v4808 = vadd.f32 0.0, %v4807
        %4809 = vmatmul.bf16.gmra.mxu0 %v795
        %v4810 = vpop.f32.mrf.mxu0
        %v4811 = vadd.f32 0.0, %v4810
        %v4812 = vpop.f32.mrf.mxu0
        %v4813 = vadd.f32 0.0, %v4812
        %4814 = vmatmul.bf16.gmra.mxu0 %v798
        %v4815 = vpop.f32.mrf.mxu0
        %v4816 = vadd.f32 0.0, %v4815
        %v4817 = vpop.f32.mrf.mxu0
        %v4818 = vadd.f32 0.0, %v4817
        %4819 = vmatmul.bf16.gmra.mxu0 %v801
        %v4820 = vpop.f32.mrf.mxu0
        %v4821 = vadd.f32 0.0, %v4820
        %v4822 = vpop.f32.mrf.mxu0
        %v4823 = vadd.f32 0.0, %v4822
        %4824 = vmatmul.bf16.gmra.mxu0 %v804
        %v4825 = vpop.f32.mrf.mxu0
        %v4826 = vadd.f32 0.0, %v4825
        %v4827 = vpop.f32.mrf.mxu0
        %v4828 = vadd.f32 0.0, %v4827
        %4829 = vmatmul.bf16.gmra.mxu0 %v807
        %v4830 = vpop.f32.mrf.mxu0
        %v4831 = vadd.f32 0.0, %v4830
        %v4832 = vpop.f32.mrf.mxu0
        %v4833 = vadd.f32 0.0, %v4832
        %4834 = vmatmul.bf16.gmra.mxu0 %v810
        %v4835 = vpop.f32.mrf.mxu0
        %v4836 = vadd.f32 0.0, %v4835
        %v4837 = vpop.f32.mrf.mxu0
        %v4838 = vadd.f32 0.0, %v4837
        %4839 = vmatmul.bf16.gmra.mxu0 %v813
        %v4840 = vpop.f32.mrf.mxu0
        %v4841 = vadd.f32 0.0, %v4840
        %v4842 = vpop.f32.mrf.mxu0
        %v4843 = vadd.f32 0.0, %v4842
        %4844 = vmatmul.bf16.gmra.mxu0 %v816
        %v4845 = vpop.f32.mrf.mxu0
        %v4846 = vadd.f32 0.0, %v4845
        %v4847 = vpop.f32.mrf.mxu0
        %v4848 = vadd.f32 0.0, %v4847
        %4849 = vmatmul.bf16.gmra.mxu0 %v819
        %v4850 = vpop.f32.mrf.mxu0
        %v4851 = vadd.f32 0.0, %v4850
        %v4852 = vpop.f32.mrf.mxu0
        %v4853 = vadd.f32 0.0, %v4852
        %4854 = vmatmul.bf16.gmra.mxu0 %v822
        %v4855 = vpop.f32.mrf.mxu0
        %v4856 = vadd.f32 0.0, %v4855
        %v4857 = vpop.f32.mrf.mxu0
        %4858 = vdwg.mxu0
        %4859 = vmatpush.bf16.msra.mxu0 %v2631
        %4860 = vmatpush.bf16.msra.mxu0 %v2629
        %4861 = vmatpush.bf16.msra.mxu0 %v2627
        %4862 = vmatpush.bf16.msra.mxu0 %v2625
        %4863 = vmatpush.bf16.msra.mxu0 %v2623
        %4864 = vmatpush.bf16.msra.mxu0 %v2621
        %4865 = vmatpush.bf16.msra.mxu0 %v2619
        %4866 = vmatpush.bf16.msra.mxu0 %v2617
        %4867 = vmatmul.bf16.gmra.mxu0 %v793
        %v4868 = vpop.f32.mrf.mxu0
        %v4869 = vadd.f32 %v4806, %v4868
        %v4870 = vpop.f32.mrf.mxu0
        %v4871 = vadd.f32 %v4808, %v4870
        %4872 = vmatmul.bf16.gmra.mxu0 %v796
        %v4873 = vpop.f32.mrf.mxu0
        %v4874 = vadd.f32 %v4811, %v4873
        %v4875 = vpop.f32.mrf.mxu0
        %v4876 = vadd.f32 %v4813, %v4875
        %4877 = vmatmul.bf16.gmra.mxu0 %v799
        %v4878 = vpop.f32.mrf.mxu0
        %v4879 = vadd.f32 %v4816, %v4878
        %v4880 = vpop.f32.mrf.mxu0
        %v4881 = vadd.f32 %v4818, %v4880
        %4882 = vmatmul.bf16.gmra.mxu0 %v802
        %v4883 = vpop.f32.mrf.mxu0
        %v4884 = vadd.f32 %v4821, %v4883
        %v4885 = vpop.f32.mrf.mxu0
        %v4886 = vadd.f32 %v4823, %v4885
        %4887 = vmatmul.bf16.gmra.mxu0 %v805
        %v4888 = vpop.f32.mrf.mxu0
        %v4889 = vadd.f32 %v4826, %v4888
        %v4890 = vpop.f32.mrf.mxu0
        %v4891 = vadd.f32 %v4828, %v4890
        %4892 = vmatmul.bf16.gmra.mxu0 %v808
        %v4893 = vpop.f32.mrf.mxu0
        %v4894 = vadd.f32 %v4831, %v4893
        %v4895 = vpop.f32.mrf.mxu0
        %v4896 = vadd.f32 %v4833, %v4895
        %4897 = vmatmul.bf16.gmra.mxu0 %v811
        %v4898 = vpop.f32.mrf.mxu0
        %v4899 = vadd.f32 %v4836, %v4898
        %v4900 = vpop.f32.mrf.mxu0
        %v4901 = vadd.f32 %v4838, %v4900
        %4902 = vmatmul.bf16.gmra.mxu0 %v814
        %v4903 = vpop.f32.mrf.mxu0
        %v4904 = vadd.f32 %v4841, %v4903
        %v4905 = vpop.f32.mrf.mxu0
        %v4906 = vadd.f32 %v4843, %v4905
        %4907 = vmatmul.bf16.gmra.mxu0 %v817
        %v4908 = vpop.f32.mrf.mxu0
        %v4909 = vadd.f32 %v4846, %v4908
        %v4910 = vpop.f32.mrf.mxu0
        %v4911 = vadd.f32 %v4848, %v4910
        %4912 = vmatmul.bf16.gmra.mxu0 %v820
        %v4913 = vpop.f32.mrf.mxu0
        %v4914 = vadd.f32 %v4851, %v4913
        %v4915 = vpop.f32.mrf.mxu0
        %v4916 = vadd.f32 %v4853, %v4915
        %4917 = vmatmul.bf16.gmra.mxu0 %v823
        %v4918 = vpop.f32.mrf.mxu0
        %v4919 = vadd.f32 %v4856, %v4918
        %v4920 = vpop.f32.mrf.mxu0
        %4921 = vdwg.mxu0
        %4922 = vmatpush.bf16.msra.mxu0 0
        %4923 = vmatpush.bf16.msra.mxu0 0
        %4924 = vmatpush.bf16.msra.mxu0 0
        %4925 = vmatpush.bf16.msra.mxu0 0
        %4926 = vmatpush.bf16.msra.mxu0 %v2639
        %4927 = vmatpush.bf16.msra.mxu0 %v2637
        %4928 = vmatpush.bf16.msra.mxu0 %v2635
        %4929 = vmatpush.bf16.msra.mxu0 %v2633
        %4930 = vmatmul.bf16.gmra.mxu0 %v4764
        %v4931 = vpop.f32.mrf.mxu0
        %v4932 = vadd.f32 %v4869, %v4931
        %v4933 = vpop.f32.mrf.mxu0
        %v4934 = vadd.f32 %v4871, %v4933
        %4935 = vmatmul.bf16.gmra.mxu0 %v4767
        %v4936 = vpop.f32.mrf.mxu0
        %v4937 = vadd.f32 %v4874, %v4936
        %v4938 = vpop.f32.mrf.mxu0
        %v4939 = vadd.f32 %v4876, %v4938
        %4940 = vmatmul.bf16.gmra.mxu0 %v4770
        %v4941 = vpop.f32.mrf.mxu0
        %v4942 = vadd.f32 %v4879, %v4941
        %v4943 = vpop.f32.mrf.mxu0
        %v4944 = vadd.f32 %v4881, %v4943
        %4945 = vmatmul.bf16.gmra.mxu0 %v4773
        %v4946 = vpop.f32.mrf.mxu0
        %v4947 = vadd.f32 %v4884, %v4946
        %v4948 = vpop.f32.mrf.mxu0
        %v4949 = vadd.f32 %v4886, %v4948
        %4950 = vmatmul.bf16.gmra.mxu0 %v4776
        %v4951 = vpop.f32.mrf.mxu0
        %v4952 = vadd.f32 %v4889, %v4951
        %v4953 = vpop.f32.mrf.mxu0
        %v4954 = vadd.f32 %v4891, %v4953
        %4955 = vmatmul.bf16.gmra.mxu0 %v4779
        %v4956 = vpop.f32.mrf.mxu0
        %v4957 = vadd.f32 %v4894, %v4956
        %v4958 = vpop.f32.mrf.mxu0
        %v4959 = vadd.f32 %v4896, %v4958
        %4960 = vmatmul.bf16.gmra.mxu0 %v4782
        %v4961 = vpop.f32.mrf.mxu0
        %v4962 = vadd.f32 %v4899, %v4961
        %v4963 = vpop.f32.mrf.mxu0
        %v4964 = vadd.f32 %v4901, %v4963
        %4965 = vmatmul.bf16.gmra.mxu0 %v4785
        %v4966 = vpop.f32.mrf.mxu0
        %v4967 = vadd.f32 %v4904, %v4966
        %v4968 = vpop.f32.mrf.mxu0
        %v4969 = vadd.f32 %v4906, %v4968
        %4970 = vmatmul.bf16.gmra.mxu0 %v4788
        %v4971 = vpop.f32.mrf.mxu0
        %v4972 = vadd.f32 %v4909, %v4971
        %v4973 = vpop.f32.mrf.mxu0
        %v4974 = vadd.f32 %v4911, %v4973
        %4975 = vmatmul.bf16.gmra.mxu0 %v4791
        %v4976 = vpop.f32.mrf.mxu0
        %v4977 = vadd.f32 %v4914, %v4976
        %v4978 = vpop.f32.mrf.mxu0
        %v4979 = vadd.f32 %v4916, %v4978
        %4980 = vmatmul.bf16.gmra.mxu0 %v4794
        %v4981 = vpop.f32.mrf.mxu0
        %v4982 = vadd.f32 %v4919, %v4981
        %v4983 = vpop.f32.mrf.mxu0
        %4984 = vdwg.mxu0
        %4985 = vmatpush.bf16.msra.mxu0 %v2616
        %4986 = vmatpush.bf16.msra.mxu0 %v2614
        %4987 = vmatpush.bf16.msra.mxu0 %v2612
        %4988 = vmatpush.bf16.msra.mxu0 %v2610
        %4989 = vmatpush.bf16.msra.mxu0 %v2608
        %4990 = vmatpush.bf16.msra.mxu0 %v2606
        %4991 = vmatpush.bf16.msra.mxu0 %v2604
        %4992 = vmatpush.bf16.msra.mxu0 %v2602
        %4993 = vmatmul.bf16.gmra.mxu0 %v792
        %v4994 = vpop.f32.mrf.mxu0
        %v4995 = vadd.f32 0.0, %v4994
        %v4996 = vpop.f32.mrf.mxu0
        %v4997 = vadd.f32 0.0, %v4996
        %4998 = vmatmul.bf16.gmra.mxu0 %v795
        %v4999 = vpop.f32.mrf.mxu0
        %v5000 = vadd.f32 0.0, %v4999
        %v5001 = vpop.f32.mrf.mxu0
        %v5002 = vadd.f32 0.0, %v5001
        %5003 = vmatmul.bf16.gmra.mxu0 %v798
        %v5004 = vpop.f32.mrf.mxu0
        %v5005 = vadd.f32 0.0, %v5004
        %v5006 = vpop.f32.mrf.mxu0
        %v5007 = vadd.f32 0.0, %v5006
        %5008 = vmatmul.bf16.gmra.mxu0 %v801
        %v5009 = vpop.f32.mrf.mxu0
        %v5010 = vadd.f32 0.0, %v5009
        %v5011 = vpop.f32.mrf.mxu0
        %v5012 = vadd.f32 0.0, %v5011
        %5013 = vmatmul.bf16.gmra.mxu0 %v804
        %v5014 = vpop.f32.mrf.mxu0
        %v5015 = vadd.f32 0.0, %v5014
        %v5016 = vpop.f32.mrf.mxu0
        %v5017 = vadd.f32 0.0, %v5016
        %5018 = vmatmul.bf16.gmra.mxu0 %v807
        %v5019 = vpop.f32.mrf.mxu0
        %v5020 = vadd.f32 0.0, %v5019
        %v5021 = vpop.f32.mrf.mxu0
        %v5022 = vadd.f32 0.0, %v5021
        %5023 = vmatmul.bf16.gmra.mxu0 %v810
        %v5024 = vpop.f32.mrf.mxu0
        %v5025 = vadd.f32 0.0, %v5024
        %v5026 = vpop.f32.mrf.mxu0
        %v5027 = vadd.f32 0.0, %v5026
        %5028 = vmatmul.bf16.gmra.mxu0 %v813
        %v5029 = vpop.f32.mrf.mxu0
        %v5030 = vadd.f32 0.0, %v5029
        %v5031 = vpop.f32.mrf.mxu0
        %v5032 = vadd.f32 0.0, %v5031
        %5033 = vmatmul.bf16.gmra.mxu0 %v816
        %v5034 = vpop.f32.mrf.mxu0
        %v5035 = vadd.f32 0.0, %v5034
        %v5036 = vpop.f32.mrf.mxu0
        %v5037 = vadd.f32 0.0, %v5036
        %5038 = vmatmul.bf16.gmra.mxu0 %v819
        %v5039 = vpop.f32.mrf.mxu0
        %v5040 = vadd.f32 0.0, %v5039
        %v5041 = vpop.f32.mrf.mxu0
        %v5042 = vadd.f32 0.0, %v5041
        %5043 = vmatmul.bf16.gmra.mxu0 %v822
        %v5044 = vpop.f32.mrf.mxu0
        %v5045 = vadd.f32 0.0, %v5044
        %v5046 = vpop.f32.mrf.mxu0
        %5047 = vdwg.mxu0
        %5048 = vmatpush.bf16.msra.mxu0 %v2632
        %5049 = vmatpush.bf16.msra.mxu0 %v2630
        %5050 = vmatpush.bf16.msra.mxu0 %v2628
        %5051 = vmatpush.bf16.msra.mxu0 %v2626
        %5052 = vmatpush.bf16.msra.mxu0 %v2624
        %5053 = vmatpush.bf16.msra.mxu0 %v2622
        %5054 = vmatpush.bf16.msra.mxu0 %v2620
        %5055 = vmatpush.bf16.msra.mxu0 %v2618
        %5056 = vmatmul.bf16.gmra.mxu0 %v793
        %v5057 = vpop.f32.mrf.mxu0
        %v5058 = vadd.f32 %v4995, %v5057
        %v5059 = vpop.f32.mrf.mxu0
        %v5060 = vadd.f32 %v4997, %v5059
        %5061 = vmatmul.bf16.gmra.mxu0 %v796
        %v5062 = vpop.f32.mrf.mxu0
        %v5063 = vadd.f32 %v5000, %v5062
        %v5064 = vpop.f32.mrf.mxu0
        %v5065 = vadd.f32 %v5002, %v5064
        %5066 = vmatmul.bf16.gmra.mxu0 %v799
        %v5067 = vpop.f32.mrf.mxu0
        %v5068 = vadd.f32 %v5005, %v5067
        %v5069 = vpop.f32.mrf.mxu0
        %v5070 = vadd.f32 %v5007, %v5069
        %5071 = vmatmul.bf16.gmra.mxu0 %v802
        %v5072 = vpop.f32.mrf.mxu0
        %v5073 = vadd.f32 %v5010, %v5072
        %v5074 = vpop.f32.mrf.mxu0
        %v5075 = vadd.f32 %v5012, %v5074
        %5076 = vmatmul.bf16.gmra.mxu0 %v805
        %v5077 = vpop.f32.mrf.mxu0
        %v5078 = vadd.f32 %v5015, %v5077
        %v5079 = vpop.f32.mrf.mxu0
        %v5080 = vadd.f32 %v5017, %v5079
        %5081 = vmatmul.bf16.gmra.mxu0 %v808
        %v5082 = vpop.f32.mrf.mxu0
        %v5083 = vadd.f32 %v5020, %v5082
        %v5084 = vpop.f32.mrf.mxu0
        %v5085 = vadd.f32 %v5022, %v5084
        %5086 = vmatmul.bf16.gmra.mxu0 %v811
        %v5087 = vpop.f32.mrf.mxu0
        %v5088 = vadd.f32 %v5025, %v5087
        %v5089 = vpop.f32.mrf.mxu0
        %v5090 = vadd.f32 %v5027, %v5089
        %5091 = vmatmul.bf16.gmra.mxu0 %v814
        %v5092 = vpop.f32.mrf.mxu0
        %v5093 = vadd.f32 %v5030, %v5092
        %v5094 = vpop.f32.mrf.mxu0
        %v5095 = vadd.f32 %v5032, %v5094
        %5096 = vmatmul.bf16.gmra.mxu0 %v817
        %v5097 = vpop.f32.mrf.mxu0
        %v5098 = vadd.f32 %v5035, %v5097
        %v5099 = vpop.f32.mrf.mxu0
        %v5100 = vadd.f32 %v5037, %v5099
        %5101 = vmatmul.bf16.gmra.mxu0 %v820
        %v5102 = vpop.f32.mrf.mxu0
        %v5103 = vadd.f32 %v5040, %v5102
        %v5104 = vpop.f32.mrf.mxu0
        %v5105 = vadd.f32 %v5042, %v5104
        %5106 = vmatmul.bf16.gmra.mxu0 %v823
        %v5107 = vpop.f32.mrf.mxu0
        %v5108 = vadd.f32 %v5045, %v5107
        %v5109 = vpop.f32.mrf.mxu0
        %5110 = vdwg.mxu0
        %5111 = vmatpush.bf16.msra.mxu0 0
        %5112 = vmatpush.bf16.msra.mxu0 0
        %5113 = vmatpush.bf16.msra.mxu0 0
        %5114 = vmatpush.bf16.msra.mxu0 0
        %5115 = vmatpush.bf16.msra.mxu0 %v2640
        %5116 = vmatpush.bf16.msra.mxu0 %v2638
        %5117 = vmatpush.bf16.msra.mxu0 %v2636
        %5118 = vmatpush.bf16.msra.mxu0 %v2634
        %5119 = vmatmul.bf16.gmra.mxu0 %v4764
        %v5120 = vpop.f32.mrf.mxu0
        %v5121 = vadd.f32 %v5058, %v5120
        %v5122 = vpop.f32.mrf.mxu0
        %v5123 = vadd.f32 %v5060, %v5122
        %5124 = vmatmul.bf16.gmra.mxu0 %v4767
        %v5125 = vpop.f32.mrf.mxu0
        %v5126 = vadd.f32 %v5063, %v5125
        %v5127 = vpop.f32.mrf.mxu0
        %v5128 = vadd.f32 %v5065, %v5127
        %5129 = vmatmul.bf16.gmra.mxu0 %v4770
        %v5130 = vpop.f32.mrf.mxu0
        %v5131 = vadd.f32 %v5068, %v5130
        %v5132 = vpop.f32.mrf.mxu0
        %v5133 = vadd.f32 %v5070, %v5132
        %5134 = vmatmul.bf16.gmra.mxu0 %v4773
        %v5135 = vpop.f32.mrf.mxu0
        %v5136 = vadd.f32 %v5073, %v5135
        %v5137 = vpop.f32.mrf.mxu0
        %v5138 = vadd.f32 %v5075, %v5137
        %5139 = vmatmul.bf16.gmra.mxu0 %v4776
        %v5140 = vpop.f32.mrf.mxu0
        %v5141 = vadd.f32 %v5078, %v5140
        %v5142 = vpop.f32.mrf.mxu0
        %v5143 = vadd.f32 %v5080, %v5142
        %5144 = vmatmul.bf16.gmra.mxu0 %v4779
        %v5145 = vpop.f32.mrf.mxu0
        %v5146 = vadd.f32 %v5083, %v5145
        %v5147 = vpop.f32.mrf.mxu0
        %v5148 = vadd.f32 %v5085, %v5147
        %5149 = vmatmul.bf16.gmra.mxu0 %v4782
        %v5150 = vpop.f32.mrf.mxu0
        %v5151 = vadd.f32 %v5088, %v5150
        %v5152 = vpop.f32.mrf.mxu0
        %v5153 = vadd.f32 %v5090, %v5152
        %5154 = vmatmul.bf16.gmra.mxu0 %v4785
        %v5155 = vpop.f32.mrf.mxu0
        %v5156 = vadd.f32 %v5093, %v5155
        %v5157 = vpop.f32.mrf.mxu0
        %v5158 = vadd.f32 %v5095, %v5157
        %5159 = vmatmul.bf16.gmra.mxu0 %v4788
        %v5160 = vpop.f32.mrf.mxu0
        %v5161 = vadd.f32 %v5098, %v5160
        %v5162 = vpop.f32.mrf.mxu0
        %v5163 = vadd.f32 %v5100, %v5162
        %5164 = vmatmul.bf16.gmra.mxu0 %v4791
        %v5165 = vpop.f32.mrf.mxu0
        %v5166 = vadd.f32 %v5103, %v5165
        %v5167 = vpop.f32.mrf.mxu0
        %v5168 = vadd.f32 %v5105, %v5167
        %5169 = vmatmul.bf16.gmra.mxu0 %v4794
        %v5170 = vpop.f32.mrf.mxu0
        %v5171 = vadd.f32 %v5108, %v5170
        %v5172 = vpop.f32.mrf.mxu0
        %5173 = vdwg.mxu0
        %v5174 = vadd.f32 %v4721, %v4932
        %v5175 = vadd.f32 %v4722, %v5121
        %v5176 = vadd.f32 %v4723, %v4934
        %v5177 = vadd.f32 %v4724, %v5123
        %v5178 = vadd.f32 %v4725, %v4937
        %v5179 = vadd.f32 %v4726, %v5126
        %v5180 = vadd.f32 %v4727, %v4939
        %v5181 = vadd.f32 %v4728, %v5128
        %v5182 = vadd.f32 %v4729, %v4942
        %v5183 = vadd.f32 %v4730, %v5131
        %v5184 = vadd.f32 %v4731, %v4944
        %v5185 = vadd.f32 %v4732, %v5133
        %v5186 = vadd.f32 %v4733, %v4947
        %v5187 = vadd.f32 %v4734, %v5136
        %v5188 = vadd.f32 %v4735, %v4949
        %v5189 = vadd.f32 %v4736, %v5138
        %v5190 = vadd.f32 %v4737, %v4952
        %v5191 = vadd.f32 %v4738, %v5141
        %v5192 = vadd.f32 %v4739, %v4954
        %v5193 = vadd.f32 %v4740, %v5143
        %v5194 = vadd.f32 %v4741, %v4957
        %v5195 = vadd.f32 %v4742, %v5146
        %v5196 = vadd.f32 %v4743, %v4959
        %v5197 = vadd.f32 %v4744, %v5148
        %v5198 = vadd.f32 %v4745, %v4962
        %v5199 = vadd.f32 %v4746, %v5151
        %v5200 = vadd.f32 %v4747, %v4964
        %v5201 = vadd.f32 %v4748, %v5153
        %v5202 = vadd.f32 %v4749, %v4967
        %v5203 = vadd.f32 %v4750, %v5156
        %v5204 = vadd.f32 %v4751, %v4969
        %v5205 = vadd.f32 %v4752, %v5158
        %v5206 = vadd.f32 %v4753, %v4972
        %v5207 = vadd.f32 %v4754, %v5161
        %v5208 = vadd.f32 %v4755, %v4974
        %v5209 = vadd.f32 %v4756, %v5163
        %v5210 = vadd.f32 %v4757, %v4977
        %v5211 = vadd.f32 %v4758, %v5166
        %v5212 = vadd.f32 %v4759, %v4979
        %v5213 = vadd.f32 %v4760, %v5168
        %v5214 = vadd.f32 %v4761, %v4982
        %v5215 = vadd.f32 %v4762, %v5171
        %5216 = vst [vmem:[%s292] sm:$0xff] %v5174
        %5217 = vst [vmem:[%s292 + $0x8] sm:$0xff] %v5175
        %5218 = vst [vmem:[%s292 + $0x10] sm:$0xff] %v5176
        %5219 = vst [vmem:[%s292 + $0x18] sm:$0xff] %v5177
        %5220 = vst [vmem:[%s292 + $0x20] sm:$0xff] %v5178
        %5221 = vst [vmem:[%s292 + $0x28] sm:$0xff] %v5179
        %5222 = vst [vmem:[%s292 + $0x30] sm:$0xff] %v5180
        %5223 = vst [vmem:[%s292 + $0x38] sm:$0xff] %v5181
        %5224 = vst [vmem:[%s292 + $0x40] sm:$0xff] %v5182
        %5225 = vst [vmem:[%s292 + $0x48] sm:$0xff] %v5183
        %5226 = vst [vmem:[%s292 + $0x50] sm:$0xff] %v5184
        %5227 = vst [vmem:[%s292 + $0x58] sm:$0xff] %v5185
        %5228 = vst [vmem:[%s292 + $0x60] sm:$0xff] %v5186
        %5229 = vst [vmem:[%s292 + $0x68] sm:$0xff] %v5187
        %5230 = vst [vmem:[%s292 + $0x70] sm:$0xff] %v5188
        %5231 = vst [vmem:[%s292 + $0x78] sm:$0xff] %v5189
        %5232 = vst [vmem:[%s292 + $0x80] sm:$0xff] %v5190
        %5233 = vst [vmem:[%s292 + $0x88] sm:$0xff] %v5191
        %5234 = vst [vmem:[%s292 + $0x90] sm:$0xff] %v5192
        %5235 = vst [vmem:[%s292 + $0x98] sm:$0xff] %v5193
        %5236 = vst [vmem:[%s292 + $0xa0] sm:$0xff] %v5194
        %5237 = vst [vmem:[%s292 + $0xa8] sm:$0xff] %v5195
        %5238 = vst [vmem:[%s292 + $0xb0] sm:$0xff] %v5196
        %5239 = vst [vmem:[%s292 + $0xb8] sm:$0xff] %v5197
        %5240 = vst [vmem:[%s292 + $0xc0] sm:$0xff] %v5198
        %5241 = vst [vmem:[%s292 + $0xc8] sm:$0xff] %v5199
        %5242 = vst [vmem:[%s292 + $0xd0] sm:$0xff] %v5200
        %5243 = vst [vmem:[%s292 + $0xd8] sm:$0xff] %v5201
        %5244 = vst [vmem:[%s292 + $0xe0] sm:$0xff] %v5202
        %5245 = vst [vmem:[%s292 + $0xe8] sm:$0xff] %v5203
        %5246 = vst [vmem:[%s292 + $0xf0] sm:$0xff] %v5204
        %5247 = vst [vmem:[%s292 + $0xf8] sm:$0xff] %v5205
        %5248 = vst [vmem:[%s292 + $0x100] sm:$0xff] %v5206
        %5249 = vst [vmem:[%s292 + $0x108] sm:$0xff] %v5207
        %5250 = vst [vmem:[%s292 + $0x110] sm:$0xff] %v5208
        %5251 = vst [vmem:[%s292 + $0x118] sm:$0xff] %v5209
        %5252 = vst [vmem:[%s292 + $0x120] sm:$0xff] %v5210
        %5253 = vst [vmem:[%s292 + $0x128] sm:$0xff] %v5211
        %5254 = vst [vmem:[%s292 + $0x130] sm:$0xff] %v5212
        %5255 = vst [vmem:[%s292 + $0x138] sm:$0xff] %v5213
        %5256 = vst [vmem:[%s292 + $0x140] sm:$0x3f] %v5214
        %5257 = vst [vmem:[%s292 + $0x148] sm:$0x3f] %v5215
        %s5258 = sand.u32 %s127, 1
        %s5259 = scalar_lea.sflag [#allocation4], %s5258
        %s5260 = sand.u32 %s127, 1
        %s5261 = smul.addr %s5260, 336
        %s5262 = scalar_lea.vmem [#allocation10], %s5261
        // Predicated region
        $region53: #{tpu_custom_call.1} parent=35 // pred_check
          %p5263 = pneg %p137
        $region54: #{tpu_custom_call.1} parent=35 // pred_check_branch
          %5265 = sbr.rel (%p5263) target = $region56
        $region55: #{tpu_custom_call.1} parent=35 // pred_region
          %s5266 = smul.u32 2, %s25
          %5268 = vsyncadd %s5259, 0
          %s5269 = smul.addr %s5266, 8
          %s5270 = scalar_lea.hbm %s4, %s5269
          %s5271 = sshll.u32 %s5262, 4
          %s5272 = int_to_ptr.vmem [resolvable:$true] %s5271
          %s5273 = sshll.u32 %s5270, 4
          %s5274 = int_to_ptr.hbm [resolvable:$true] %s5273
          %5279 = dma.vmem_to_hbm [thread:$0]  %s5272, 5376, %s5274, %s5259, 256, 1024, 16
        $region56: #{tpu_custom_call.1} parent=35 // pred_fallthru
          _
      $region36: #{tpu_custom_call.1} parent=5 // pred_fallthru
        _
      %p5280 = scmp.le.s32.totalorder 2, %s20
      // Predicated region
      $region57: #{tpu_custom_call.1} parent=5 // pred_check
        %p5281 = pneg %p5280
      $region58: #{tpu_custom_call.1} parent=5 // pred_check_branch
        %5283 = sbr.rel (%p5281) target = $region60
      $region59: #{tpu_custom_call.1} parent=5 // pred_region
        %s5284 = ssub.s32 %s20, 2
        // Predicated region
        $region61: #{tpu_custom_call.1} parent=59 // pred_check
          %p5285 = pneg %p143
        $region62: #{tpu_custom_call.1} parent=59 // pred_check_branch
          %5287 = sbr.rel (%p5285) target = $region64
        $region63: #{tpu_custom_call.1} parent=59 // pred_region
          %s5288 = sand.u32 %s128, 1
          %s5289 = scalar_lea.sflag [#allocation4], %s5288
          %s5290 = sand.u32 %s128, 1
          %s5291 = smul.addr %s5290, 336
          %s5292 = scalar_lea.vmem [#allocation10], %s5291
          %5294 = dma.done %s5289, 5376
        $region64: #{tpu_custom_call.1} parent=59 // pred_fallthru
          _
      $region60: #{tpu_custom_call.1} parent=5 // pred_fallthru
        _
    $region6: #{tpu_custom_call.1} parent=1 // loop_footer
      %s24 = sadd.s32 1, %s20
    $region7: #{tpu_custom_call.1} parent=1 // loop_footer_branch
      %19 = sbr.rel target = $region3
    $region8: #{tpu_custom_call.1} parent=1 // loop_exit
      _
    %5295 = vsyncpa [#allocation3], 1
    %s5296 = scalar_lea.sflag [#allocation3], 1
    %5297 = vsyncpa %s5296, 1
    %5298 = vsyncpa [#allocation6], 1
    %s5299 = scalar_lea.sflag [#allocation6], 1
    %5300 = vsyncpa %s5299, 1
    %5301 = vsyncpa [#allocation9], 1
    %s5302 = scalar_lea.sflag [#allocation9], 1
    %5303 = vsyncpa %s5302, 1
    %5304 = vsyncpa [#allocation4], 1
    %s5305 = scalar_lea.sflag [#allocation4], 1
    %5306 = vsyncpa %s5305, 1

</llo_original>
